<compile_context>
chip_gen: v7x
topology: tpu7x:2x2x1
jax: 0.10.0
libtpu: 0.0.40
codegen_flags: <defaults>
</compile_context>

<pallas_src>
import jax
import jax.numpy as jnp
from jax import lax
from jax.experimental import pallas as pl
from jax.experimental.pallas import tpu as pltpu

INPUT_SIZE = 7       # len(variables)
HIDDEN_SIZE = 128
NUM_LAYERS = 2
OUTPUT_SIZE = 1


def _lstm_kernel(x_ref,        # (T*B, Ip)  bf16, time-major, flattened, padded
                 wih0_ref,     # (Ip, 4H)   bf16, cols permuted (i,f,o,g), i/f/o *0.5
                 whh0_ref,     # (H, 4H)    bf16, same col treatment
                 b0_ref,       # (1, 4H)    f32, bias_ih+bias_hh, same col treatment
                 wih1_ref,     # (H, 4H)    bf16
                 whh1_ref,     # (H, 4H)    bf16
                 b1_ref,       # (1, 4H)    f32
                 wfc_ref,      # (H, O)     f32
                 bfc_ref,      # (1, O)     f32
                 out_ref,      # (B, O)     f32
                 gx_scr):      # (T*B, 4H)  f32 VMEM scratch
    H = whh0_ref.shape[0]
    B = out_ref.shape[0]
    T = x_ref.shape[0] // B
    H3 = 3 * H

    # Hoisted layer-0 input projection for ALL timesteps: one amortized matmul
    # instead of T tiny K=7 matmuls on the serial critical path.
    gx_scr[...] = (jnp.dot(x_ref[...], wih0_ref[...],
                           preferred_element_type=jnp.float32) + b0_ref[...])

    # Hoisted bias broadcast for layer 1 (JAX does not CSE broadcast_in_dim).
    b1b = jnp.broadcast_to(b1_ref[...], (B, 4 * H))

    def gates_to_state(gates, c_prev):
        # Gate columns are (i, f, o, g); the i/f/o columns were pre-scaled by
        # 0.5 at wrapper time so that sigmoid(x) == 0.5*tanh(0.5*x) + 0.5
        # costs a single EUP tanh pass; the affine fixup rides the VALU.
        s = 0.5 * jnp.tanh(gates[:, :H3]) + 0.5
        g = jnp.tanh(gates[:, H3:])
        i = s[:, 0:H]
        f = s[:, H:2 * H]
        o = s[:, 2 * H:H3]
        c_new = f * c_prev + i * g
        h_new = o * jnp.tanh(c_new)
        return h_new, c_new

    def step(t, carry):
        h0, c0, h1, c1 = carry
        row = pl.multiple_of(t * B, 8)
        # Layer 0: precomputed x-projection + single bf16 recurrent matmul.
        gates0 = gx_scr[pl.ds(row, B), :] + jnp.dot(
            h0.astype(jnp.bfloat16), whh0_ref[...],
            preferred_element_type=jnp.float32)
        h0n, c0n = gates_to_state(gates0, c0)
        # Layer 1: two independent dots (no concat) so h1 @ W_hh1 can issue in
        # parallel with layer-0's EUP/VPU work.
        gates1 = (jnp.dot(h1.astype(jnp.bfloat16), whh1_ref[...],
                          preferred_element_type=jnp.float32)
                  + jnp.dot(h0n.astype(jnp.bfloat16), wih1_ref[...],
                            preferred_element_type=jnp.float32)
                  + b1b)
        h1n, c1n = gates_to_state(gates1, c1)
        return (h0n, c0n, h1n, c1n)

    # h0 / c0 start at zero (matches torch.zeros in forward()).
    z = jnp.zeros((B, H), jnp.float32)
    unroll = True if T <= 16 else 4   # full unroll only while vregs suffice
    _, _, h1_T, _ = lax.fori_loop(0, T, step, (z, z, z, z), unroll=unroll)

    # fc on the last timestep's layer-1 hidden state (O=1: once per call).
    out_ref[...] = (jnp.dot(h1_T, wfc_ref[...],
                            preferred_element_type=jnp.float32)
                    + bfc_ref[...]).astype(out_ref.dtype)


def multivariable_lstm_forward(x, params):
    """x: (B, T, INPUT_SIZE) float32. Returns (B, OUTPUT_SIZE) float32."""
    B, T, I = x.shape
    H = HIDDEN_SIZE

    # Pad batch to the 8-sublane granularity; pad input features to 8.
    B_pad = max(8, ((B + 7) // 8) * 8)
    I_pad = 8

    # Permute gate columns from PyTorch order (i, f, g, o) -> (i, f, o, g) so
    # one tanh covers a contiguous (B, 3H) slab, and pre-scale the sigmoid
    # (i, f, o) columns by 0.5 (exact in bf16) for the tanh-based sigmoid.
    perm = jnp.concatenate([jnp.arange(0, 2 * H),
                            jnp.arange(3 * H, 4 * H),
                            jnp.arange(2 * H, 3 * H)])
    col_scale = jnp.concatenate([jnp.full((3 * H,), 0.5, jnp.float32),
                                 jnp.ones((H,), jnp.float32)])[None, :]

    def prep_w(w):
        return (w[:, perm] * col_scale).astype(jnp.bfloat16)

    def prep_b(b):
        return b[:, perm] * col_scale        # biases stay f32

    wih0 = prep_w(jnp.pad(params["wih0"], ((0, I_pad - I), (0, 0))))
    whh0 = prep_w(params["whh0"])
    b0 = prep_b(params["b0"])
    wih1 = prep_w(params["wih1"])
    whh1 = prep_w(params["whh1"])
    b1 = prep_b(params["b1"])

    # Time-major, batch/feature zero-padded, flattened to (T*B_pad, I_pad), bf16.
    x_tm = jnp.transpose(x, (1, 0, 2))
    x_tm = jnp.pad(x_tm, ((0, 0), (0, B_pad - B), (0, I_pad - I)))
    x_flat = x_tm.reshape(T * B_pad, I_pad).astype(jnp.bfloat16)

    vmem = pl.BlockSpec(memory_space=pltpu.MemorySpace.VMEM)
    out = pl.pallas_call(
        _lstm_kernel,
        out_shape=jax.ShapeDtypeStruct((B_pad, OUTPUT_SIZE), jnp.float32),
        in_specs=[vmem] * 9,
        out_specs=vmem,
        scratch_shapes=[pltpu.VMEM((T * B_pad, 4 * H), jnp.float32)],
    )(x_flat, wih0, whh0, b0, wih1, whh1, b1, params["wfc"], params["bfc"])
    return out[:B]


def init_params(key):
    """Deterministic parameter init (same shapes as nn.LSTM + nn.Linear)."""
    H, I, O = HIDDEN_SIZE, INPUT_SIZE, OUTPUT_SIZE
    ks = jax.random.split(key, 10)
    scale = 1.0 / jnp.sqrt(H)

    def u(k, shape):
        return jax.random.uniform(k, shape, jnp.float32, -scale, scale)

    # PyTorch stores weight_ih_l{k}: (4H, in), weight_hh_l{k}: (4H, H); we keep
    # them transposed (in, 4H) for right-multiplication, with fused
    # bias_ih+bias_hh, in PyTorch gate order (i, f, g, o).  The wrapper handles
    # permutation / scaling / dtype.
    params = {
        "wih0": u(ks[0], (I, 4 * H)),
        "whh0": u(ks[1], (H, 4 * H)),
        "b0":   u(ks[2], (1, 4 * H)) + u(ks[3], (1, 4 * H)),
        "wih1": u(ks[4], (H, 4 * H)),
        "whh1": u(ks[5], (H, 4 * H)),
        "b1":   u(ks[6], (1, 4 * H)) + u(ks[7], (1, 4 * H)),
        "wfc":  u(ks[8], (H, O)),
        "bfc":  u(ks[9], (1, O)),
    }
    return params


def reference_forward(x, params):
    """Pure-JAX f32 reference of the PyTorch forward pass (for verification)."""
    B, T, I = x.shape
    H = HIDDEN_SIZE

    def cell(x_t, h, c, wih, whh, b):
        gates = x_t @ wih + h @ whh + b
        i = jax.nn.sigmoid(gates[:, 0 * H:1 * H])
        f = jax.nn.sigmoid(gates[:, 1 * H:2 * H])
        g = jnp.tanh(gates[:, 2 * H:3 * H])
        o = jax.nn.sigmoid(gates[:, 3 * H:4 * H])
        c = f * c + i * g
        h = o * jnp.tanh(c)
        return h, c

    h0 = c0 = h1 = c1 = jnp.zeros((B, H), jnp.float32)
    for t in range(T):
        h0, c0 = cell(x[:, t, :], h0, c0, params["wih0"], params["whh0"], params["b0"])
        h1, c1 = cell(h0, h1, c1, params["wih1"], params["whh1"], params["b1"])
    return h1 @ params["wfc"] + params["bfc"]


if __name__ == "__main__":
    key = jax.random.PRNGKey(0)
    k_x, k_p = jax.random.split(key)

    B, T = 2, 8
    x = jax.random.normal(k_x, (B, T, INPUT_SIZE), jnp.float32)
    params = init_params(k_p)

    fwd = jax.jit(multivariable_lstm_forward)
    out = jax.block_until_ready(fwd(x, params))

    ref = reference_forward(x, params)
    assert out.shape == (B, OUTPUT_SIZE)
    # bf16 matmul operands vs. f32 reference -> loosened tolerance.
    assert jnp.allclose(out, ref, rtol=2e-2, atol=2e-2), (out, ref)

    print("KERNEL_OK")
</pallas_src>

<mosaic_0001>
module attributes {stable_mosaic.version = 11 : i64} {
  func.func @_lstm_kernel(%arg0: memref<64x8xbf16, #tpu.memory_space<vmem>>, %arg1: memref<8x512xbf16, #tpu.memory_space<vmem>>, %arg2: memref<128x512xbf16, #tpu.memory_space<vmem>>, %arg3: memref<1x512xf32, #tpu.memory_space<vmem>>, %arg4: memref<128x512xbf16, #tpu.memory_space<vmem>>, %arg5: memref<128x512xbf16, #tpu.memory_space<vmem>>, %arg6: memref<1x512xf32, #tpu.memory_space<vmem>>, %arg7: memref<128x1xf32, #tpu.memory_space<vmem>>, %arg8: memref<1x1xf32, #tpu.memory_space<vmem>>, %arg9: memref<8x1xf32, #tpu.memory_space<vmem>>, %arg10: memref<64x512xf32, #tpu.memory_space<vmem>>) attributes {dimension_semantics = [], scalar_prefetch = 0 : i64, scratch_operands = 1 : i64, tpu.core_type = #tpu.core_type<tc>} {
    %c0 = arith.constant 0 : index
    %c0_0 = arith.constant 0 : index
    %0 = vector.load %arg0[%c0, %c0_0] : memref<64x8xbf16, #tpu.memory_space<vmem>>, vector<64x8xbf16>
    %c0_1 = arith.constant 0 : index
    %c0_2 = arith.constant 0 : index
    %1 = vector.load %arg1[%c0_1, %c0_2] : memref<8x512xbf16, #tpu.memory_space<vmem>>, vector<8x512xbf16>
    %cst = arith.constant dense<0.000000e+00> : vector<64x512xf32>
    %2 = tpu.matmul %0, %1, %cst {dimension_numbers = #tpu.dot_dimension_numbers<[1], [0], [0], [1], [0, 0, 1, 1], [], []>} : vector<64x8xbf16>, vector<8x512xbf16>, vector<64x512xf32> -> vector<64x512xf32>
    %c0_3 = arith.constant 0 : index
    %c0_4 = arith.constant 0 : index
    %3 = vector.load %arg3[%c0_3, %c0_4] : memref<1x512xf32, #tpu.memory_space<vmem>>, vector<1x512xf32>
    %4 = vector.broadcast %3 : vector<1x512xf32> to vector<64x512xf32>
    %5 = arith.addf %2, %4 : vector<64x512xf32>
    %c0_5 = arith.constant 0 : index
    %c0_6 = arith.constant 0 : index
    %6 = vector.load %arg10[%c0_5, %c0_6] : memref<64x512xf32, #tpu.memory_space<vmem>>, vector<64x512xf32>
    tpu.vector_store %arg10[%c0_5, %c0_6], %5 {strides = array<i32>} : memref<64x512xf32, #tpu.memory_space<vmem>>, vector<64x512xf32>,
    %c0_7 = arith.constant 0 : index
    %c0_8 = arith.constant 0 : index
    %7 = vector.load %arg6[%c0_7, %c0_8] : memref<1x512xf32, #tpu.memory_space<vmem>>, vector<1x512xf32>
    %8 = vector.shape_cast %7 : vector<1x512xf32> to vector<1x512xf32>
    %9 = vector.broadcast %8 : vector<1x512xf32> to vector<8x512xf32>
    %cst_9 = arith.constant 0.000000e+00 : f32
    %10 = vector.broadcast %cst_9 : f32 to vector<8x128xf32>
    %c0_i32 = arith.constant 0 : i32
    %c8_i32 = arith.constant 8 : i32
    %11 = arith.muli %c0_i32, %c8_i32 : i32
    %12 = tpu.assume_multiple %11, 8 : i32
    %13 = arith.index_cast %12 : i32 to index
    %c0_10 = arith.constant 0 : index
    %14 = vector.load %arg10[%13, %c0_10] : memref<64x512xf32, #tpu.memory_space<vmem>>, vector<8x512xf32>
    %15 = arith.truncf %10 : vector<8x128xf32> to vector<8x128xbf16>
    %c0_11 = arith.constant 0 : index
    %c0_12 = arith.constant 0 : index
    %16 = vector.load %arg2[%c0_11, %c0_12] : memref<128x512xbf16, #tpu.memory_space<vmem>>, vector<128x512xbf16>
    %cst_13 = arith.constant dense<0.000000e+00> : vector<8x512xf32>
    %17 = tpu.matmul %15, %16, %cst_13 {dimension_numbers = #tpu.dot_dimension_numbers<[1], [0], [0], [1], [0, 0, 1, 1], [], []>} : vector<8x128xbf16>, vector<128x512xbf16>, vector<8x512xf32> -> vector<8x512xf32>
    %18 = arith.addf %14, %17 : vector<8x512xf32>
    %19 = vector.extract_strided_slice %18 {offsets = [0, 0], sizes = [8, 384], strides = [1, 1]} : vector<8x512xf32> to vector<8x384xf32>
    %20 = math.tanh %19 : vector<8x384xf32>
    %cst_14 = arith.constant 5.000000e-01 : f32
    %21 = vector.broadcast %cst_14 : f32 to vector<8x384xf32>
    %22 = arith.mulf %21, %20 : vector<8x384xf32>
    %cst_15 = arith.constant 5.000000e-01 : f32
    %23 = vector.broadcast %cst_15 : f32 to vector<8x384xf32>
    %24 = arith.addf %22, %23 : vector<8x384xf32>
    %25 = vector.extract_strided_slice %18 {offsets = [0, 384], sizes = [8, 128], strides = [1, 1]} : vector<8x512xf32> to vector<8x128xf32>
    %26 = math.tanh %25 : vector<8x128xf32>
    %27 = vector.extract_strided_slice %24 {offsets = [0, 0], sizes = [8, 128], strides = [1, 1]} : vector<8x384xf32> to vector<8x128xf32>
    %28 = vector.extract_strided_slice %24 {offsets = [0, 128], sizes = [8, 128], strides = [1, 1]} : vector<8x384xf32> to vector<8x128xf32>
    %29 = vector.extract_strided_slice %24 {offsets = [0, 256], sizes = [8, 128], strides = [1, 1]} : vector<8x384xf32> to vector<8x128xf32>
    %30 = arith.mulf %28, %10 : vector<8x128xf32>
    %31 = arith.mulf %27, %26 : vector<8x128xf32>
    %32 = arith.addf %30, %31 : vector<8x128xf32>
    %33 = math.tanh %32 : vector<8x128xf32>
    %34 = arith.mulf %29, %33 : vector<8x128xf32>
    %35 = arith.truncf %10 : vector<8x128xf32> to vector<8x128xbf16>
    %c0_16 = arith.constant 0 : index
    %c0_17 = arith.constant 0 : index
    %36 = vector.load %arg5[%c0_16, %c0_17] : memref<128x512xbf16, #tpu.memory_space<vmem>>, vector<128x512xbf16>
    %cst_18 = arith.constant dense<0.000000e+00> : vector<8x512xf32>
    %37 = tpu.matmul %35, %36, %cst_18 {dimension_numbers = #tpu.dot_dimension_numbers<[1], [0], [0], [1], [0, 0, 1, 1], [], []>} : vector<8x128xbf16>, vector<128x512xbf16>, vector<8x512xf32> -> vector<8x512xf32>
    %38 = arith.truncf %34 : vector<8x128xf32> to vector<8x128xbf16>
    %c0_19 = arith.constant 0 : index
    %c0_20 = arith.constant 0 : index
    %39 = vector.load %arg4[%c0_19, %c0_20] : memref<128x512xbf16, #tpu.memory_space<vmem>>, vector<128x512xbf16>
    %cst_21 = arith.constant dense<0.000000e+00> : vector<8x512xf32>
    %40 = tpu.matmul %38, %39, %cst_21 {dimension_numbers = #tpu.dot_dimension_numbers<[1], [0], [0], [1], [0, 0, 1, 1], [], []>} : vector<8x128xbf16>, vector<128x512xbf16>, vector<8x512xf32> -> vector<8x512xf32>
    %41 = arith.addf %37, %40 : vector<8x512xf32>
    %42 = arith.addf %41, %9 : vector<8x512xf32>
    %43 = vector.extract_strided_slice %42 {offsets = [0, 0], sizes = [8, 384], strides = [1, 1]} : vector<8x512xf32> to vector<8x384xf32>
    %44 = math.tanh %43 : vector<8x384xf32>
    %cst_22 = arith.constant 5.000000e-01 : f32
    %45 = vector.broadcast %cst_22 : f32 to vector<8x384xf32>
    %46 = arith.mulf %45, %44 : vector<8x384xf32>
    %cst_23 = arith.constant 5.000000e-01 : f32
    %47 = vector.broadcast %cst_23 : f32 to vector<8x384xf32>
    %48 = arith.addf %46, %47 : vector<8x384xf32>
    %49 = vector.extract_strided_slice %42 {offsets = [0, 384], sizes = [8, 128], strides = [1, 1]} : vector<8x512xf32> to vector<8x128xf32>
    %50 = math.tanh %49 : vector<8x128xf32>
    %51 = vector.extract_strided_slice %48 {offsets = [0, 0], sizes = [8, 128], strides = [1, 1]} : vector<8x384xf32> to vector<8x128xf32>
    %52 = vector.extract_strided_slice %48 {offsets = [0, 128], sizes = [8, 128], strides = [1, 1]} : vector<8x384xf32> to vector<8x128xf32>
    %53 = vector.extract_strided_slice %48 {offsets = [0, 256], sizes = [8, 128], strides = [1, 1]} : vector<8x384xf32> to vector<8x128xf32>
    %54 = arith.mulf %52, %10 : vector<8x128xf32>
    %55 = arith.mulf %51, %50 : vector<8x128xf32>
    %56 = arith.addf %54, %55 : vector<8x128xf32>
    %57 = math.tanh %56 : vector<8x128xf32>
    %58 = arith.mulf %53, %57 : vector<8x128xf32>
    %c1_i32 = arith.constant 1 : i32
    %c8_i32_24 = arith.constant 8 : i32
    %59 = arith.muli %c1_i32, %c8_i32_24 : i32
    %60 = tpu.assume_multiple %59, 8 : i32
    %61 = arith.index_cast %60 : i32 to index
    %c0_25 = arith.constant 0 : index
    %62 = vector.load %arg10[%61, %c0_25] : memref<64x512xf32, #tpu.memory_space<vmem>>, vector<8x512xf32>
    %63 = arith.truncf %34 : vector<8x128xf32> to vector<8x128xbf16>
    %c0_26 = arith.constant 0 : index
    %c0_27 = arith.constant 0 : index
    %64 = vector.load %arg2[%c0_26, %c0_27] : memref<128x512xbf16, #tpu.memory_space<vmem>>, vector<128x512xbf16>
    %cst_28 = arith.constant dense<0.000000e+00> : vector<8x512xf32>
    %65 = tpu.matmul %63, %64, %cst_28 {dimension_numbers = #tpu.dot_dimension_numbers<[1], [0], [0], [1], [0, 0, 1, 1], [], []>} : vector<8x128xbf16>, vector<128x512xbf16>, vector<8x512xf32> -> vector<8x512xf32>
    %66 = arith.addf %62, %65 : vector<8x512xf32>
    %67 = vector.extract_strided_slice %66 {offsets = [0, 0], sizes = [8, 384], strides = [1, 1]} : vector<8x512xf32> to vector<8x384xf32>
    %68 = math.tanh %67 : vector<8x384xf32>
    %cst_29 = arith.constant 5.000000e-01 : f32
    %69 = vector.broadcast %cst_29 : f32 to vector<8x384xf32>
    %70 = arith.mulf %69, %68 : vector<8x384xf32>
    %cst_30 = arith.constant 5.000000e-01 : f32
    %71 = vector.broadcast %cst_30 : f32 to vector<8x384xf32>
    %72 = arith.addf %70, %71 : vector<8x384xf32>
    %73 = vector.extract_strided_slice %66 {offsets = [0, 384], sizes = [8, 128], strides = [1, 1]} : vector<8x512xf32> to vector<8x128xf32>
    %74 = math.tanh %73 : vector<8x128xf32>
    %75 = vector.extract_strided_slice %72 {offsets = [0, 0], sizes = [8, 128], strides = [1, 1]} : vector<8x384xf32> to vector<8x128xf32>
    %76 = vector.extract_strided_slice %72 {offsets = [0, 128], sizes = [8, 128], strides = [1, 1]} : vector<8x384xf32> to vector<8x128xf32>
    %77 = vector.extract_strided_slice %72 {offsets = [0, 256], sizes = [8, 128], strides = [1, 1]} : vector<8x384xf32> to vector<8x128xf32>
    %78 = arith.mulf %76, %32 : vector<8x128xf32>
    %79 = arith.mulf %75, %74 : vector<8x128xf32>
    %80 = arith.addf %78, %79 : vector<8x128xf32>
    %81 = math.tanh %80 : vector<8x128xf32>
    %82 = arith.mulf %77, %81 : vector<8x128xf32>
    %83 = arith.truncf %58 : vector<8x128xf32> to vector<8x128xbf16>
    %c0_31 = arith.constant 0 : index
    %c0_32 = arith.constant 0 : index
    %84 = vector.load %arg5[%c0_31, %c0_32] : memref<128x512xbf16, #tpu.memory_space<vmem>>, vector<128x512xbf16>
    %cst_33 = arith.constant dense<0.000000e+00> : vector<8x512xf32>
    %85 = tpu.matmul %83, %84, %cst_33 {dimension_numbers = #tpu.dot_dimension_numbers<[1], [0], [0], [1], [0, 0, 1, 1], [], []>} : vector<8x128xbf16>, vector<128x512xbf16>, vector<8x512xf32> -> vector<8x512xf32>
    %86 = arith.truncf %82 : vector<8x128xf32> to vector<8x128xbf16>
    %c0_34 = arith.constant 0 : index
    %c0_35 = arith.constant 0 : index
    %87 = vector.load %arg4[%c0_34, %c0_35] : memref<128x512xbf16, #tpu.memory_space<vmem>>, vector<128x512xbf16>
    %cst_36 = arith.constant dense<0.000000e+00> : vector<8x512xf32>
    %88 = tpu.matmul %86, %87, %cst_36 {dimension_numbers = #tpu.dot_dimension_numbers<[1], [0], [0], [1], [0, 0, 1, 1], [], []>} : vector<8x128xbf16>, vector<128x512xbf16>, vector<8x512xf32> -> vector<8x512xf32>
    %89 = arith.addf %85, %88 : vector<8x512xf32>
    %90 = arith.addf %89, %9 : vector<8x512xf32>
    %91 = vector.extract_strided_slice %90 {offsets = [0, 0], sizes = [8, 384], strides = [1, 1]} : vector<8x512xf32> to vector<8x384xf32>
    %92 = math.tanh %91 : vector<8x384xf32>
    %cst_37 = arith.constant 5.000000e-01 : f32
    %93 = vector.broadcast %cst_37 : f32 to vector<8x384xf32>
    %94 = arith.mulf %93, %92 : vector<8x384xf32>
    %cst_38 = arith.constant 5.000000e-01 : f32
    %95 = vector.broadcast %cst_38 : f32 to vector<8x384xf32>
    %96 = arith.addf %94, %95 : vector<8x384xf32>
    %97 = vector.extract_strided_slice %90 {offsets = [0, 384], sizes = [8, 128], strides = [1, 1]} : vector<8x512xf32> to vector<8x128xf32>
    %98 = math.tanh %97 : vector<8x128xf32>
    %99 = vector.extract_strided_slice %96 {offsets = [0, 0], sizes = [8, 128], strides = [1, 1]} : vector<8x384xf32> to vector<8x128xf32>
    %100 = vector.extract_strided_slice %96 {offsets = [0, 128], sizes = [8, 128], strides = [1, 1]} : vector<8x384xf32> to vector<8x128xf32>
    %101 = vector.extract_strided_slice %96 {offsets = [0, 256], sizes = [8, 128], strides = [1, 1]} : vector<8x384xf32> to vector<8x128xf32>
    %102 = arith.mulf %100, %56 : vector<8x128xf32>
    %103 = arith.mulf %99, %98 : vector<8x128xf32>
    %104 = arith.addf %102, %103 : vector<8x128xf32>
    %105 = math.tanh %104 : vector<8x128xf32>
    %106 = arith.mulf %101, %105 : vector<8x128xf32>
    %c2_i32 = arith.constant 2 : i32
    %c8_i32_39 = arith.constant 8 : i32
    %107 = arith.muli %c2_i32, %c8_i32_39 : i32
    %108 = tpu.assume_multiple %107, 8 : i32
    %109 = arith.index_cast %108 : i32 to index
    %c0_40 = arith.constant 0 : index
    %110 = vector.load %arg10[%109, %c0_40] : memref<64x512xf32, #tpu.memory_space<vmem>>, vector<8x512xf32>
    %111 = arith.truncf %82 : vector<8x128xf32> to vector<8x128xbf16>
    %c0_41 = arith.constant 0 : index
    %c0_42 = arith.constant 0 : index
    %112 = vector.load %arg2[%c0_41, %c0_42] : memref<128x512xbf16, #tpu.memory_space<vmem>>, vector<128x512xbf16>
    %cst_43 = arith.constant dense<0.000000e+00> : vector<8x512xf32>
    %113 = tpu.matmul %111, %112, %cst_43 {dimension_numbers = #tpu.dot_dimension_numbers<[1], [0], [0], [1], [0, 0, 1, 1], [], []>} : vector<8x128xbf16>, vector<128x512xbf16>, vector<8x512xf32> -> vector<8x512xf32>
    %114 = arith.addf %110, %113 : vector<8x512xf32>
    %115 = vector.extract_strided_slice %114 {offsets = [0, 0], sizes = [8, 384], strides = [1, 1]} : vector<8x512xf32> to vector<8x384xf32>
    %116 = math.tanh %115 : vector<8x384xf32>
    %cst_44 = arith.constant 5.000000e-01 : f32
    %117 = vector.broadcast %cst_44 : f32 to vector<8x384xf32>
    %118 = arith.mulf %117, %116 : vector<8x384xf32>
    %cst_45 = arith.constant 5.000000e-01 : f32
    %119 = vector.broadcast %cst_45 : f32 to vector<8x384xf32>
    %120 = arith.addf %118, %119 : vector<8x384xf32>
    %121 = vector.extract_strided_slice %114 {offsets = [0, 384], sizes = [8, 128], strides = [1, 1]} : vector<8x512xf32> to vector<8x128xf32>
    %122 = math.tanh %121 : vector<8x128xf32>
    %123 = vector.extract_strided_slice %120 {offsets = [0, 0], sizes = [8, 128], strides = [1, 1]} : vector<8x384xf32> to vector<8x128xf32>
    %124 = vector.extract_strided_slice %120 {offsets = [0, 128], sizes = [8, 128], strides = [1, 1]} : vector<8x384xf32> to vector<8x128xf32>
    %125 = vector.extract_strided_slice %120 {offsets = [0, 256], sizes = [8, 128], strides = [1, 1]} : vector<8x384xf32> to vector<8x128xf32>
    %126 = arith.mulf %124, %80 : vector<8x128xf32>
    %127 = arith.mulf %123, %122 : vector<8x128xf32>
    %128 = arith.addf %126, %127 : vector<8x128xf32>
    %129 = math.tanh %128 : vector<8x128xf32>
    %130 = arith.mulf %125, %129 : vector<8x128xf32>
    %131 = arith.truncf %106 : vector<8x128xf32> to vector<8x128xbf16>
    %c0_46 = arith.constant 0 : index
    %c0_47 = arith.constant 0 : index
    %132 = vector.load %arg5[%c0_46, %c0_47] : memref<128x512xbf16, #tpu.memory_space<vmem>>, vector<128x512xbf16>
    %cst_48 = arith.constant dense<0.000000e+00> : vector<8x512xf32>
    %133 = tpu.matmul %131, %132, %cst_48 {dimension_numbers = #tpu.dot_dimension_numbers<[1], [0], [0], [1], [0, 0, 1, 1], [], []>} : vector<8x128xbf16>, vector<128x512xbf16>, vector<8x512xf32> -> vector<8x512xf32>
    %134 = arith.truncf %130 : vector<8x128xf32> to vector<8x128xbf16>
    %c0_49 = arith.constant 0 : index
    %c0_50 = arith.constant 0 : index
    %135 = vector.load %arg4[%c0_49, %c0_50] : memref<128x512xbf16, #tpu.memory_space<vmem>>, vector<128x512xbf16>
    %cst_51 = arith.constant dense<0.000000e+00> : vector<8x512xf32>
    %136 = tpu.matmul %134, %135, %cst_51 {dimension_numbers = #tpu.dot_dimension_numbers<[1], [0], [0], [1], [0, 0, 1, 1], [], []>} : vector<8x128xbf16>, vector<128x512xbf16>, vector<8x512xf32> -> vector<8x512xf32>
    %137 = arith.addf %133, %136 : vector<8x512xf32>
    %138 = arith.addf %137, %9 : vector<8x512xf32>
    %139 = vector.extract_strided_slice %138 {offsets = [0, 0], sizes = [8, 384], strides = [1, 1]} : vector<8x512xf32> to vector<8x384xf32>
    %140 = math.tanh %139 : vector<8x384xf32>
    %cst_52 = arith.constant 5.000000e-01 : f32
    %141 = vector.broadcast %cst_52 : f32 to vector<8x384xf32>
    %142 = arith.mulf %141, %140 : vector<8x384xf32>
    %cst_53 = arith.constant 5.000000e-01 : f32
    %143 = vector.broadcast %cst_53 : f32 to vector<8x384xf32>
    %144 = arith.addf %142, %143 : vector<8x384xf32>
    %145 = vector.extract_strided_slice %138 {offsets = [0, 384], sizes = [8, 128], strides = [1, 1]} : vector<8x512xf32> to vector<8x128xf32>
    %146 = math.tanh %145 : vector<8x128xf32>
    %147 = vector.extract_strided_slice %144 {offsets = [0, 0], sizes = [8, 128], strides = [1, 1]} : vector<8x384xf32> to vector<8x128xf32>
    %148 = vector.extract_strided_slice %144 {offsets = [0, 128], sizes = [8, 128], strides = [1, 1]} : vector<8x384xf32> to vector<8x128xf32>
    %149 = vector.extract_strided_slice %144 {offsets = [0, 256], sizes = [8, 128], strides = [1, 1]} : vector<8x384xf32> to vector<8x128xf32>
    %150 = arith.mulf %148, %104 : vector<8x128xf32>
    %151 = arith.mulf %147, %146 : vector<8x128xf32>
    %152 = arith.addf %150, %151 : vector<8x128xf32>
    %153 = math.tanh %152 : vector<8x128xf32>
    %154 = arith.mulf %149, %153 : vector<8x128xf32>
    %c3_i32 = arith.constant 3 : i32
    %c8_i32_54 = arith.constant 8 : i32
    %155 = arith.muli %c3_i32, %c8_i32_54 : i32
    %156 = tpu.assume_multiple %155, 8 : i32
    %157 = arith.index_cast %156 : i32 to index
    %c0_55 = arith.constant 0 : index
    %158 = vector.load %arg10[%157, %c0_55] : memref<64x512xf32, #tpu.memory_space<vmem>>, vector<8x512xf32>
    %159 = arith.truncf %130 : vector<8x128xf32> to vector<8x128xbf16>
    %c0_56 = arith.constant 0 : index
    %c0_57 = arith.constant 0 : index
    %160 = vector.load %arg2[%c0_56, %c0_57] : memref<128x512xbf16, #tpu.memory_space<vmem>>, vector<128x512xbf16>
    %cst_58 = arith.constant dense<0.000000e+00> : vector<8x512xf32>
    %161 = tpu.matmul %159, %160, %cst_58 {dimension_numbers = #tpu.dot_dimension_numbers<[1], [0], [0], [1], [0, 0, 1, 1], [], []>} : vector<8x128xbf16>, vector<128x512xbf16>, vector<8x512xf32> -> vector<8x512xf32>
    %162 = arith.addf %158, %161 : vector<8x512xf32>
    %163 = vector.extract_strided_slice %162 {offsets = [0, 0], sizes = [8, 384], strides = [1, 1]} : vector<8x512xf32> to vector<8x384xf32>
    %164 = math.tanh %163 : vector<8x384xf32>
    %cst_59 = arith.constant 5.000000e-01 : f32
    %165 = vector.broadcast %cst_59 : f32 to vector<8x384xf32>
    %166 = arith.mulf %165, %164 : vector<8x384xf32>
    %cst_60 = arith.constant 5.000000e-01 : f32
    %167 = vector.broadcast %cst_60 : f32 to vector<8x384xf32>
    %168 = arith.addf %166, %167 : vector<8x384xf32>
    %169 = vector.extract_strided_slice %162 {offsets = [0, 384], sizes = [8, 128], strides = [1, 1]} : vector<8x512xf32> to vector<8x128xf32>
    %170 = math.tanh %169 : vector<8x128xf32>
    %171 = vector.extract_strided_slice %168 {offsets = [0, 0], sizes = [8, 128], strides = [1, 1]} : vector<8x384xf32> to vector<8x128xf32>
    %172 = vector.extract_strided_slice %168 {offsets = [0, 128], sizes = [8, 128], strides = [1, 1]} : vector<8x384xf32> to vector<8x128xf32>
    %173 = vector.extract_strided_slice %168 {offsets = [0, 256], sizes = [8, 128], strides = [1, 1]} : vector<8x384xf32> to vector<8x128xf32>
    %174 = arith.mulf %172, %128 : vector<8x128xf32>
    %175 = arith.mulf %171, %170 : vector<8x128xf32>
    %176 = arith.addf %174, %175 : vector<8x128xf32>
    %177 = math.tanh %176 : vector<8x128xf32>
    %178 = arith.mulf %173, %177 : vector<8x128xf32>
    %179 = arith.truncf %154 : vector<8x128xf32> to vector<8x128xbf16>
    %c0_61 = arith.constant 0 : index
    %c0_62 = arith.constant 0 : index
    %180 = vector.load %arg5[%c0_61, %c0_62] : memref<128x512xbf16, #tpu.memory_space<vmem>>, vector<128x512xbf16>
    %cst_63 = arith.constant dense<0.000000e+00> : vector<8x512xf32>
    %181 = tpu.matmul %179, %180, %cst_63 {dimension_numbers = #tpu.dot_dimension_numbers<[1], [0], [0], [1], [0, 0, 1, 1], [], []>} : vector<8x128xbf16>, vector<128x512xbf16>, vector<8x512xf32> -> vector<8x512xf32>
    %182 = arith.truncf %178 : vector<8x128xf32> to vector<8x128xbf16>
    %c0_64 = arith.constant 0 : index
    %c0_65 = arith.constant 0 : index
    %183 = vector.load %arg4[%c0_64, %c0_65] : memref<128x512xbf16, #tpu.memory_space<vmem>>, vector<128x512xbf16>
    %cst_66 = arith.constant dense<0.000000e+00> : vector<8x512xf32>
    %184 = tpu.matmul %182, %183, %cst_66 {dimension_numbers = #tpu.dot_dimension_numbers<[1], [0], [0], [1], [0, 0, 1, 1], [], []>} : vector<8x128xbf16>, vector<128x512xbf16>, vector<8x512xf32> -> vector<8x512xf32>
    %185 = arith.addf %181, %184 : vector<8x512xf32>
    %186 = arith.addf %185, %9 : vector<8x512xf32>
    %187 = vector.extract_strided_slice %186 {offsets = [0, 0], sizes = [8, 384], strides = [1, 1]} : vector<8x512xf32> to vector<8x384xf32>
    %188 = math.tanh %187 : vector<8x384xf32>
    %cst_67 = arith.constant 5.000000e-01 : f32
    %189 = vector.broadcast %cst_67 : f32 to vector<8x384xf32>
    %190 = arith.mulf %189, %188 : vector<8x384xf32>
    %cst_68 = arith.constant 5.000000e-01 : f32
    %191 = vector.broadcast %cst_68 : f32 to vector<8x384xf32>
    %192 = arith.addf %190, %191 : vector<8x384xf32>
    %193 = vector.extract_strided_slice %186 {offsets = [0, 384], sizes = [8, 128], strides = [1, 1]} : vector<8x512xf32> to vector<8x128xf32>
    %194 = math.tanh %193 : vector<8x128xf32>
    %195 = vector.extract_strided_slice %192 {offsets = [0, 0], sizes = [8, 128], strides = [1, 1]} : vector<8x384xf32> to vector<8x128xf32>
    %196 = vector.extract_strided_slice %192 {offsets = [0, 128], sizes = [8, 128], strides = [1, 1]} : vector<8x384xf32> to vector<8x128xf32>
    %197 = vector.extract_strided_slice %192 {offsets = [0, 256], sizes = [8, 128], strides = [1, 1]} : vector<8x384xf32> to vector<8x128xf32>
    %198 = arith.mulf %196, %152 : vector<8x128xf32>
    %199 = arith.mulf %195, %194 : vector<8x128xf32>
    %200 = arith.addf %198, %199 : vector<8x128xf32>
    %201 = math.tanh %200 : vector<8x128xf32>
    %202 = arith.mulf %197, %201 : vector<8x128xf32>
    %c4_i32 = arith.constant 4 : i32
    %c8_i32_69 = arith.constant 8 : i32
    %203 = arith.muli %c4_i32, %c8_i32_69 : i32
    %204 = tpu.assume_multiple %203, 8 : i32
    %205 = arith.index_cast %204 : i32 to index
    %c0_70 = arith.constant 0 : index
    %206 = vector.load %arg10[%205, %c0_70] : memref<64x512xf32, #tpu.memory_space<vmem>>, vector<8x512xf32>
    %207 = arith.truncf %178 : vector<8x128xf32> to vector<8x128xbf16>
    %c0_71 = arith.constant 0 : index
    %c0_72 = arith.constant 0 : index
    %208 = vector.load %arg2[%c0_71, %c0_72] : memref<128x512xbf16, #tpu.memory_space<vmem>>, vector<128x512xbf16>
    %cst_73 = arith.constant dense<0.000000e+00> : vector<8x512xf32>
    %209 = tpu.matmul %207, %208, %cst_73 {dimension_numbers = #tpu.dot_dimension_numbers<[1], [0], [0], [1], [0, 0, 1, 1], [], []>} : vector<8x128xbf16>, vector<128x512xbf16>, vector<8x512xf32> -> vector<8x512xf32>
    %210 = arith.addf %206, %209 : vector<8x512xf32>
    %211 = vector.extract_strided_slice %210 {offsets = [0, 0], sizes = [8, 384], strides = [1, 1]} : vector<8x512xf32> to vector<8x384xf32>
    %212 = math.tanh %211 : vector<8x384xf32>
    %cst_74 = arith.constant 5.000000e-01 : f32
    %213 = vector.broadcast %cst_74 : f32 to vector<8x384xf32>
    %214 = arith.mulf %213, %212 : vector<8x384xf32>
    %cst_75 = arith.constant 5.000000e-01 : f32
    %215 = vector.broadcast %cst_75 : f32 to vector<8x384xf32>
    %216 = arith.addf %214, %215 : vector<8x384xf32>
    %217 = vector.extract_strided_slice %210 {offsets = [0, 384], sizes = [8, 128], strides = [1, 1]} : vector<8x512xf32> to vector<8x128xf32>
    %218 = math.tanh %217 : vector<8x128xf32>
    %219 = vector.extract_strided_slice %216 {offsets = [0, 0], sizes = [8, 128], strides = [1, 1]} : vector<8x384xf32> to vector<8x128xf32>
    %220 = vector.extract_strided_slice %216 {offsets = [0, 128], sizes = [8, 128], strides = [1, 1]} : vector<8x384xf32> to vector<8x128xf32>
    %221 = vector.extract_strided_slice %216 {offsets = [0, 256], sizes = [8, 128], strides = [1, 1]} : vector<8x384xf32> to vector<8x128xf32>
    %222 = arith.mulf %220, %176 : vector<8x128xf32>
    %223 = arith.mulf %219, %218 : vector<8x128xf32>
    %224 = arith.addf %222, %223 : vector<8x128xf32>
    %225 = math.tanh %224 : vector<8x128xf32>
    %226 = arith.mulf %221, %225 : vector<8x128xf32>
    %227 = arith.truncf %202 : vector<8x128xf32> to vector<8x128xbf16>
    %c0_76 = arith.constant 0 : index
    %c0_77 = arith.constant 0 : index
    %228 = vector.load %arg5[%c0_76, %c0_77] : memref<128x512xbf16, #tpu.memory_space<vmem>>, vector<128x512xbf16>
    %cst_78 = arith.constant dense<0.000000e+00> : vector<8x512xf32>
    %229 = tpu.matmul %227, %228, %cst_78 {dimension_numbers = #tpu.dot_dimension_numbers<[1], [0], [0], [1], [0, 0, 1, 1], [], []>} : vector<8x128xbf16>, vector<128x512xbf16>, vector<8x512xf32> -> vector<8x512xf32>
    %230 = arith.truncf %226 : vector<8x128xf32> to vector<8x128xbf16>
    %c0_79 = arith.constant 0 : index
    %c0_80 = arith.constant 0 : index
    %231 = vector.load %arg4[%c0_79, %c0_80] : memref<128x512xbf16, #tpu.memory_space<vmem>>, vector<128x512xbf16>
    %cst_81 = arith.constant dense<0.000000e+00> : vector<8x512xf32>
    %232 = tpu.matmul %230, %231, %cst_81 {dimension_numbers = #tpu.dot_dimension_numbers<[1], [0], [0], [1], [0, 0, 1, 1], [], []>} : vector<8x128xbf16>, vector<128x512xbf16>, vector<8x512xf32> -> vector<8x512xf32>
    %233 = arith.addf %229, %232 : vector<8x512xf32>
    %234 = arith.addf %233, %9 : vector<8x512xf32>
    %235 = vector.extract_strided_slice %234 {offsets = [0, 0], sizes = [8, 384], strides = [1, 1]} : vector<8x512xf32> to vector<8x384xf32>
    %236 = math.tanh %235 : vector<8x384xf32>
    %cst_82 = arith.constant 5.000000e-01 : f32
    %237 = vector.broadcast %cst_82 : f32 to vector<8x384xf32>
    %238 = arith.mulf %237, %236 : vector<8x384xf32>
    %cst_83 = arith.constant 5.000000e-01 : f32
    %239 = vector.broadcast %cst_83 : f32 to vector<8x384xf32>
    %240 = arith.addf %238, %239 : vector<8x384xf32>
    %241 = vector.extract_strided_slice %234 {offsets = [0, 384], sizes = [8, 128], strides = [1, 1]} : vector<8x512xf32> to vector<8x128xf32>
    %242 = math.tanh %241 : vector<8x128xf32>
    %243 = vector.extract_strided_slice %240 {offsets = [0, 0], sizes = [8, 128], strides = [1, 1]} : vector<8x384xf32> to vector<8x128xf32>
    %244 = vector.extract_strided_slice %240 {offsets = [0, 128], sizes = [8, 128], strides = [1, 1]} : vector<8x384xf32> to vector<8x128xf32>
    %245 = vector.extract_strided_slice %240 {offsets = [0, 256], sizes = [8, 128], strides = [1, 1]} : vector<8x384xf32> to vector<8x128xf32>
    %246 = arith.mulf %244, %200 : vector<8x128xf32>
    %247 = arith.mulf %243, %242 : vector<8x128xf32>
    %248 = arith.addf %246, %247 : vector<8x128xf32>
    %249 = math.tanh %248 : vector<8x128xf32>
    %250 = arith.mulf %245, %249 : vector<8x128xf32>
    %c5_i32 = arith.constant 5 : i32
    %c8_i32_84 = arith.constant 8 : i32
    %251 = arith.muli %c5_i32, %c8_i32_84 : i32
    %252 = tpu.assume_multiple %251, 8 : i32
    %253 = arith.index_cast %252 : i32 to index
    %c0_85 = arith.constant 0 : index
    %254 = vector.load %arg10[%253, %c0_85] : memref<64x512xf32, #tpu.memory_space<vmem>>, vector<8x512xf32>
    %255 = arith.truncf %226 : vector<8x128xf32> to vector<8x128xbf16>
    %c0_86 = arith.constant 0 : index
    %c0_87 = arith.constant 0 : index
    %256 = vector.load %arg2[%c0_86, %c0_87] : memref<128x512xbf16, #tpu.memory_space<vmem>>, vector<128x512xbf16>
    %cst_88 = arith.constant dense<0.000000e+00> : vector<8x512xf32>
    %257 = tpu.matmul %255, %256, %cst_88 {dimension_numbers = #tpu.dot_dimension_numbers<[1], [0], [0], [1], [0, 0, 1, 1], [], []>} : vector<8x128xbf16>, vector<128x512xbf16>, vector<8x512xf32> -> vector<8x512xf32>
    %258 = arith.addf %254, %257 : vector<8x512xf32>
    %259 = vector.extract_strided_slice %258 {offsets = [0, 0], sizes = [8, 384], strides = [1, 1]} : vector<8x512xf32> to vector<8x384xf32>
    %260 = math.tanh %259 : vector<8x384xf32>
    %cst_89 = arith.constant 5.000000e-01 : f32
    %261 = vector.broadcast %cst_89 : f32 to vector<8x384xf32>
    %262 = arith.mulf %261, %260 : vector<8x384xf32>
    %cst_90 = arith.constant 5.000000e-01 : f32
    %263 = vector.broadcast %cst_90 : f32 to vector<8x384xf32>
    %264 = arith.addf %262, %263 : vector<8x384xf32>
    %265 = vector.extract_strided_slice %258 {offsets = [0, 384], sizes = [8, 128], strides = [1, 1]} : vector<8x512xf32> to vector<8x128xf32>
    %266 = math.tanh %265 : vector<8x128xf32>
    %267 = vector.extract_strided_slice %264 {offsets = [0, 0], sizes = [8, 128], strides = [1, 1]} : vector<8x384xf32> to vector<8x128xf32>
    %268 = vector.extract_strided_slice %264 {offsets = [0, 128], sizes = [8, 128], strides = [1, 1]} : vector<8x384xf32> to vector<8x128xf32>
    %269 = vector.extract_strided_slice %264 {offsets = [0, 256], sizes = [8, 128], strides = [1, 1]} : vector<8x384xf32> to vector<8x128xf32>
    %270 = arith.mulf %268, %224 : vector<8x128xf32>
    %271 = arith.mulf %267, %266 : vector<8x128xf32>
    %272 = arith.addf %270, %271 : vector<8x128xf32>
    %273 = math.tanh %272 : vector<8x128xf32>
    %274 = arith.mulf %269, %273 : vector<8x128xf32>
    %275 = arith.truncf %250 : vector<8x128xf32> to vector<8x128xbf16>
    %c0_91 = arith.constant 0 : index
    %c0_92 = arith.constant 0 : index
    %276 = vector.load %arg5[%c0_91, %c0_92] : memref<128x512xbf16, #tpu.memory_space<vmem>>, vector<128x512xbf16>
    %cst_93 = arith.constant dense<0.000000e+00> : vector<8x512xf32>
    %277 = tpu.matmul %275, %276, %cst_93 {dimension_numbers = #tpu.dot_dimension_numbers<[1], [0], [0], [1], [0, 0, 1, 1], [], []>} : vector<8x128xbf16>, vector<128x512xbf16>, vector<8x512xf32> -> vector<8x512xf32>
    %278 = arith.truncf %274 : vector<8x128xf32> to vector<8x128xbf16>
    %c0_94 = arith.constant 0 : index
    %c0_95 = arith.constant 0 : index
    %279 = vector.load %arg4[%c0_94, %c0_95] : memref<128x512xbf16, #tpu.memory_space<vmem>>, vector<128x512xbf16>
    %cst_96 = arith.constant dense<0.000000e+00> : vector<8x512xf32>
    %280 = tpu.matmul %278, %279, %cst_96 {dimension_numbers = #tpu.dot_dimension_numbers<[1], [0], [0], [1], [0, 0, 1, 1], [], []>} : vector<8x128xbf16>, vector<128x512xbf16>, vector<8x512xf32> -> vector<8x512xf32>
    %281 = arith.addf %277, %280 : vector<8x512xf32>
    %282 = arith.addf %281, %9 : vector<8x512xf32>
    %283 = vector.extract_strided_slice %282 {offsets = [0, 0], sizes = [8, 384], strides = [1, 1]} : vector<8x512xf32> to vector<8x384xf32>
    %284 = math.tanh %283 : vector<8x384xf32>
    %cst_97 = arith.constant 5.000000e-01 : f32
    %285 = vector.broadcast %cst_97 : f32 to vector<8x384xf32>
    %286 = arith.mulf %285, %284 : vector<8x384xf32>
    %cst_98 = arith.constant 5.000000e-01 : f32
    %287 = vector.broadcast %cst_98 : f32 to vector<8x384xf32>
    %288 = arith.addf %286, %287 : vector<8x384xf32>
    %289 = vector.extract_strided_slice %282 {offsets = [0, 384], sizes = [8, 128], strides = [1, 1]} : vector<8x512xf32> to vector<8x128xf32>
    %290 = math.tanh %289 : vector<8x128xf32>
    %291 = vector.extract_strided_slice %288 {offsets = [0, 0], sizes = [8, 128], strides = [1, 1]} : vector<8x384xf32> to vector<8x128xf32>
    %292 = vector.extract_strided_slice %288 {offsets = [0, 128], sizes = [8, 128], strides = [1, 1]} : vector<8x384xf32> to vector<8x128xf32>
    %293 = vector.extract_strided_slice %288 {offsets = [0, 256], sizes = [8, 128], strides = [1, 1]} : vector<8x384xf32> to vector<8x128xf32>
    %294 = arith.mulf %292, %248 : vector<8x128xf32>
    %295 = arith.mulf %291, %290 : vector<8x128xf32>
    %296 = arith.addf %294, %295 : vector<8x128xf32>
    %297 = math.tanh %296 : vector<8x128xf32>
    %298 = arith.mulf %293, %297 : vector<8x128xf32>
    %c6_i32 = arith.constant 6 : i32
    %c8_i32_99 = arith.constant 8 : i32
    %299 = arith.muli %c6_i32, %c8_i32_99 : i32
    %300 = tpu.assume_multiple %299, 8 : i32
    %301 = arith.index_cast %300 : i32 to index
    %c0_100 = arith.constant 0 : index
    %302 = vector.load %arg10[%301, %c0_100] : memref<64x512xf32, #tpu.memory_space<vmem>>, vector<8x512xf32>
    %303 = arith.truncf %274 : vector<8x128xf32> to vector<8x128xbf16>
    %c0_101 = arith.constant 0 : index
    %c0_102 = arith.constant 0 : index
    %304 = vector.load %arg2[%c0_101, %c0_102] : memref<128x512xbf16, #tpu.memory_space<vmem>>, vector<128x512xbf16>
    %cst_103 = arith.constant dense<0.000000e+00> : vector<8x512xf32>
    %305 = tpu.matmul %303, %304, %cst_103 {dimension_numbers = #tpu.dot_dimension_numbers<[1], [0], [0], [1], [0, 0, 1, 1], [], []>} : vector<8x128xbf16>, vector<128x512xbf16>, vector<8x512xf32> -> vector<8x512xf32>
    %306 = arith.addf %302, %305 : vector<8x512xf32>
    %307 = vector.extract_strided_slice %306 {offsets = [0, 0], sizes = [8, 384], strides = [1, 1]} : vector<8x512xf32> to vector<8x384xf32>
    %308 = math.tanh %307 : vector<8x384xf32>
    %cst_104 = arith.constant 5.000000e-01 : f32
    %309 = vector.broadcast %cst_104 : f32 to vector<8x384xf32>
    %310 = arith.mulf %309, %308 : vector<8x384xf32>
    %cst_105 = arith.constant 5.000000e-01 : f32
    %311 = vector.broadcast %cst_105 : f32 to vector<8x384xf32>
    %312 = arith.addf %310, %311 : vector<8x384xf32>
    %313 = vector.extract_strided_slice %306 {offsets = [0, 384], sizes = [8, 128], strides = [1, 1]} : vector<8x512xf32> to vector<8x128xf32>
    %314 = math.tanh %313 : vector<8x128xf32>
    %315 = vector.extract_strided_slice %312 {offsets = [0, 0], sizes = [8, 128], strides = [1, 1]} : vector<8x384xf32> to vector<8x128xf32>
    %316 = vector.extract_strided_slice %312 {offsets = [0, 128], sizes = [8, 128], strides = [1, 1]} : vector<8x384xf32> to vector<8x128xf32>
    %317 = vector.extract_strided_slice %312 {offsets = [0, 256], sizes = [8, 128], strides = [1, 1]} : vector<8x384xf32> to vector<8x128xf32>
    %318 = arith.mulf %316, %272 : vector<8x128xf32>
    %319 = arith.mulf %315, %314 : vector<8x128xf32>
    %320 = arith.addf %318, %319 : vector<8x128xf32>
    %321 = math.tanh %320 : vector<8x128xf32>
    %322 = arith.mulf %317, %321 : vector<8x128xf32>
    %323 = arith.truncf %298 : vector<8x128xf32> to vector<8x128xbf16>
    %c0_106 = arith.constant 0 : index
    %c0_107 = arith.constant 0 : index
    %324 = vector.load %arg5[%c0_106, %c0_107] : memref<128x512xbf16, #tpu.memory_space<vmem>>, vector<128x512xbf16>
    %cst_108 = arith.constant dense<0.000000e+00> : vector<8x512xf32>
    %325 = tpu.matmul %323, %324, %cst_108 {dimension_numbers = #tpu.dot_dimension_numbers<[1], [0], [0], [1], [0, 0, 1, 1], [], []>} : vector<8x128xbf16>, vector<128x512xbf16>, vector<8x512xf32> -> vector<8x512xf32>
    %326 = arith.truncf %322 : vector<8x128xf32> to vector<8x128xbf16>
    %c0_109 = arith.constant 0 : index
    %c0_110 = arith.constant 0 : index
    %327 = vector.load %arg4[%c0_109, %c0_110] : memref<128x512xbf16, #tpu.memory_space<vmem>>, vector<128x512xbf16>
    %cst_111 = arith.constant dense<0.000000e+00> : vector<8x512xf32>
    %328 = tpu.matmul %326, %327, %cst_111 {dimension_numbers = #tpu.dot_dimension_numbers<[1], [0], [0], [1], [0, 0, 1, 1], [], []>} : vector<8x128xbf16>, vector<128x512xbf16>, vector<8x512xf32> -> vector<8x512xf32>
    %329 = arith.addf %325, %328 : vector<8x512xf32>
    %330 = arith.addf %329, %9 : vector<8x512xf32>
    %331 = vector.extract_strided_slice %330 {offsets = [0, 0], sizes = [8, 384], strides = [1, 1]} : vector<8x512xf32> to vector<8x384xf32>
    %332 = math.tanh %331 : vector<8x384xf32>
    %cst_112 = arith.constant 5.000000e-01 : f32
    %333 = vector.broadcast %cst_112 : f32 to vector<8x384xf32>
    %334 = arith.mulf %333, %332 : vector<8x384xf32>
    %cst_113 = arith.constant 5.000000e-01 : f32
    %335 = vector.broadcast %cst_113 : f32 to vector<8x384xf32>
    %336 = arith.addf %334, %335 : vector<8x384xf32>
    %337 = vector.extract_strided_slice %330 {offsets = [0, 384], sizes = [8, 128], strides = [1, 1]} : vector<8x512xf32> to vector<8x128xf32>
    %338 = math.tanh %337 : vector<8x128xf32>
    %339 = vector.extract_strided_slice %336 {offsets = [0, 0], sizes = [8, 128], strides = [1, 1]} : vector<8x384xf32> to vector<8x128xf32>
    %340 = vector.extract_strided_slice %336 {offsets = [0, 128], sizes = [8, 128], strides = [1, 1]} : vector<8x384xf32> to vector<8x128xf32>
    %341 = vector.extract_strided_slice %336 {offsets = [0, 256], sizes = [8, 128], strides = [1, 1]} : vector<8x384xf32> to vector<8x128xf32>
    %342 = arith.mulf %340, %296 : vector<8x128xf32>
    %343 = arith.mulf %339, %338 : vector<8x128xf32>
    %344 = arith.addf %342, %343 : vector<8x128xf32>
    %345 = math.tanh %344 : vector<8x128xf32>
    %346 = arith.mulf %341, %345 : vector<8x128xf32>
    %c7_i32 = arith.constant 7 : i32
    %c8_i32_114 = arith.constant 8 : i32
    %347 = arith.muli %c7_i32, %c8_i32_114 : i32
    %348 = tpu.assume_multiple %347, 8 : i32
    %349 = arith.index_cast %348 : i32 to index
    %c0_115 = arith.constant 0 : index
    %350 = vector.load %arg10[%349, %c0_115] : memref<64x512xf32, #tpu.memory_space<vmem>>, vector<8x512xf32>
    %351 = arith.truncf %322 : vector<8x128xf32> to vector<8x128xbf16>
    %c0_116 = arith.constant 0 : index
    %c0_117 = arith.constant 0 : index
    %352 = vector.load %arg2[%c0_116, %c0_117] : memref<128x512xbf16, #tpu.memory_space<vmem>>, vector<128x512xbf16>
    %cst_118 = arith.constant dense<0.000000e+00> : vector<8x512xf32>
    %353 = tpu.matmul %351, %352, %cst_118 {dimension_numbers = #tpu.dot_dimension_numbers<[1], [0], [0], [1], [0, 0, 1, 1], [], []>} : vector<8x128xbf16>, vector<128x512xbf16>, vector<8x512xf32> -> vector<8x512xf32>
    %354 = arith.addf %350, %353 : vector<8x512xf32>
    %355 = vector.extract_strided_slice %354 {offsets = [0, 0], sizes = [8, 384], strides = [1, 1]} : vector<8x512xf32> to vector<8x384xf32>
    %356 = math.tanh %355 : vector<8x384xf32>
    %cst_119 = arith.constant 5.000000e-01 : f32
    %357 = vector.broadcast %cst_119 : f32 to vector<8x384xf32>
    %358 = arith.mulf %357, %356 : vector<8x384xf32>
    %cst_120 = arith.constant 5.000000e-01 : f32
    %359 = vector.broadcast %cst_120 : f32 to vector<8x384xf32>
    %360 = arith.addf %358, %359 : vector<8x384xf32>
    %361 = vector.extract_strided_slice %354 {offsets = [0, 384], sizes = [8, 128], strides = [1, 1]} : vector<8x512xf32> to vector<8x128xf32>
    %362 = math.tanh %361 : vector<8x128xf32>
    %363 = vector.extract_strided_slice %360 {offsets = [0, 0], sizes = [8, 128], strides = [1, 1]} : vector<8x384xf32> to vector<8x128xf32>
    %364 = vector.extract_strided_slice %360 {offsets = [0, 128], sizes = [8, 128], strides = [1, 1]} : vector<8x384xf32> to vector<8x128xf32>
    %365 = vector.extract_strided_slice %360 {offsets = [0, 256], sizes = [8, 128], strides = [1, 1]} : vector<8x384xf32> to vector<8x128xf32>
    %366 = arith.mulf %364, %320 : vector<8x128xf32>
    %367 = arith.mulf %363, %362 : vector<8x128xf32>
    %368 = arith.addf %366, %367 : vector<8x128xf32>
    %369 = math.tanh %368 : vector<8x128xf32>
    %370 = arith.mulf %365, %369 : vector<8x128xf32>
    %371 = arith.truncf %346 : vector<8x128xf32> to vector<8x128xbf16>
    %c0_121 = arith.constant 0 : index
    %c0_122 = arith.constant 0 : index
    %372 = vector.load %arg5[%c0_121, %c0_122] : memref<128x512xbf16, #tpu.memory_space<vmem>>, vector<128x512xbf16>
    %cst_123 = arith.constant dense<0.000000e+00> : vector<8x512xf32>
    %373 = tpu.matmul %371, %372, %cst_123 {dimension_numbers = #tpu.dot_dimension_numbers<[1], [0], [0], [1], [0, 0, 1, 1], [], []>} : vector<8x128xbf16>, vector<128x512xbf16>, vector<8x512xf32> -> vector<8x512xf32>
    %374 = arith.truncf %370 : vector<8x128xf32> to vector<8x128xbf16>
    %c0_124 = arith.constant 0 : index
    %c0_125 = arith.constant 0 : index
    %375 = vector.load %arg4[%c0_124, %c0_125] : memref<128x512xbf16, #tpu.memory_space<vmem>>, vector<128x512xbf16>
    %cst_126 = arith.constant dense<0.000000e+00> : vector<8x512xf32>
    %376 = tpu.matmul %374, %375, %cst_126 {dimension_numbers = #tpu.dot_dimension_numbers<[1], [0], [0], [1], [0, 0, 1, 1], [], []>} : vector<8x128xbf16>, vector<128x512xbf16>, vector<8x512xf32> -> vector<8x512xf32>
    %377 = arith.addf %373, %376 : vector<8x512xf32>
    %378 = arith.addf %377, %9 : vector<8x512xf32>
    %379 = vector.extract_strided_slice %378 {offsets = [0, 0], sizes = [8, 384], strides = [1, 1]} : vector<8x512xf32> to vector<8x384xf32>
    %380 = math.tanh %379 : vector<8x384xf32>
    %cst_127 = arith.constant 5.000000e-01 : f32
    %381 = vector.broadcast %cst_127 : f32 to vector<8x384xf32>
    %382 = arith.mulf %381, %380 : vector<8x384xf32>
    %cst_128 = arith.constant 5.000000e-01 : f32
    %383 = vector.broadcast %cst_128 : f32 to vector<8x384xf32>
    %384 = arith.addf %382, %383 : vector<8x384xf32>
    %385 = vector.extract_strided_slice %378 {offsets = [0, 384], sizes = [8, 128], strides = [1, 1]} : vector<8x512xf32> to vector<8x128xf32>
    %386 = math.tanh %385 : vector<8x128xf32>
    %387 = vector.extract_strided_slice %384 {offsets = [0, 0], sizes = [8, 128], strides = [1, 1]} : vector<8x384xf32> to vector<8x128xf32>
    %388 = vector.extract_strided_slice %384 {offsets = [0, 128], sizes = [8, 128], strides = [1, 1]} : vector<8x384xf32> to vector<8x128xf32>
    %389 = vector.extract_strided_slice %384 {offsets = [0, 256], sizes = [8, 128], strides = [1, 1]} : vector<8x384xf32> to vector<8x128xf32>
    %390 = arith.mulf %388, %344 : vector<8x128xf32>
    %391 = arith.mulf %387, %386 : vector<8x128xf32>
    %392 = arith.addf %390, %391 : vector<8x128xf32>
    %393 = math.tanh %392 : vector<8x128xf32>
    %394 = arith.mulf %389, %393 : vector<8x128xf32>
    %c8_i32_129 = arith.constant 8 : i32
    %c0_130 = arith.constant 0 : index
    %c0_131 = arith.constant 0 : index
    %395 = vector.load %arg7[%c0_130, %c0_131] : memref<128x1xf32, #tpu.memory_space<vmem>>, vector<128x1xf32>
    %cst_132 = arith.constant dense<0.000000e+00> : vector<8x1xf32>
    %396 = tpu.matmul %394, %395, %cst_132 {dimension_numbers = #tpu.dot_dimension_numbers<[1], [0], [0], [1], [0, 0, 1, 1], [], []>} : vector<8x128xf32>, vector<128x1xf32>, vector<8x1xf32> -> vector<8x1xf32>
    %c0_133 = arith.constant 0 : index
    %c0_134 = arith.constant 0 : index
    %397 = vector.load %arg8[%c0_133, %c0_134] : memref<1x1xf32, #tpu.memory_space<vmem>>, vector<1x1xf32>
    %398 = vector.broadcast %397 : vector<1x1xf32> to vector<8x1xf32>
    %399 = arith.addf %396, %398 : vector<8x1xf32>
    %c0_135 = arith.constant 0 : index
    %c0_136 = arith.constant 0 : index
    %400 = vector.load %arg9[%c0_135, %c0_136] : memref<8x1xf32, #tpu.memory_space<vmem>>, vector<8x1xf32>
    tpu.vector_store %arg9[%c0_135, %c0_136], %399 {strides = array<i32>} : memref<8x1xf32, #tpu.memory_space<vmem>>, vector<8x1xf32>,
    return
  }
}

</mosaic_0001>

<llo_original>
// kernel: multivariable_lstm_forward.1
$region0: #{multivariable_lstm_forward.1}
  #allocation0 [shape = 'u32[]', space=smem, size = 0x4, offset = 0x4, fixed_abs, tag = 'smem constant byte address 0x4 - core index']
  #allocation1 [shape = 'u32[144,128]{1,0:T(1,128)}', space=vmem, size = 0x12000, scoped, tag = 'internal scratch']
  #allocation2 [shape = 'f32[64,512]{1,0:T(8,128)}', space=vmem, size = 0x20000, scoped, tag = 'scratch operand']
  #allocation3 [shape = 'f32[1,1]{1,0:T(1,128)S(1)}', space=vmem, size = 0x200, scoped, tag = 'scoped memory for multivariable_lstm_forward.1']
  %s0 = inlined_call_operand.vmem [shape: bf16[64,8], index: 0, kind: input, shape index: {}]
  %s1 = inlined_call_operand.vmem [shape: bf16[8,512], index: 1, kind: input, shape index: {}]
  %s2 = inlined_call_operand.vmem [shape: bf16[128,512], index: 2, kind: input, shape index: {}]
  %s3 = inlined_call_operand.vmem [shape: f32[1,512], index: 3, kind: input, shape index: {}]
  %s4 = inlined_call_operand.vmem [shape: bf16[128,512], index: 4, kind: input, shape index: {}]
  %s5 = inlined_call_operand.vmem [shape: bf16[128,512], index: 5, kind: input, shape index: {}]
  %s6 = inlined_call_operand.vmem [shape: f32[1,512], index: 6, kind: input, shape index: {}]
  %s7 = inlined_call_operand.vmem [shape: f32[128,1], index: 7, kind: input, shape index: {}]
  %s8 = inlined_call_operand.<no memory space> [shape: f32[1,1], index: 8, kind: input, shape index: {}]
  %s9 = inlined_call_operand.vmem [shape: f32[8,1], index: 9, kind: output, shape index: {}]
  %s10 = sld [smem:[#allocation0]]
  $region46: #{multivariable_lstm_forward.1} parent=0
    _
  %s12 = ssub.s32 1, %s10
  %s13 = scalar_select 0, %s12, %s10
  %v14 = vstv %s8
  %15 = vst [vmem:[#allocation3] sm:$0x1] %v14
  // Predicated region
  $region2: #{multivariable_lstm_forward.1} parent=0 // pred_check
    _
  $region3: #{multivariable_lstm_forward.1} parent=0 // pred_check_branch
    %17 = sbr.rel (0) target = $region5
  $region4: #{multivariable_lstm_forward.1} parent=0 // pred_region
    _
  $region5: #{multivariable_lstm_forward.1} parent=0 // pred_fallthru
    _
  // Predicated region
  $region6: #{multivariable_lstm_forward.1} parent=0 // pred_check
    _
  $region7: #{multivariable_lstm_forward.1} parent=0 // pred_check_branch
    %19 = sbr.rel (0) target = $region9
  $region8: #{multivariable_lstm_forward.1} parent=0 // pred_region
    _
  $region9: #{multivariable_lstm_forward.1} parent=0 // pred_fallthru
    _
  // Predicated region
  $region10: #{multivariable_lstm_forward.1} parent=0 // pred_check
    _
  $region11: #{multivariable_lstm_forward.1} parent=0 // pred_check_branch
    %21 = sbr.rel (0) target = $region13
  $region12: #{multivariable_lstm_forward.1} parent=0 // pred_region
    _
  $region13: #{multivariable_lstm_forward.1} parent=0 // pred_fallthru
    _
  // Predicated region
  $region14: #{multivariable_lstm_forward.1} parent=0 // pred_check
    _
  $region15: #{multivariable_lstm_forward.1} parent=0 // pred_check_branch
    %23 = sbr.rel (0) target = $region17
  $region16: #{multivariable_lstm_forward.1} parent=0 // pred_region
    _
  $region17: #{multivariable_lstm_forward.1} parent=0 // pred_fallthru
    _
  // Predicated region
  $region18: #{multivariable_lstm_forward.1} parent=0 // pred_check
    _
  $region19: #{multivariable_lstm_forward.1} parent=0 // pred_check_branch
    %25 = sbr.rel (0) target = $region21
  $region20: #{multivariable_lstm_forward.1} parent=0 // pred_region
    _
  $region21: #{multivariable_lstm_forward.1} parent=0 // pred_fallthru
    _
  // Predicated region
  $region22: #{multivariable_lstm_forward.1} parent=0 // pred_check
    _
  $region23: #{multivariable_lstm_forward.1} parent=0 // pred_check_branch
    %27 = sbr.rel (0) target = $region25
  $region24: #{multivariable_lstm_forward.1} parent=0 // pred_region
    _
  $region25: #{multivariable_lstm_forward.1} parent=0 // pred_fallthru
    _
  // Predicated region
  $region26: #{multivariable_lstm_forward.1} parent=0 // pred_check
    _
  $region27: #{multivariable_lstm_forward.1} parent=0 // pred_check_branch
    %29 = sbr.rel (0) target = $region29
  $region28: #{multivariable_lstm_forward.1} parent=0 // pred_region
    _
  $region29: #{multivariable_lstm_forward.1} parent=0 // pred_fallthru
    _
  // Predicated region
  $region30: #{multivariable_lstm_forward.1} parent=0 // pred_check
    _
  $region31: #{multivariable_lstm_forward.1} parent=0 // pred_check_branch
    %31 = sbr.rel (0) target = $region33
  $region32: #{multivariable_lstm_forward.1} parent=0 // pred_region
    _
  $region33: #{multivariable_lstm_forward.1} parent=0 // pred_fallthru
    _
  // Predicated region
  $region34: #{multivariable_lstm_forward.1} parent=0 // pred_check
    _
  $region35: #{multivariable_lstm_forward.1} parent=0 // pred_check_branch
    %33 = sbr.rel (0) target = $region37
  $region36: #{multivariable_lstm_forward.1} parent=0 // pred_region
    _
  $region37: #{multivariable_lstm_forward.1} parent=0 // pred_fallthru
    _
  %v35 = vld [vmem:[%s0] sm:$0xf]
  %v36 = vld [vmem:[%s0 + $0x4] sm:$0xf]
  %v37 = vld [vmem:[%s0 + $0x8] sm:$0xf]
  %v38 = vld [vmem:[%s0 + $0xc] sm:$0xf]
  %v39 = vld [vmem:[%s0 + $0x10] sm:$0xf]
  %v40 = vld [vmem:[%s0 + $0x14] sm:$0xf]
  %v41 = vld [vmem:[%s0 + $0x18] sm:$0xf]
  %v42 = vld [vmem:[%s0 + $0x1c] sm:$0xf]
  %v43 = vld [vmem:[%s1] sm:$0xff]
  %v44 = vld [vmem:[%s1 + $0x8] sm:$0xff]
  %v45 = vld [vmem:[%s3] sm:$0xf]
  %v47 = vlaneseq
  %v48 = vshrl.u32 %v47, 7
  %v49 = vsub.s32 0, %v48
  %v50 = vrot.slane %v45, %v49
  %v51 = vlaneseq
  %v52 = vshrl.u32 %v51, 7
  %v53 = vsub.s32 1, %v52
  %v54 = vrot.slane %v45, %v53
  %v55 = vlaneseq
  %v56 = vshrl.u32 %v55, 7
  %v57 = vsub.s32 2, %v56
  %v58 = vrot.slane %v45, %v57
  %v59 = vlaneseq
  %v60 = vshrl.u32 %v59, 7
  %v61 = vsub.s32 3, %v60
  %v62 = vrot.slane %v45, %v61
  %v75 = vunpack.c.l.b16 %v35
  %v76 = vunpack.c.l.b16 %v36
  %v77 = vunpack.c.l.b16 %v37
  %v78 = vunpack.c.l.b16 %v38
  %v79 = vunpack.c.l.b16 %v39
  %v80 = vunpack.c.l.b16 %v40
  %v81 = vunpack.c.l.b16 %v41
  %v82 = vunpack.c.l.b16 %v42
  %v83 = vpack.c.b16 %v76, %v75
  %v84 = vpack.c.b16 %v78, %v77
  %v85 = vpack.c.b16 %v80, %v79
  %v86 = vpack.c.b16 %v82, %v81
  %v89 = vunpack.c.l.b16 %v43
  %v90 = vunpack.c.h.b16 %v43
  %v91 = vunpack.c.l.b16 %v44
  %v92 = vunpack.c.h.b16 %v44
  %v93 = vpack.c.b16 %v89, %v89
  %v94 = vpack.c.b16 %v90, %v90
  %v95 = vpack.c.b16 %v91, %v91
  %v96 = vpack.c.b16 %v92, %v92
  %vm97 = vcmask 64512
  %v99 = vsel %vm97, %v83, 0
  %v102 = vsel %vm97, %v84, 0
  %v105 = vsel %vm97, %v85, 0
  %v108 = vsel %vm97, %v86, 0
  %vm110 = vcmask 1043456
  %v112 = vsel %vm110, %v93, 0
  %v115 = vsel %vm110, %v94, 0
  %v118 = vsel %vm110, %v95, 0
  %v121 = vsel %vm110, %v96, 0
  %123 = vmatprep.subr.bf16.mxu0 %v115
  %124 = vmatpush1.bf16.msra.mxu0 %v112
  %125 = vmatprep.subr.bf16.mxu0 0
  %126 = vmatpush1.bf16.msra.mxu0 0
  %127 = vmatprep.subr.bf16.mxu0 0
  %128 = vmatpush1.bf16.msra.mxu0 0
  %129 = vmatprep.subr.bf16.mxu0 0
  %130 = vmatpush1.bf16.msra.mxu0 0
  %131 = vmatprep.subr.bf16.mxu0 0
  %132 = vmatpush1.bf16.msra.mxu0 0
  %133 = vmatprep.subr.bf16.mxu0 0
  %134 = vmatpush1.bf16.msra.mxu0 0
  %135 = vmatprep.subr.bf16.mxu0 0
  %136 = vmatpush1.bf16.msra.mxu0 0
  %137 = vmatprep.subr.bf16.mxu0 0
  %138 = vmatpush1.bf16.msra.mxu0 0
  %139 = vmatprep.subr.bf16.mxu0 0
  %140 = vmatpush1.bf16.msra.mxu0 0
  %141 = vmatprep.subr.bf16.mxu0 0
  %142 = vmatpush1.bf16.msra.mxu0 0
  %143 = vmatprep.subr.bf16.mxu0 0
  %144 = vmatpush1.bf16.msra.mxu0 0
  %145 = vmatprep.subr.bf16.mxu0 0
  %146 = vmatpush1.bf16.msra.mxu0 0
  %147 = vmatprep.subr.bf16.mxu0 0
  %148 = vmatpush1.bf16.msra.mxu0 0
  %149 = vmatprep.subr.bf16.mxu0 0
  %150 = vmatpush1.bf16.msra.mxu0 0
  %151 = vmatprep.subr.bf16.mxu0 0
  %152 = vmatpush1.bf16.msra.mxu0 0
  %153 = vmatprep.subr.bf16.mxu0 0
  %154 = vmatpush1.bf16.msra.mxu0 0
  %155 = vmatprep.mubr.bf16.mxu0 0
  %156 = vmatmul.mubr.bf16.gmra.mrb[0].mxu0 %v99
  %v157 = vpop.f32.mrb[0].mxu0
  %v158 = vadd.f32 %v50, %v157
  %v159 = vpop.f32.mrb[0].mxu0
  %v160 = vadd.f32 %v54, %v159
  %v161 = vpop.f32.mrb[0].mxu0
  %v162 = vadd.f32 %v50, %v161
  %v163 = vpop.f32.mrb[0].mxu0
  %v164 = vadd.f32 %v54, %v163
  %165 = vmatprep.mubr.bf16.mxu0 0
  %166 = vmatmul.mubr.bf16.gmra.mrb[0].mxu0 %v102
  %v167 = vpop.f32.mrb[0].mxu0
  %v168 = vadd.f32 %v50, %v167
  %v169 = vpop.f32.mrb[0].mxu0
  %v170 = vadd.f32 %v54, %v169
  %v171 = vpop.f32.mrb[0].mxu0
  %v172 = vadd.f32 %v50, %v171
  %v173 = vpop.f32.mrb[0].mxu0
  %v174 = vadd.f32 %v54, %v173
  %175 = vmatprep.mubr.bf16.mxu0 0
  %176 = vmatmul.mubr.bf16.gmra.mrb[0].mxu0 %v105
  %v177 = vpop.f32.mrb[0].mxu0
  %v178 = vadd.f32 %v50, %v177
  %v179 = vpop.f32.mrb[0].mxu0
  %v180 = vadd.f32 %v54, %v179
  %v181 = vpop.f32.mrb[0].mxu0
  %v182 = vadd.f32 %v50, %v181
  %v183 = vpop.f32.mrb[0].mxu0
  %v184 = vadd.f32 %v54, %v183
  %185 = vmatprep.mubr.bf16.mxu0 0
  %186 = vmatmul.mubr.bf16.gmra.mrb[0].mxu0 %v108
  %v187 = vpop.f32.mrb[0].mxu0
  %v188 = vadd.f32 %v50, %v187
  %v189 = vpop.f32.mrb[0].mxu0
  %v190 = vadd.f32 %v54, %v189
  %v191 = vpop.f32.mrb[0].mxu0
  %v192 = vadd.f32 %v50, %v191
  %v193 = vpop.f32.mrb[0].mxu0
  %v194 = vadd.f32 %v54, %v193
  %195 = vdwg.mxu0
  %196 = vmatprep.subr.bf16.mxu0 %v121
  %197 = vmatpush1.bf16.msra.mxu0 %v118
  %198 = vmatprep.subr.bf16.mxu0 0
  %199 = vmatpush1.bf16.msra.mxu0 0
  %200 = vmatprep.subr.bf16.mxu0 0
  %201 = vmatpush1.bf16.msra.mxu0 0
  %202 = vmatprep.subr.bf16.mxu0 0
  %203 = vmatpush1.bf16.msra.mxu0 0
  %204 = vmatprep.subr.bf16.mxu0 0
  %205 = vmatpush1.bf16.msra.mxu0 0
  %206 = vmatprep.subr.bf16.mxu0 0
  %207 = vmatpush1.bf16.msra.mxu0 0
  %208 = vmatprep.subr.bf16.mxu0 0
  %209 = vmatpush1.bf16.msra.mxu0 0
  %210 = vmatprep.subr.bf16.mxu0 0
  %211 = vmatpush1.bf16.msra.mxu0 0
  %212 = vmatprep.subr.bf16.mxu0 0
  %213 = vmatpush1.bf16.msra.mxu0 0
  %214 = vmatprep.subr.bf16.mxu0 0
  %215 = vmatpush1.bf16.msra.mxu0 0
  %216 = vmatprep.subr.bf16.mxu0 0
  %217 = vmatpush1.bf16.msra.mxu0 0
  %218 = vmatprep.subr.bf16.mxu0 0
  %219 = vmatpush1.bf16.msra.mxu0 0
  %220 = vmatprep.subr.bf16.mxu0 0
  %221 = vmatpush1.bf16.msra.mxu0 0
  %222 = vmatprep.subr.bf16.mxu0 0
  %223 = vmatpush1.bf16.msra.mxu0 0
  %224 = vmatprep.subr.bf16.mxu0 0
  %225 = vmatpush1.bf16.msra.mxu0 0
  %226 = vmatprep.subr.bf16.mxu0 0
  %227 = vmatpush1.bf16.msra.mxu0 0
  %228 = vmatprep.mubr.bf16.mxu0 0
  %229 = vmatmul.mubr.bf16.gmra.mrb[0].mxu0 %v99
  %v230 = vpop.f32.mrb[0].mxu0
  %v231 = vadd.f32 %v58, %v230
  %v232 = vpop.f32.mrb[0].mxu0
  %v233 = vadd.f32 %v62, %v232
  %v234 = vpop.f32.mrb[0].mxu0
  %v235 = vadd.f32 %v58, %v234
  %v236 = vpop.f32.mrb[0].mxu0
  %v237 = vadd.f32 %v62, %v236
  %238 = vmatprep.mubr.bf16.mxu0 0
  %239 = vmatmul.mubr.bf16.gmra.mrb[0].mxu0 %v102
  %v240 = vpop.f32.mrb[0].mxu0
  %v241 = vadd.f32 %v58, %v240
  %v242 = vpop.f32.mrb[0].mxu0
  %v243 = vadd.f32 %v62, %v242
  %v244 = vpop.f32.mrb[0].mxu0
  %v245 = vadd.f32 %v58, %v244
  %v246 = vpop.f32.mrb[0].mxu0
  %v247 = vadd.f32 %v62, %v246
  %248 = vmatprep.mubr.bf16.mxu0 0
  %249 = vmatmul.mubr.bf16.gmra.mrb[0].mxu0 %v105
  %v250 = vpop.f32.mrb[0].mxu0
  %v251 = vadd.f32 %v58, %v250
  %v252 = vpop.f32.mrb[0].mxu0
  %v253 = vadd.f32 %v62, %v252
  %v254 = vpop.f32.mrb[0].mxu0
  %v255 = vadd.f32 %v58, %v254
  %v256 = vpop.f32.mrb[0].mxu0
  %v257 = vadd.f32 %v62, %v256
  %258 = vmatprep.mubr.bf16.mxu0 0
  %259 = vmatmul.mubr.bf16.gmra.mrb[0].mxu0 %v108
  %v260 = vpop.f32.mrb[0].mxu0
  %v261 = vadd.f32 %v58, %v260
  %v262 = vpop.f32.mrb[0].mxu0
  %v263 = vadd.f32 %v62, %v262
  %v264 = vpop.f32.mrb[0].mxu0
  %v265 = vadd.f32 %v58, %v264
  %v266 = vpop.f32.mrb[0].mxu0
  %v267 = vadd.f32 %v62, %v266
  %268 = vdwg.mxu0
  %269 = vst [vmem:[#allocation2] sm:$0xff] %v158
  %270 = vst [vmem:[#allocation2 + $0x8] sm:$0xff] %v160
  %271 = vst [vmem:[#allocation2 + $0x10] sm:$0xff] %v231
  %272 = vst [vmem:[#allocation2 + $0x18] sm:$0xff] %v233
  %273 = vst [vmem:[#allocation2 + $0x20] sm:$0xff] %v162
  %274 = vst [vmem:[#allocation2 + $0x28] sm:$0xff] %v164
  %275 = vst [vmem:[#allocation2 + $0x30] sm:$0xff] %v235
  %276 = vst [vmem:[#allocation2 + $0x38] sm:$0xff] %v237
  %277 = vst [vmem:[#allocation2 + $0x40] sm:$0xff] %v168
  %278 = vst [vmem:[#allocation2 + $0x48] sm:$0xff] %v170
  %279 = vst [vmem:[#allocation2 + $0x50] sm:$0xff] %v241
  %280 = vst [vmem:[#allocation2 + $0x58] sm:$0xff] %v243
  %281 = vst [vmem:[#allocation2 + $0x60] sm:$0xff] %v172
  %282 = vst [vmem:[#allocation2 + $0x68] sm:$0xff] %v174
  %283 = vst [vmem:[#allocation2 + $0x70] sm:$0xff] %v245
  %284 = vst [vmem:[#allocation2 + $0x78] sm:$0xff] %v247
  %285 = vst [vmem:[#allocation2 + $0x80] sm:$0xff] %v178
  %286 = vst [vmem:[#allocation2 + $0x88] sm:$0xff] %v180
  %287 = vst [vmem:[#allocation2 + $0x90] sm:$0xff] %v251
  %288 = vst [vmem:[#allocation2 + $0x98] sm:$0xff] %v253
  %289 = vst [vmem:[#allocation2 + $0xa0] sm:$0xff] %v182
  %290 = vst [vmem:[#allocation2 + $0xa8] sm:$0xff] %v184
  %291 = vst [vmem:[#allocation2 + $0xb0] sm:$0xff] %v255
  %292 = vst [vmem:[#allocation2 + $0xb8] sm:$0xff] %v257
  %293 = vst [vmem:[#allocation2 + $0xc0] sm:$0xff] %v188
  %294 = vst [vmem:[#allocation2 + $0xc8] sm:$0xff] %v190
  %295 = vst [vmem:[#allocation2 + $0xd0] sm:$0xff] %v261
  %296 = vst [vmem:[#allocation2 + $0xd8] sm:$0xff] %v263
  %297 = vst [vmem:[#allocation2 + $0xe0] sm:$0xff] %v192
  %298 = vst [vmem:[#allocation2 + $0xe8] sm:$0xff] %v194
  %299 = vst [vmem:[#allocation2 + $0xf0] sm:$0xff] %v265
  %300 = vst [vmem:[#allocation2 + $0xf8] sm:$0xff] %v267
  %v301 = vld [vmem:[%s6] sm:$0xf]
  %v303 = vlaneseq
  %v304 = vshrl.u32 %v303, 7
  %v305 = vsub.s32 0, %v304
  %v306 = vrot.slane %v301, %v305
  %v307 = vlaneseq
  %v308 = vshrl.u32 %v307, 7
  %v309 = vsub.s32 1, %v308
  %v310 = vrot.slane %v301, %v309
  %v311 = vlaneseq
  %v312 = vshrl.u32 %v311, 7
  %v313 = vsub.s32 2, %v312
  %v314 = vrot.slane %v301, %v313
  %v315 = vlaneseq
  %v316 = vshrl.u32 %v315, 7
  %v317 = vsub.s32 3, %v316
  %v318 = vrot.slane %v301, %v317
  %s323 = smul.u32 0, 4
  %s324 = smul.addr %s323, 8
  %s325 = scalar_lea.vmem [#allocation2], %s324
  %v326 = vld [vmem:[%s325] sm:$0xff]
  %v327 = vld [vmem:[%s325 + $0x8] sm:$0xff]
  %v328 = vld [vmem:[%s325 + $0x10] sm:$0xff]
  %v329 = vld [vmem:[%s325 + $0x18] sm:$0xff]
  %v330 = vld [vmem:[%s2] sm:$0xff]
  %v331 = vld [vmem:[%s2 + $0x8] sm:$0xff]
  %v332 = vld [vmem:[%s2 + $0x10] sm:$0xff]
  %v333 = vld [vmem:[%s2 + $0x18] sm:$0xff]
  %v334 = vld [vmem:[%s2 + $0x20] sm:$0xff]
  %v335 = vld [vmem:[%s2 + $0x28] sm:$0xff]
  %v336 = vld [vmem:[%s2 + $0x30] sm:$0xff]
  %v337 = vld [vmem:[%s2 + $0x38] sm:$0xff]
  %v338 = vld [vmem:[%s2 + $0x40] sm:$0xff]
  %v339 = vld [vmem:[%s2 + $0x48] sm:$0xff]
  %v340 = vld [vmem:[%s2 + $0x50] sm:$0xff]
  %v341 = vld [vmem:[%s2 + $0x58] sm:$0xff]
  %v342 = vld [vmem:[%s2 + $0x60] sm:$0xff]
  %v343 = vld [vmem:[%s2 + $0x68] sm:$0xff]
  %v344 = vld [vmem:[%s2 + $0x70] sm:$0xff]
  %v345 = vld [vmem:[%s2 + $0x78] sm:$0xff]
  %v346 = vld [vmem:[%s2 + $0x80] sm:$0xff]
  %v347 = vld [vmem:[%s2 + $0x88] sm:$0xff]
  %v348 = vld [vmem:[%s2 + $0x90] sm:$0xff]
  %v349 = vld [vmem:[%s2 + $0x98] sm:$0xff]
  %v350 = vld [vmem:[%s2 + $0xa0] sm:$0xff]
  %v351 = vld [vmem:[%s2 + $0xa8] sm:$0xff]
  %v352 = vld [vmem:[%s2 + $0xb0] sm:$0xff]
  %v353 = vld [vmem:[%s2 + $0xb8] sm:$0xff]
  %v354 = vld [vmem:[%s2 + $0xc0] sm:$0xff]
  %v355 = vld [vmem:[%s2 + $0xc8] sm:$0xff]
  %v356 = vld [vmem:[%s2 + $0xd0] sm:$0xff]
  %v357 = vld [vmem:[%s2 + $0xd8] sm:$0xff]
  %v358 = vld [vmem:[%s2 + $0xe0] sm:$0xff]
  %v359 = vld [vmem:[%s2 + $0xe8] sm:$0xff]
  %v360 = vld [vmem:[%s2 + $0xf0] sm:$0xff]
  %v361 = vld [vmem:[%s2 + $0xf8] sm:$0xff]
  %v394 = vunpack.c.l.b16 %v330
  %v395 = vunpack.c.h.b16 %v330
  %v396 = vunpack.c.l.b16 %v331
  %v397 = vunpack.c.h.b16 %v331
  %v398 = vunpack.c.l.b16 %v332
  %v399 = vunpack.c.h.b16 %v332
  %v400 = vunpack.c.l.b16 %v333
  %v401 = vunpack.c.h.b16 %v333
  %v402 = vunpack.c.l.b16 %v334
  %v403 = vunpack.c.h.b16 %v334
  %v404 = vunpack.c.l.b16 %v335
  %v405 = vunpack.c.h.b16 %v335
  %v406 = vunpack.c.l.b16 %v336
  %v407 = vunpack.c.h.b16 %v336
  %v408 = vunpack.c.l.b16 %v337
  %v409 = vunpack.c.h.b16 %v337
  %v410 = vunpack.c.l.b16 %v338
  %v411 = vunpack.c.h.b16 %v338
  %v412 = vunpack.c.l.b16 %v339
  %v413 = vunpack.c.h.b16 %v339
  %v414 = vunpack.c.l.b16 %v340
  %v415 = vunpack.c.h.b16 %v340
  %v416 = vunpack.c.l.b16 %v341
  %v417 = vunpack.c.h.b16 %v341
  %v418 = vunpack.c.l.b16 %v342
  %v419 = vunpack.c.h.b16 %v342
  %v420 = vunpack.c.l.b16 %v343
  %v421 = vunpack.c.h.b16 %v343
  %v422 = vunpack.c.l.b16 %v344
  %v423 = vunpack.c.h.b16 %v344
  %v424 = vunpack.c.l.b16 %v345
  %v425 = vunpack.c.h.b16 %v345
  %v426 = vunpack.c.l.b16 %v346
  %v427 = vunpack.c.h.b16 %v346
  %v428 = vunpack.c.l.b16 %v347
  %v429 = vunpack.c.h.b16 %v347
  %v430 = vunpack.c.l.b16 %v348
  %v431 = vunpack.c.h.b16 %v348
  %v432 = vunpack.c.l.b16 %v349
  %v433 = vunpack.c.h.b16 %v349
  %v434 = vunpack.c.l.b16 %v350
  %v435 = vunpack.c.h.b16 %v350
  %v436 = vunpack.c.l.b16 %v351
  %v437 = vunpack.c.h.b16 %v351
  %v438 = vunpack.c.l.b16 %v352
  %v439 = vunpack.c.h.b16 %v352
  %v440 = vunpack.c.l.b16 %v353
  %v441 = vunpack.c.h.b16 %v353
  %v442 = vunpack.c.l.b16 %v354
  %v443 = vunpack.c.h.b16 %v354
  %v444 = vunpack.c.l.b16 %v355
  %v445 = vunpack.c.h.b16 %v355
  %v446 = vunpack.c.l.b16 %v356
  %v447 = vunpack.c.h.b16 %v356
  %v448 = vunpack.c.l.b16 %v357
  %v449 = vunpack.c.h.b16 %v357
  %v450 = vunpack.c.l.b16 %v358
  %v451 = vunpack.c.h.b16 %v358
  %v452 = vunpack.c.l.b16 %v359
  %v453 = vunpack.c.h.b16 %v359
  %v454 = vunpack.c.l.b16 %v360
  %v455 = vunpack.c.h.b16 %v360
  %v456 = vunpack.c.l.b16 %v361
  %v457 = vunpack.c.h.b16 %v361
  %v458 = vpack.c.b16 %v398, %v394
  %v459 = vpack.c.b16 %v399, %v395
  %v460 = vpack.c.b16 %v400, %v396
  %v461 = vpack.c.b16 %v401, %v397
  %v462 = vpack.c.b16 %v406, %v402
  %v463 = vpack.c.b16 %v407, %v403
  %v464 = vpack.c.b16 %v408, %v404
  %v465 = vpack.c.b16 %v409, %v405
  %v466 = vpack.c.b16 %v414, %v410
  %v467 = vpack.c.b16 %v415, %v411
  %v468 = vpack.c.b16 %v416, %v412
  %v469 = vpack.c.b16 %v417, %v413
  %v470 = vpack.c.b16 %v422, %v418
  %v471 = vpack.c.b16 %v423, %v419
  %v472 = vpack.c.b16 %v424, %v420
  %v473 = vpack.c.b16 %v425, %v421
  %v474 = vpack.c.b16 %v430, %v426
  %v475 = vpack.c.b16 %v431, %v427
  %v476 = vpack.c.b16 %v432, %v428
  %v477 = vpack.c.b16 %v433, %v429
  %v478 = vpack.c.b16 %v438, %v434
  %v479 = vpack.c.b16 %v439, %v435
  %v480 = vpack.c.b16 %v440, %v436
  %v481 = vpack.c.b16 %v441, %v437
  %v482 = vpack.c.b16 %v446, %v442
  %v483 = vpack.c.b16 %v447, %v443
  %v484 = vpack.c.b16 %v448, %v444
  %v485 = vpack.c.b16 %v449, %v445
  %v486 = vpack.c.b16 %v454, %v450
  %v487 = vpack.c.b16 %v455, %v451
  %v488 = vpack.c.b16 %v456, %v452
  %v489 = vpack.c.b16 %v457, %v453
  %522 = vmatprep.subr.bf16.mxu0 %v459
  %523 = vmatpush1.bf16.msra.mxu0 %v458
  %524 = vmatprep.subr.bf16.mxu0 %v463
  %525 = vmatpush1.bf16.msra.mxu0 %v462
  %526 = vmatprep.subr.bf16.mxu0 %v467
  %527 = vmatpush1.bf16.msra.mxu0 %v466
  %528 = vmatprep.subr.bf16.mxu0 %v471
  %529 = vmatpush1.bf16.msra.mxu0 %v470
  %530 = vmatprep.subr.bf16.mxu0 %v475
  %531 = vmatpush1.bf16.msra.mxu0 %v474
  %532 = vmatprep.subr.bf16.mxu0 %v479
  %533 = vmatpush1.bf16.msra.mxu0 %v478
  %534 = vmatprep.subr.bf16.mxu0 %v483
  %535 = vmatpush1.bf16.msra.mxu0 %v482
  %536 = vmatprep.subr.bf16.mxu0 %v487
  %537 = vmatpush1.bf16.msra.mxu0 %v486
  %538 = vmatprep.subr.bf16.mxu0 0
  %539 = vmatpush1.bf16.msra.mxu0 0
  %540 = vmatprep.subr.bf16.mxu0 0
  %541 = vmatpush1.bf16.msra.mxu0 0
  %542 = vmatprep.subr.bf16.mxu0 0
  %543 = vmatpush1.bf16.msra.mxu0 0
  %544 = vmatprep.subr.bf16.mxu0 0
  %545 = vmatpush1.bf16.msra.mxu0 0
  %546 = vmatprep.subr.bf16.mxu0 0
  %547 = vmatpush1.bf16.msra.mxu0 0
  %548 = vmatprep.subr.bf16.mxu0 0
  %549 = vmatpush1.bf16.msra.mxu0 0
  %550 = vmatprep.subr.bf16.mxu0 0
  %551 = vmatpush1.bf16.msra.mxu0 0
  %552 = vmatprep.subr.bf16.mxu0 0
  %553 = vmatpush1.bf16.msra.mxu0 0
  %554 = vmatprep.mubr.bf16.mxu0 0
  %555 = vmatmul.mubr.bf16.gmra.mrb[0].mxu0 0
  %v556 = vpop.f32.mrb[0].mxu0
  %v557 = vadd.f32 0.0, %v556
  %v558 = vpop.f32.mrb[0].mxu0
  %v559 = vadd.f32 0.0, %v558
  %v560 = vpop.f32.mrb[0].mxu0
  %v561 = vpop.f32.mrb[0].mxu0
  %562 = vdwg.mxu0
  %563 = vmatprep.subr.bf16.mxu0 %v461
  %564 = vmatpush1.bf16.msra.mxu0 %v460
  %565 = vmatprep.subr.bf16.mxu0 %v465
  %566 = vmatpush1.bf16.msra.mxu0 %v464
  %567 = vmatprep.subr.bf16.mxu0 %v469
  %568 = vmatpush1.bf16.msra.mxu0 %v468
  %569 = vmatprep.subr.bf16.mxu0 %v473
  %570 = vmatpush1.bf16.msra.mxu0 %v472
  %571 = vmatprep.subr.bf16.mxu0 %v477
  %572 = vmatpush1.bf16.msra.mxu0 %v476
  %573 = vmatprep.subr.bf16.mxu0 %v481
  %574 = vmatpush1.bf16.msra.mxu0 %v480
  %575 = vmatprep.subr.bf16.mxu0 %v485
  %576 = vmatpush1.bf16.msra.mxu0 %v484
  %577 = vmatprep.subr.bf16.mxu0 %v489
  %578 = vmatpush1.bf16.msra.mxu0 %v488
  %579 = vmatprep.subr.bf16.mxu0 0
  %580 = vmatpush1.bf16.msra.mxu0 0
  %581 = vmatprep.subr.bf16.mxu0 0
  %582 = vmatpush1.bf16.msra.mxu0 0
  %583 = vmatprep.subr.bf16.mxu0 0
  %584 = vmatpush1.bf16.msra.mxu0 0
  %585 = vmatprep.subr.bf16.mxu0 0
  %586 = vmatpush1.bf16.msra.mxu0 0
  %587 = vmatprep.subr.bf16.mxu0 0
  %588 = vmatpush1.bf16.msra.mxu0 0
  %589 = vmatprep.subr.bf16.mxu0 0
  %590 = vmatpush1.bf16.msra.mxu0 0
  %591 = vmatprep.subr.bf16.mxu0 0
  %592 = vmatpush1.bf16.msra.mxu0 0
  %593 = vmatprep.subr.bf16.mxu0 0
  %594 = vmatpush1.bf16.msra.mxu0 0
  %595 = vmatprep.mubr.bf16.mxu0 0
  %596 = vmatmul.mubr.bf16.gmra.mrb[0].mxu0 0
  %v597 = vpop.f32.mrb[0].mxu0
  %v598 = vadd.f32 0.0, %v597
  %v599 = vpop.f32.mrb[0].mxu0
  %v600 = vadd.f32 0.0, %v599
  %v601 = vpop.f32.mrb[0].mxu0
  %v602 = vpop.f32.mrb[0].mxu0
  %603 = vdwg.mxu0
  %v604 = vadd.f32 %v326, %v557
  %v605 = vadd.f32 %v327, %v559
  %v606 = vadd.f32 %v328, %v598
  %v607 = vadd.f32 %v329, %v600
  %v608 = vtanh.pop %v604
  %v609 = vtanh.pop %v605
  %v610 = vtanh.pop %v606
  %v611 = vmul.f32 %v608, 0.5
  %v612 = vmul.f32 %v609, 0.5
  %v613 = vmul.f32 %v610, 0.5
  %v614 = vadd.f32 %v611, 0.5
  %v615 = vadd.f32 %v612, 0.5
  %v616 = vadd.f32 %v613, 0.5
  %v617 = vtanh.pop %v607
  %v618 = vmul.f32 %v615, 0.0
  %v619 = vmul.f32 %v614, %v617
  %v620 = vadd.f32 %v618, %v619
  %v621 = vtanh.pop %v620
  %v622 = vmul.f32 %v616, %v621
  %v623 = vld [vmem:[%s5] sm:$0xff]
  %v624 = vld [vmem:[%s5 + $0x8] sm:$0xff]
  %v625 = vld [vmem:[%s5 + $0x10] sm:$0xff]
  %v626 = vld [vmem:[%s5 + $0x18] sm:$0xff]
  %v627 = vld [vmem:[%s5 + $0x20] sm:$0xff]
  %v628 = vld [vmem:[%s5 + $0x28] sm:$0xff]
  %v629 = vld [vmem:[%s5 + $0x30] sm:$0xff]
  %v630 = vld [vmem:[%s5 + $0x38] sm:$0xff]
  %v631 = vld [vmem:[%s5 + $0x40] sm:$0xff]
  %v632 = vld [vmem:[%s5 + $0x48] sm:$0xff]
  %v633 = vld [vmem:[%s5 + $0x50] sm:$0xff]
  %v634 = vld [vmem:[%s5 + $0x58] sm:$0xff]
  %v635 = vld [vmem:[%s5 + $0x60] sm:$0xff]
  %v636 = vld [vmem:[%s5 + $0x68] sm:$0xff]
  %v637 = vld [vmem:[%s5 + $0x70] sm:$0xff]
  %v638 = vld [vmem:[%s5 + $0x78] sm:$0xff]
  %v639 = vld [vmem:[%s5 + $0x80] sm:$0xff]
  %v640 = vld [vmem:[%s5 + $0x88] sm:$0xff]
  %v641 = vld [vmem:[%s5 + $0x90] sm:$0xff]
  %v642 = vld [vmem:[%s5 + $0x98] sm:$0xff]
  %v643 = vld [vmem:[%s5 + $0xa0] sm:$0xff]
  %v644 = vld [vmem:[%s5 + $0xa8] sm:$0xff]
  %v645 = vld [vmem:[%s5 + $0xb0] sm:$0xff]
  %v646 = vld [vmem:[%s5 + $0xb8] sm:$0xff]
  %v647 = vld [vmem:[%s5 + $0xc0] sm:$0xff]
  %v648 = vld [vmem:[%s5 + $0xc8] sm:$0xff]
  %v649 = vld [vmem:[%s5 + $0xd0] sm:$0xff]
  %v650 = vld [vmem:[%s5 + $0xd8] sm:$0xff]
  %v651 = vld [vmem:[%s5 + $0xe0] sm:$0xff]
  %v652 = vld [vmem:[%s5 + $0xe8] sm:$0xff]
  %v653 = vld [vmem:[%s5 + $0xf0] sm:$0xff]
  %v654 = vld [vmem:[%s5 + $0xf8] sm:$0xff]
  %v655 = vpack.c.bf16 %v622, %v622
  %v656 = vld [vmem:[%s4] sm:$0xff]
  %v657 = vld [vmem:[%s4 + $0x8] sm:$0xff]
  %v658 = vld [vmem:[%s4 + $0x10] sm:$0xff]
  %v659 = vld [vmem:[%s4 + $0x18] sm:$0xff]
  %v660 = vld [vmem:[%s4 + $0x20] sm:$0xff]
  %v661 = vld [vmem:[%s4 + $0x28] sm:$0xff]
  %v662 = vld [vmem:[%s4 + $0x30] sm:$0xff]
  %v663 = vld [vmem:[%s4 + $0x38] sm:$0xff]
  %v664 = vld [vmem:[%s4 + $0x40] sm:$0xff]
  %v665 = vld [vmem:[%s4 + $0x48] sm:$0xff]
  %v666 = vld [vmem:[%s4 + $0x50] sm:$0xff]
  %v667 = vld [vmem:[%s4 + $0x58] sm:$0xff]
  %v668 = vld [vmem:[%s4 + $0x60] sm:$0xff]
  %v669 = vld [vmem:[%s4 + $0x68] sm:$0xff]
  %v670 = vld [vmem:[%s4 + $0x70] sm:$0xff]
  %v671 = vld [vmem:[%s4 + $0x78] sm:$0xff]
  %v672 = vld [vmem:[%s4 + $0x80] sm:$0xff]
  %v673 = vld [vmem:[%s4 + $0x88] sm:$0xff]
  %v674 = vld [vmem:[%s4 + $0x90] sm:$0xff]
  %v675 = vld [vmem:[%s4 + $0x98] sm:$0xff]
  %v676 = vld [vmem:[%s4 + $0xa0] sm:$0xff]
  %v677 = vld [vmem:[%s4 + $0xa8] sm:$0xff]
  %v678 = vld [vmem:[%s4 + $0xb0] sm:$0xff]
  %v679 = vld [vmem:[%s4 + $0xb8] sm:$0xff]
  %v680 = vld [vmem:[%s4 + $0xc0] sm:$0xff]
  %v681 = vld [vmem:[%s4 + $0xc8] sm:$0xff]
  %v682 = vld [vmem:[%s4 + $0xd0] sm:$0xff]
  %v683 = vld [vmem:[%s4 + $0xd8] sm:$0xff]
  %v684 = vld [vmem:[%s4 + $0xe0] sm:$0xff]
  %v685 = vld [vmem:[%s4 + $0xe8] sm:$0xff]
  %v686 = vld [vmem:[%s4 + $0xf0] sm:$0xff]
  %v687 = vld [vmem:[%s4 + $0xf8] sm:$0xff]
  %v720 = vunpack.c.l.b16 %v656
  %v721 = vunpack.c.h.b16 %v656
  %v722 = vunpack.c.l.b16 %v657
  %v723 = vunpack.c.h.b16 %v657
  %v724 = vunpack.c.l.b16 %v658
  %v725 = vunpack.c.h.b16 %v658
  %v726 = vunpack.c.l.b16 %v659
  %v727 = vunpack.c.h.b16 %v659
  %v728 = vunpack.c.l.b16 %v660
  %v729 = vunpack.c.h.b16 %v660
  %v730 = vunpack.c.l.b16 %v661
  %v731 = vunpack.c.h.b16 %v661
  %v732 = vunpack.c.l.b16 %v662
  %v733 = vunpack.c.h.b16 %v662
  %v734 = vunpack.c.l.b16 %v663
  %v735 = vunpack.c.h.b16 %v663
  %v736 = vunpack.c.l.b16 %v664
  %v737 = vunpack.c.h.b16 %v664
  %v738 = vunpack.c.l.b16 %v665
  %v739 = vunpack.c.h.b16 %v665
  %v740 = vunpack.c.l.b16 %v666
  %v741 = vunpack.c.h.b16 %v666
  %v742 = vunpack.c.l.b16 %v667
  %v743 = vunpack.c.h.b16 %v667
  %v744 = vunpack.c.l.b16 %v668
  %v745 = vunpack.c.h.b16 %v668
  %v746 = vunpack.c.l.b16 %v669
  %v747 = vunpack.c.h.b16 %v669
  %v748 = vunpack.c.l.b16 %v670
  %v749 = vunpack.c.h.b16 %v670
  %v750 = vunpack.c.l.b16 %v671
  %v751 = vunpack.c.h.b16 %v671
  %v752 = vunpack.c.l.b16 %v672
  %v753 = vunpack.c.h.b16 %v672
  %v754 = vunpack.c.l.b16 %v673
  %v755 = vunpack.c.h.b16 %v673
  %v756 = vunpack.c.l.b16 %v674
  %v757 = vunpack.c.h.b16 %v674
  %v758 = vunpack.c.l.b16 %v675
  %v759 = vunpack.c.h.b16 %v675
  %v760 = vunpack.c.l.b16 %v676
  %v761 = vunpack.c.h.b16 %v676
  %v762 = vunpack.c.l.b16 %v677
  %v763 = vunpack.c.h.b16 %v677
  %v764 = vunpack.c.l.b16 %v678
  %v765 = vunpack.c.h.b16 %v678
  %v766 = vunpack.c.l.b16 %v679
  %v767 = vunpack.c.h.b16 %v679
  %v768 = vunpack.c.l.b16 %v680
  %v769 = vunpack.c.h.b16 %v680
  %v770 = vunpack.c.l.b16 %v681
  %v771 = vunpack.c.h.b16 %v681
  %v772 = vunpack.c.l.b16 %v682
  %v773 = vunpack.c.h.b16 %v682
  %v774 = vunpack.c.l.b16 %v683
  %v775 = vunpack.c.h.b16 %v683
  %v776 = vunpack.c.l.b16 %v684
  %v777 = vunpack.c.h.b16 %v684
  %v778 = vunpack.c.l.b16 %v685
  %v779 = vunpack.c.h.b16 %v685
  %v780 = vunpack.c.l.b16 %v686
  %v781 = vunpack.c.h.b16 %v686
  %v782 = vunpack.c.l.b16 %v687
  %v783 = vunpack.c.h.b16 %v687
  %v784 = vpack.c.b16 %v724, %v720
  %v785 = vpack.c.b16 %v725, %v721
  %v786 = vpack.c.b16 %v726, %v722
  %v787 = vpack.c.b16 %v727, %v723
  %v788 = vpack.c.b16 %v732, %v728
  %v789 = vpack.c.b16 %v733, %v729
  %v790 = vpack.c.b16 %v734, %v730
  %v791 = vpack.c.b16 %v735, %v731
  %v792 = vpack.c.b16 %v740, %v736
  %v793 = vpack.c.b16 %v741, %v737
  %v794 = vpack.c.b16 %v742, %v738
  %v795 = vpack.c.b16 %v743, %v739
  %v796 = vpack.c.b16 %v748, %v744
  %v797 = vpack.c.b16 %v749, %v745
  %v798 = vpack.c.b16 %v750, %v746
  %v799 = vpack.c.b16 %v751, %v747
  %v800 = vpack.c.b16 %v756, %v752
  %v801 = vpack.c.b16 %v757, %v753
  %v802 = vpack.c.b16 %v758, %v754
  %v803 = vpack.c.b16 %v759, %v755
  %v804 = vpack.c.b16 %v764, %v760
  %v805 = vpack.c.b16 %v765, %v761
  %v806 = vpack.c.b16 %v766, %v762
  %v807 = vpack.c.b16 %v767, %v763
  %v808 = vpack.c.b16 %v772, %v768
  %v809 = vpack.c.b16 %v773, %v769
  %v810 = vpack.c.b16 %v774, %v770
  %v811 = vpack.c.b16 %v775, %v771
  %v812 = vpack.c.b16 %v780, %v776
  %v813 = vpack.c.b16 %v781, %v777
  %v814 = vpack.c.b16 %v782, %v778
  %v815 = vpack.c.b16 %v783, %v779
  %848 = vmatprep.subr.bf16.mxu0 %v785
  %849 = vmatpush1.bf16.msra.mxu0 %v784
  %850 = vmatprep.subr.bf16.mxu0 %v789
  %851 = vmatpush1.bf16.msra.mxu0 %v788
  %852 = vmatprep.subr.bf16.mxu0 %v793
  %853 = vmatpush1.bf16.msra.mxu0 %v792
  %854 = vmatprep.subr.bf16.mxu0 %v797
  %855 = vmatpush1.bf16.msra.mxu0 %v796
  %856 = vmatprep.subr.bf16.mxu0 %v801
  %857 = vmatpush1.bf16.msra.mxu0 %v800
  %858 = vmatprep.subr.bf16.mxu0 %v805
  %859 = vmatpush1.bf16.msra.mxu0 %v804
  %860 = vmatprep.subr.bf16.mxu0 %v809
  %861 = vmatpush1.bf16.msra.mxu0 %v808
  %862 = vmatprep.subr.bf16.mxu0 %v813
  %863 = vmatpush1.bf16.msra.mxu0 %v812
  %864 = vmatprep.subr.bf16.mxu0 0
  %865 = vmatpush1.bf16.msra.mxu0 0
  %866 = vmatprep.subr.bf16.mxu0 0
  %867 = vmatpush1.bf16.msra.mxu0 0
  %868 = vmatprep.subr.bf16.mxu0 0
  %869 = vmatpush1.bf16.msra.mxu0 0
  %870 = vmatprep.subr.bf16.mxu0 0
  %871 = vmatpush1.bf16.msra.mxu0 0
  %872 = vmatprep.subr.bf16.mxu0 0
  %873 = vmatpush1.bf16.msra.mxu0 0
  %874 = vmatprep.subr.bf16.mxu0 0
  %875 = vmatpush1.bf16.msra.mxu0 0
  %876 = vmatprep.subr.bf16.mxu0 0
  %877 = vmatpush1.bf16.msra.mxu0 0
  %878 = vmatprep.subr.bf16.mxu0 0
  %879 = vmatpush1.bf16.msra.mxu0 0
  %880 = vmatprep.mubr.bf16.mxu0 0
  %881 = vmatmul.mubr.bf16.gmra.mrb[0].mxu0 %v655
  %v882 = vpop.f32.mrb[0].mxu0
  %v883 = vadd.f32 0.0, %v882
  %v884 = vpop.f32.mrb[0].mxu0
  %v885 = vadd.f32 0.0, %v884
  %v886 = vpop.f32.mrb[0].mxu0
  %v887 = vpop.f32.mrb[0].mxu0
  %888 = vdwg.mxu0
  %889 = vmatprep.subr.bf16.mxu0 %v787
  %890 = vmatpush1.bf16.msra.mxu0 %v786
  %891 = vmatprep.subr.bf16.mxu0 %v791
  %892 = vmatpush1.bf16.msra.mxu0 %v790
  %893 = vmatprep.subr.bf16.mxu0 %v795
  %894 = vmatpush1.bf16.msra.mxu0 %v794
  %895 = vmatprep.subr.bf16.mxu0 %v799
  %896 = vmatpush1.bf16.msra.mxu0 %v798
  %897 = vmatprep.subr.bf16.mxu0 %v803
  %898 = vmatpush1.bf16.msra.mxu0 %v802
  %899 = vmatprep.subr.bf16.mxu0 %v807
  %900 = vmatpush1.bf16.msra.mxu0 %v806
  %901 = vmatprep.subr.bf16.mxu0 %v811
  %902 = vmatpush1.bf16.msra.mxu0 %v810
  %903 = vmatprep.subr.bf16.mxu0 %v815
  %904 = vmatpush1.bf16.msra.mxu0 %v814
  %905 = vmatprep.subr.bf16.mxu0 0
  %906 = vmatpush1.bf16.msra.mxu0 0
  %907 = vmatprep.subr.bf16.mxu0 0
  %908 = vmatpush1.bf16.msra.mxu0 0
  %909 = vmatprep.subr.bf16.mxu0 0
  %910 = vmatpush1.bf16.msra.mxu0 0
  %911 = vmatprep.subr.bf16.mxu0 0
  %912 = vmatpush1.bf16.msra.mxu0 0
  %913 = vmatprep.subr.bf16.mxu0 0
  %914 = vmatpush1.bf16.msra.mxu0 0
  %915 = vmatprep.subr.bf16.mxu0 0
  %916 = vmatpush1.bf16.msra.mxu0 0
  %917 = vmatprep.subr.bf16.mxu0 0
  %918 = vmatpush1.bf16.msra.mxu0 0
  %919 = vmatprep.subr.bf16.mxu0 0
  %920 = vmatpush1.bf16.msra.mxu0 0
  %921 = vmatprep.mubr.bf16.mxu0 0
  %922 = vmatmul.mubr.bf16.gmra.mrb[0].mxu0 %v655
  %v923 = vpop.f32.mrb[0].mxu0
  %v924 = vadd.f32 0.0, %v923
  %v925 = vpop.f32.mrb[0].mxu0
  %v926 = vadd.f32 0.0, %v925
  %v927 = vpop.f32.mrb[0].mxu0
  %v928 = vpop.f32.mrb[0].mxu0
  %929 = vdwg.mxu0
  %v962 = vunpack.c.l.b16 %v623
  %v963 = vunpack.c.h.b16 %v623
  %v964 = vunpack.c.l.b16 %v624
  %v965 = vunpack.c.h.b16 %v624
  %v966 = vunpack.c.l.b16 %v625
  %v967 = vunpack.c.h.b16 %v625
  %v968 = vunpack.c.l.b16 %v626
  %v969 = vunpack.c.h.b16 %v626
  %v970 = vunpack.c.l.b16 %v627
  %v971 = vunpack.c.h.b16 %v627
  %v972 = vunpack.c.l.b16 %v628
  %v973 = vunpack.c.h.b16 %v628
  %v974 = vunpack.c.l.b16 %v629
  %v975 = vunpack.c.h.b16 %v629
  %v976 = vunpack.c.l.b16 %v630
  %v977 = vunpack.c.h.b16 %v630
  %v978 = vunpack.c.l.b16 %v631
  %v979 = vunpack.c.h.b16 %v631
  %v980 = vunpack.c.l.b16 %v632
  %v981 = vunpack.c.h.b16 %v632
  %v982 = vunpack.c.l.b16 %v633
  %v983 = vunpack.c.h.b16 %v633
  %v984 = vunpack.c.l.b16 %v634
  %v985 = vunpack.c.h.b16 %v634
  %v986 = vunpack.c.l.b16 %v635
  %v987 = vunpack.c.h.b16 %v635
  %v988 = vunpack.c.l.b16 %v636
  %v989 = vunpack.c.h.b16 %v636
  %v990 = vunpack.c.l.b16 %v637
  %v991 = vunpack.c.h.b16 %v637
  %v992 = vunpack.c.l.b16 %v638
  %v993 = vunpack.c.h.b16 %v638
  %v994 = vunpack.c.l.b16 %v639
  %v995 = vunpack.c.h.b16 %v639
  %v996 = vunpack.c.l.b16 %v640
  %v997 = vunpack.c.h.b16 %v640
  %v998 = vunpack.c.l.b16 %v641
  %v999 = vunpack.c.h.b16 %v641
  %v1000 = vunpack.c.l.b16 %v642
  %v1001 = vunpack.c.h.b16 %v642
  %v1002 = vunpack.c.l.b16 %v643
  %v1003 = vunpack.c.h.b16 %v643
  %v1004 = vunpack.c.l.b16 %v644
  %v1005 = vunpack.c.h.b16 %v644
  %v1006 = vunpack.c.l.b16 %v645
  %v1007 = vunpack.c.h.b16 %v645
  %v1008 = vunpack.c.l.b16 %v646
  %v1009 = vunpack.c.h.b16 %v646
  %v1010 = vunpack.c.l.b16 %v647
  %v1011 = vunpack.c.h.b16 %v647
  %v1012 = vunpack.c.l.b16 %v648
  %v1013 = vunpack.c.h.b16 %v648
  %v1014 = vunpack.c.l.b16 %v649
  %v1015 = vunpack.c.h.b16 %v649
  %v1016 = vunpack.c.l.b16 %v650
  %v1017 = vunpack.c.h.b16 %v650
  %v1018 = vunpack.c.l.b16 %v651
  %v1019 = vunpack.c.h.b16 %v651
  %v1020 = vunpack.c.l.b16 %v652
  %v1021 = vunpack.c.h.b16 %v652
  %v1022 = vunpack.c.l.b16 %v653
  %v1023 = vunpack.c.h.b16 %v653
  %v1024 = vunpack.c.l.b16 %v654
  %v1025 = vunpack.c.h.b16 %v654
  %v1026 = vpack.c.b16 %v966, %v962
  %v1027 = vpack.c.b16 %v967, %v963
  %v1028 = vpack.c.b16 %v968, %v964
  %v1029 = vpack.c.b16 %v969, %v965
  %v1030 = vpack.c.b16 %v974, %v970
  %v1031 = vpack.c.b16 %v975, %v971
  %v1032 = vpack.c.b16 %v976, %v972
  %v1033 = vpack.c.b16 %v977, %v973
  %v1034 = vpack.c.b16 %v982, %v978
  %v1035 = vpack.c.b16 %v983, %v979
  %v1036 = vpack.c.b16 %v984, %v980
  %v1037 = vpack.c.b16 %v985, %v981
  %v1038 = vpack.c.b16 %v990, %v986
  %v1039 = vpack.c.b16 %v991, %v987
  %v1040 = vpack.c.b16 %v992, %v988
  %v1041 = vpack.c.b16 %v993, %v989
  %v1042 = vpack.c.b16 %v998, %v994
  %v1043 = vpack.c.b16 %v999, %v995
  %v1044 = vpack.c.b16 %v1000, %v996
  %v1045 = vpack.c.b16 %v1001, %v997
  %v1046 = vpack.c.b16 %v1006, %v1002
  %v1047 = vpack.c.b16 %v1007, %v1003
  %v1048 = vpack.c.b16 %v1008, %v1004
  %v1049 = vpack.c.b16 %v1009, %v1005
  %v1050 = vpack.c.b16 %v1014, %v1010
  %v1051 = vpack.c.b16 %v1015, %v1011
  %v1052 = vpack.c.b16 %v1016, %v1012
  %v1053 = vpack.c.b16 %v1017, %v1013
  %v1054 = vpack.c.b16 %v1022, %v1018
  %v1055 = vpack.c.b16 %v1023, %v1019
  %v1056 = vpack.c.b16 %v1024, %v1020
  %v1057 = vpack.c.b16 %v1025, %v1021
  %1090 = vmatprep.subr.bf16.mxu0 %v1027
  %1091 = vmatpush1.bf16.msra.mxu0 %v1026
  %1092 = vmatprep.subr.bf16.mxu0 %v1031
  %1093 = vmatpush1.bf16.msra.mxu0 %v1030
  %1094 = vmatprep.subr.bf16.mxu0 %v1035
  %1095 = vmatpush1.bf16.msra.mxu0 %v1034
  %1096 = vmatprep.subr.bf16.mxu0 %v1039
  %1097 = vmatpush1.bf16.msra.mxu0 %v1038
  %1098 = vmatprep.subr.bf16.mxu0 %v1043
  %1099 = vmatpush1.bf16.msra.mxu0 %v1042
  %1100 = vmatprep.subr.bf16.mxu0 %v1047
  %1101 = vmatpush1.bf16.msra.mxu0 %v1046
  %1102 = vmatprep.subr.bf16.mxu0 %v1051
  %1103 = vmatpush1.bf16.msra.mxu0 %v1050
  %1104 = vmatprep.subr.bf16.mxu0 %v1055
  %1105 = vmatpush1.bf16.msra.mxu0 %v1054
  %1106 = vmatprep.subr.bf16.mxu0 0
  %1107 = vmatpush1.bf16.msra.mxu0 0
  %1108 = vmatprep.subr.bf16.mxu0 0
  %1109 = vmatpush1.bf16.msra.mxu0 0
  %1110 = vmatprep.subr.bf16.mxu0 0
  %1111 = vmatpush1.bf16.msra.mxu0 0
  %1112 = vmatprep.subr.bf16.mxu0 0
  %1113 = vmatpush1.bf16.msra.mxu0 0
  %1114 = vmatprep.subr.bf16.mxu0 0
  %1115 = vmatpush1.bf16.msra.mxu0 0
  %1116 = vmatprep.subr.bf16.mxu0 0
  %1117 = vmatpush1.bf16.msra.mxu0 0
  %1118 = vmatprep.subr.bf16.mxu0 0
  %1119 = vmatpush1.bf16.msra.mxu0 0
  %1120 = vmatprep.subr.bf16.mxu0 0
  %1121 = vmatpush1.bf16.msra.mxu0 0
  %1122 = vmatprep.mubr.bf16.mxu0 0
  %1123 = vmatmul.mubr.bf16.gmra.mrb[0].mxu0 0
  %v1124 = vpop.f32.mrb[0].mxu0
  %v1125 = vadd.f32 %v883, %v1124
  %v1126 = vpop.f32.mrb[0].mxu0
  %v1127 = vadd.f32 %v885, %v1126
  %v1128 = vpop.f32.mrb[0].mxu0
  %v1129 = vpop.f32.mrb[0].mxu0
  %1130 = vdwg.mxu0
  %1131 = vmatprep.subr.bf16.mxu0 %v1029
  %1132 = vmatpush1.bf16.msra.mxu0 %v1028
  %1133 = vmatprep.subr.bf16.mxu0 %v1033
  %1134 = vmatpush1.bf16.msra.mxu0 %v1032
  %1135 = vmatprep.subr.bf16.mxu0 %v1037
  %1136 = vmatpush1.bf16.msra.mxu0 %v1036
  %1137 = vmatprep.subr.bf16.mxu0 %v1041
  %1138 = vmatpush1.bf16.msra.mxu0 %v1040
  %1139 = vmatprep.subr.bf16.mxu0 %v1045
  %1140 = vmatpush1.bf16.msra.mxu0 %v1044
  %1141 = vmatprep.subr.bf16.mxu0 %v1049
  %1142 = vmatpush1.bf16.msra.mxu0 %v1048
  %1143 = vmatprep.subr.bf16.mxu0 %v1053
  %1144 = vmatpush1.bf16.msra.mxu0 %v1052
  %1145 = vmatprep.subr.bf16.mxu0 %v1057
  %1146 = vmatpush1.bf16.msra.mxu0 %v1056
  %1147 = vmatprep.subr.bf16.mxu0 0
  %1148 = vmatpush1.bf16.msra.mxu0 0
  %1149 = vmatprep.subr.bf16.mxu0 0
  %1150 = vmatpush1.bf16.msra.mxu0 0
  %1151 = vmatprep.subr.bf16.mxu0 0
  %1152 = vmatpush1.bf16.msra.mxu0 0
  %1153 = vmatprep.subr.bf16.mxu0 0
  %1154 = vmatpush1.bf16.msra.mxu0 0
  %1155 = vmatprep.subr.bf16.mxu0 0
  %1156 = vmatpush1.bf16.msra.mxu0 0
  %1157 = vmatprep.subr.bf16.mxu0 0
  %1158 = vmatpush1.bf16.msra.mxu0 0
  %1159 = vmatprep.subr.bf16.mxu0 0
  %1160 = vmatpush1.bf16.msra.mxu0 0
  %1161 = vmatprep.subr.bf16.mxu0 0
  %1162 = vmatpush1.bf16.msra.mxu0 0
  %1163 = vmatprep.mubr.bf16.mxu0 0
  %1164 = vmatmul.mubr.bf16.gmra.mrb[0].mxu0 0
  %v1165 = vpop.f32.mrb[0].mxu0
  %v1166 = vadd.f32 %v924, %v1165
  %v1167 = vpop.f32.mrb[0].mxu0
  %v1168 = vadd.f32 %v926, %v1167
  %v1169 = vpop.f32.mrb[0].mxu0
  %v1170 = vpop.f32.mrb[0].mxu0
  %1171 = vdwg.mxu0
  %v1172 = vadd.f32 %v1125, %v306
  %v1173 = vadd.f32 %v1127, %v310
  %v1174 = vadd.f32 %v1166, %v314
  %v1175 = vadd.f32 %v1168, %v318
  %v1176 = vtanh.pop %v1172
  %v1177 = vtanh.pop %v1173
  %v1178 = vtanh.pop %v1174
  %v1179 = vmul.f32 %v1176, 0.5
  %v1180 = vmul.f32 %v1177, 0.5
  %v1181 = vmul.f32 %v1178, 0.5
  %v1182 = vadd.f32 %v1179, 0.5
  %v1183 = vadd.f32 %v1180, 0.5
  %v1184 = vadd.f32 %v1181, 0.5
  %v1185 = vtanh.pop %v1175
  %v1186 = vmul.f32 %v1183, 0.0
  %v1187 = vmul.f32 %v1182, %v1185
  %v1188 = vadd.f32 %v1186, %v1187
  %v1189 = vtanh.pop %v1188
  %v1190 = vmul.f32 %v1184, %v1189
  %s1191 = smul.u32 1, 4
  %s1192 = smul.addr %s1191, 8
  %s1193 = scalar_lea.vmem [#allocation2], %s1192
  %v1194 = vld [vmem:[%s1193] sm:$0xff]
  %v1195 = vld [vmem:[%s1193 + $0x8] sm:$0xff]
  %v1196 = vld [vmem:[%s1193 + $0x10] sm:$0xff]
  %v1197 = vld [vmem:[%s1193 + $0x18] sm:$0xff]
  %1198 = vmatprep.subr.bf16.mxu0 %v459
  %1199 = vmatpush1.bf16.msra.mxu0 %v458
  %1200 = vmatprep.subr.bf16.mxu0 %v463
  %1201 = vmatpush1.bf16.msra.mxu0 %v462
  %1202 = vmatprep.subr.bf16.mxu0 %v467
  %1203 = vmatpush1.bf16.msra.mxu0 %v466
  %1204 = vmatprep.subr.bf16.mxu0 %v471
  %1205 = vmatpush1.bf16.msra.mxu0 %v470
  %1206 = vmatprep.subr.bf16.mxu0 %v475
  %1207 = vmatpush1.bf16.msra.mxu0 %v474
  %1208 = vmatprep.subr.bf16.mxu0 %v479
  %1209 = vmatpush1.bf16.msra.mxu0 %v478
  %1210 = vmatprep.subr.bf16.mxu0 %v483
  %1211 = vmatpush1.bf16.msra.mxu0 %v482
  %1212 = vmatprep.subr.bf16.mxu0 %v487
  %1213 = vmatpush1.bf16.msra.mxu0 %v486
  %1214 = vmatprep.subr.bf16.mxu0 0
  %1215 = vmatpush1.bf16.msra.mxu0 0
  %1216 = vmatprep.subr.bf16.mxu0 0
  %1217 = vmatpush1.bf16.msra.mxu0 0
  %1218 = vmatprep.subr.bf16.mxu0 0
  %1219 = vmatpush1.bf16.msra.mxu0 0
  %1220 = vmatprep.subr.bf16.mxu0 0
  %1221 = vmatpush1.bf16.msra.mxu0 0
  %1222 = vmatprep.subr.bf16.mxu0 0
  %1223 = vmatpush1.bf16.msra.mxu0 0
  %1224 = vmatprep.subr.bf16.mxu0 0
  %1225 = vmatpush1.bf16.msra.mxu0 0
  %1226 = vmatprep.subr.bf16.mxu0 0
  %1227 = vmatpush1.bf16.msra.mxu0 0
  %1228 = vmatprep.subr.bf16.mxu0 0
  %1229 = vmatpush1.bf16.msra.mxu0 0
  %1230 = vmatprep.mubr.bf16.mxu0 0
  %1231 = vmatmul.mubr.bf16.gmra.mrb[0].mxu0 %v655
  %v1232 = vpop.f32.mrb[0].mxu0
  %v1233 = vadd.f32 0.0, %v1232
  %v1234 = vpop.f32.mrb[0].mxu0
  %v1235 = vadd.f32 0.0, %v1234
  %v1236 = vpop.f32.mrb[0].mxu0
  %v1237 = vpop.f32.mrb[0].mxu0
  %1238 = vdwg.mxu0
  %1239 = vmatprep.subr.bf16.mxu0 %v461
  %1240 = vmatpush1.bf16.msra.mxu0 %v460
  %1241 = vmatprep.subr.bf16.mxu0 %v465
  %1242 = vmatpush1.bf16.msra.mxu0 %v464
  %1243 = vmatprep.subr.bf16.mxu0 %v469
  %1244 = vmatpush1.bf16.msra.mxu0 %v468
  %1245 = vmatprep.subr.bf16.mxu0 %v473
  %1246 = vmatpush1.bf16.msra.mxu0 %v472
  %1247 = vmatprep.subr.bf16.mxu0 %v477
  %1248 = vmatpush1.bf16.msra.mxu0 %v476
  %1249 = vmatprep.subr.bf16.mxu0 %v481
  %1250 = vmatpush1.bf16.msra.mxu0 %v480
  %1251 = vmatprep.subr.bf16.mxu0 %v485
  %1252 = vmatpush1.bf16.msra.mxu0 %v484
  %1253 = vmatprep.subr.bf16.mxu0 %v489
  %1254 = vmatpush1.bf16.msra.mxu0 %v488
  %1255 = vmatprep.subr.bf16.mxu0 0
  %1256 = vmatpush1.bf16.msra.mxu0 0
  %1257 = vmatprep.subr.bf16.mxu0 0
  %1258 = vmatpush1.bf16.msra.mxu0 0
  %1259 = vmatprep.subr.bf16.mxu0 0
  %1260 = vmatpush1.bf16.msra.mxu0 0
  %1261 = vmatprep.subr.bf16.mxu0 0
  %1262 = vmatpush1.bf16.msra.mxu0 0
  %1263 = vmatprep.subr.bf16.mxu0 0
  %1264 = vmatpush1.bf16.msra.mxu0 0
  %1265 = vmatprep.subr.bf16.mxu0 0
  %1266 = vmatpush1.bf16.msra.mxu0 0
  %1267 = vmatprep.subr.bf16.mxu0 0
  %1268 = vmatpush1.bf16.msra.mxu0 0
  %1269 = vmatprep.subr.bf16.mxu0 0
  %1270 = vmatpush1.bf16.msra.mxu0 0
  %1271 = vmatprep.mubr.bf16.mxu0 0
  %1272 = vmatmul.mubr.bf16.gmra.mrb[0].mxu0 %v655
  %v1273 = vpop.f32.mrb[0].mxu0
  %v1274 = vadd.f32 0.0, %v1273
  %v1275 = vpop.f32.mrb[0].mxu0
  %v1276 = vadd.f32 0.0, %v1275
  %v1277 = vpop.f32.mrb[0].mxu0
  %v1278 = vpop.f32.mrb[0].mxu0
  %1279 = vdwg.mxu0
  %v1280 = vadd.f32 %v1194, %v1233
  %v1281 = vadd.f32 %v1195, %v1235
  %v1282 = vadd.f32 %v1196, %v1274
  %v1283 = vadd.f32 %v1197, %v1276
  %v1284 = vtanh.pop %v1280
  %v1285 = vtanh.pop %v1281
  %v1286 = vtanh.pop %v1282
  %v1287 = vmul.f32 %v1284, 0.5
  %v1288 = vmul.f32 %v1285, 0.5
  %v1289 = vmul.f32 %v1286, 0.5
  %v1290 = vadd.f32 %v1287, 0.5
  %v1291 = vadd.f32 %v1288, 0.5
  %v1292 = vadd.f32 %v1289, 0.5
  %v1293 = vtanh.pop %v1283
  %v1294 = vmul.f32 %v1291, %v620
  %v1295 = vmul.f32 %v1290, %v1293
  %v1296 = vadd.f32 %v1294, %v1295
  %v1297 = vtanh.pop %v1296
  %v1298 = vmul.f32 %v1292, %v1297
  %v1299 = vpack.c.bf16 %v1190, %v1190
  %v1300 = vpack.c.bf16 %v1298, %v1298
  %1301 = vmatprep.subr.bf16.mxu0 %v785
  %1302 = vmatpush1.bf16.msra.mxu0 %v784
  %1303 = vmatprep.subr.bf16.mxu0 %v789
  %1304 = vmatpush1.bf16.msra.mxu0 %v788
  %1305 = vmatprep.subr.bf16.mxu0 %v793
  %1306 = vmatpush1.bf16.msra.mxu0 %v792
  %1307 = vmatprep.subr.bf16.mxu0 %v797
  %1308 = vmatpush1.bf16.msra.mxu0 %v796
  %1309 = vmatprep.subr.bf16.mxu0 %v801
  %1310 = vmatpush1.bf16.msra.mxu0 %v800
  %1311 = vmatprep.subr.bf16.mxu0 %v805
  %1312 = vmatpush1.bf16.msra.mxu0 %v804
  %1313 = vmatprep.subr.bf16.mxu0 %v809
  %1314 = vmatpush1.bf16.msra.mxu0 %v808
  %1315 = vmatprep.subr.bf16.mxu0 %v813
  %1316 = vmatpush1.bf16.msra.mxu0 %v812
  %1317 = vmatprep.subr.bf16.mxu0 0
  %1318 = vmatpush1.bf16.msra.mxu0 0
  %1319 = vmatprep.subr.bf16.mxu0 0
  %1320 = vmatpush1.bf16.msra.mxu0 0
  %1321 = vmatprep.subr.bf16.mxu0 0
  %1322 = vmatpush1.bf16.msra.mxu0 0
  %1323 = vmatprep.subr.bf16.mxu0 0
  %1324 = vmatpush1.bf16.msra.mxu0 0
  %1325 = vmatprep.subr.bf16.mxu0 0
  %1326 = vmatpush1.bf16.msra.mxu0 0
  %1327 = vmatprep.subr.bf16.mxu0 0
  %1328 = vmatpush1.bf16.msra.mxu0 0
  %1329 = vmatprep.subr.bf16.mxu0 0
  %1330 = vmatpush1.bf16.msra.mxu0 0
  %1331 = vmatprep.subr.bf16.mxu0 0
  %1332 = vmatpush1.bf16.msra.mxu0 0
  %1333 = vmatprep.mubr.bf16.mxu0 0
  %1334 = vmatmul.mubr.bf16.gmra.mrb[0].mxu0 %v1300
  %v1335 = vpop.f32.mrb[0].mxu0
  %v1336 = vadd.f32 0.0, %v1335
  %v1337 = vpop.f32.mrb[0].mxu0
  %v1338 = vadd.f32 0.0, %v1337
  %v1339 = vpop.f32.mrb[0].mxu0
  %v1340 = vpop.f32.mrb[0].mxu0
  %1341 = vdwg.mxu0
  %1342 = vmatprep.subr.bf16.mxu0 %v787
  %1343 = vmatpush1.bf16.msra.mxu0 %v786
  %1344 = vmatprep.subr.bf16.mxu0 %v791
  %1345 = vmatpush1.bf16.msra.mxu0 %v790
  %1346 = vmatprep.subr.bf16.mxu0 %v795
  %1347 = vmatpush1.bf16.msra.mxu0 %v794
  %1348 = vmatprep.subr.bf16.mxu0 %v799
  %1349 = vmatpush1.bf16.msra.mxu0 %v798
  %1350 = vmatprep.subr.bf16.mxu0 %v803
  %1351 = vmatpush1.bf16.msra.mxu0 %v802
  %1352 = vmatprep.subr.bf16.mxu0 %v807
  %1353 = vmatpush1.bf16.msra.mxu0 %v806
  %1354 = vmatprep.subr.bf16.mxu0 %v811
  %1355 = vmatpush1.bf16.msra.mxu0 %v810
  %1356 = vmatprep.subr.bf16.mxu0 %v815
  %1357 = vmatpush1.bf16.msra.mxu0 %v814
  %1358 = vmatprep.subr.bf16.mxu0 0
  %1359 = vmatpush1.bf16.msra.mxu0 0
  %1360 = vmatprep.subr.bf16.mxu0 0
  %1361 = vmatpush1.bf16.msra.mxu0 0
  %1362 = vmatprep.subr.bf16.mxu0 0
  %1363 = vmatpush1.bf16.msra.mxu0 0
  %1364 = vmatprep.subr.bf16.mxu0 0
  %1365 = vmatpush1.bf16.msra.mxu0 0
  %1366 = vmatprep.subr.bf16.mxu0 0
  %1367 = vmatpush1.bf16.msra.mxu0 0
  %1368 = vmatprep.subr.bf16.mxu0 0
  %1369 = vmatpush1.bf16.msra.mxu0 0
  %1370 = vmatprep.subr.bf16.mxu0 0
  %1371 = vmatpush1.bf16.msra.mxu0 0
  %1372 = vmatprep.subr.bf16.mxu0 0
  %1373 = vmatpush1.bf16.msra.mxu0 0
  %1374 = vmatprep.mubr.bf16.mxu0 0
  %1375 = vmatmul.mubr.bf16.gmra.mrb[0].mxu0 %v1300
  %v1376 = vpop.f32.mrb[0].mxu0
  %v1377 = vadd.f32 0.0, %v1376
  %v1378 = vpop.f32.mrb[0].mxu0
  %v1379 = vadd.f32 0.0, %v1378
  %v1380 = vpop.f32.mrb[0].mxu0
  %v1381 = vpop.f32.mrb[0].mxu0
  %1382 = vdwg.mxu0
  %1383 = vmatprep.subr.bf16.mxu0 %v1027
  %1384 = vmatpush1.bf16.msra.mxu0 %v1026
  %1385 = vmatprep.subr.bf16.mxu0 %v1031
  %1386 = vmatpush1.bf16.msra.mxu0 %v1030
  %1387 = vmatprep.subr.bf16.mxu0 %v1035
  %1388 = vmatpush1.bf16.msra.mxu0 %v1034
  %1389 = vmatprep.subr.bf16.mxu0 %v1039
  %1390 = vmatpush1.bf16.msra.mxu0 %v1038
  %1391 = vmatprep.subr.bf16.mxu0 %v1043
  %1392 = vmatpush1.bf16.msra.mxu0 %v1042
  %1393 = vmatprep.subr.bf16.mxu0 %v1047
  %1394 = vmatpush1.bf16.msra.mxu0 %v1046
  %1395 = vmatprep.subr.bf16.mxu0 %v1051
  %1396 = vmatpush1.bf16.msra.mxu0 %v1050
  %1397 = vmatprep.subr.bf16.mxu0 %v1055
  %1398 = vmatpush1.bf16.msra.mxu0 %v1054
  %1399 = vmatprep.subr.bf16.mxu0 0
  %1400 = vmatpush1.bf16.msra.mxu0 0
  %1401 = vmatprep.subr.bf16.mxu0 0
  %1402 = vmatpush1.bf16.msra.mxu0 0
  %1403 = vmatprep.subr.bf16.mxu0 0
  %1404 = vmatpush1.bf16.msra.mxu0 0
  %1405 = vmatprep.subr.bf16.mxu0 0
  %1406 = vmatpush1.bf16.msra.mxu0 0
  %1407 = vmatprep.subr.bf16.mxu0 0
  %1408 = vmatpush1.bf16.msra.mxu0 0
  %1409 = vmatprep.subr.bf16.mxu0 0
  %1410 = vmatpush1.bf16.msra.mxu0 0
  %1411 = vmatprep.subr.bf16.mxu0 0
  %1412 = vmatpush1.bf16.msra.mxu0 0
  %1413 = vmatprep.subr.bf16.mxu0 0
  %1414 = vmatpush1.bf16.msra.mxu0 0
  %1415 = vmatprep.mubr.bf16.mxu0 0
  %1416 = vmatmul.mubr.bf16.gmra.mrb[0].mxu0 %v1299
  %v1417 = vpop.f32.mrb[0].mxu0
  %v1418 = vadd.f32 %v1336, %v1417
  %v1419 = vpop.f32.mrb[0].mxu0
  %v1420 = vadd.f32 %v1338, %v1419
  %v1421 = vpop.f32.mrb[0].mxu0
  %v1422 = vpop.f32.mrb[0].mxu0
  %1423 = vdwg.mxu0
  %1424 = vmatprep.subr.bf16.mxu0 %v1029
  %1425 = vmatpush1.bf16.msra.mxu0 %v1028
  %1426 = vmatprep.subr.bf16.mxu0 %v1033
  %1427 = vmatpush1.bf16.msra.mxu0 %v1032
  %1428 = vmatprep.subr.bf16.mxu0 %v1037
  %1429 = vmatpush1.bf16.msra.mxu0 %v1036
  %1430 = vmatprep.subr.bf16.mxu0 %v1041
  %1431 = vmatpush1.bf16.msra.mxu0 %v1040
  %1432 = vmatprep.subr.bf16.mxu0 %v1045
  %1433 = vmatpush1.bf16.msra.mxu0 %v1044
  %1434 = vmatprep.subr.bf16.mxu0 %v1049
  %1435 = vmatpush1.bf16.msra.mxu0 %v1048
  %1436 = vmatprep.subr.bf16.mxu0 %v1053
  %1437 = vmatpush1.bf16.msra.mxu0 %v1052
  %1438 = vmatprep.subr.bf16.mxu0 %v1057
  %1439 = vmatpush1.bf16.msra.mxu0 %v1056
  %1440 = vmatprep.subr.bf16.mxu0 0
  %1441 = vmatpush1.bf16.msra.mxu0 0
  %1442 = vmatprep.subr.bf16.mxu0 0
  %1443 = vmatpush1.bf16.msra.mxu0 0
  %1444 = vmatprep.subr.bf16.mxu0 0
  %1445 = vmatpush1.bf16.msra.mxu0 0
  %1446 = vmatprep.subr.bf16.mxu0 0
  %1447 = vmatpush1.bf16.msra.mxu0 0
  %1448 = vmatprep.subr.bf16.mxu0 0
  %1449 = vmatpush1.bf16.msra.mxu0 0
  %1450 = vmatprep.subr.bf16.mxu0 0
  %1451 = vmatpush1.bf16.msra.mxu0 0
  %1452 = vmatprep.subr.bf16.mxu0 0
  %1453 = vmatpush1.bf16.msra.mxu0 0
  %1454 = vmatprep.subr.bf16.mxu0 0
  %1455 = vmatpush1.bf16.msra.mxu0 0
  %1456 = vmatprep.mubr.bf16.mxu0 0
  %1457 = vmatmul.mubr.bf16.gmra.mrb[0].mxu0 %v1299
  %v1458 = vpop.f32.mrb[0].mxu0
  %v1459 = vadd.f32 %v1377, %v1458
  %v1460 = vpop.f32.mrb[0].mxu0
  %v1461 = vadd.f32 %v1379, %v1460
  %v1462 = vpop.f32.mrb[0].mxu0
  %v1463 = vpop.f32.mrb[0].mxu0
  %1464 = vdwg.mxu0
  %v1465 = vadd.f32 %v1418, %v306
  %v1466 = vadd.f32 %v1420, %v310
  %v1467 = vadd.f32 %v1459, %v314
  %v1468 = vadd.f32 %v1461, %v318
  %v1469 = vtanh.pop %v1465
  %v1470 = vtanh.pop %v1466
  %v1471 = vtanh.pop %v1467
  %v1472 = vmul.f32 %v1469, 0.5
  %v1473 = vmul.f32 %v1470, 0.5
  %v1474 = vmul.f32 %v1471, 0.5
  %v1475 = vadd.f32 %v1472, 0.5
  %v1476 = vadd.f32 %v1473, 0.5
  %v1477 = vadd.f32 %v1474, 0.5
  %v1478 = vtanh.pop %v1468
  %v1479 = vmul.f32 %v1476, %v1188
  %v1480 = vmul.f32 %v1475, %v1478
  %v1481 = vadd.f32 %v1479, %v1480
  %v1482 = vtanh.pop %v1481
  %v1483 = vmul.f32 %v1477, %v1482
  %s1484 = smul.u32 2, 4
  %s1485 = smul.addr %s1484, 8
  %s1486 = scalar_lea.vmem [#allocation2], %s1485
  %v1487 = vld [vmem:[%s1486] sm:$0xff]
  %v1488 = vld [vmem:[%s1486 + $0x8] sm:$0xff]
  %v1489 = vld [vmem:[%s1486 + $0x10] sm:$0xff]
  %v1490 = vld [vmem:[%s1486 + $0x18] sm:$0xff]
  %1491 = vmatprep.subr.bf16.mxu0 %v459
  %1492 = vmatpush1.bf16.msra.mxu0 %v458
  %1493 = vmatprep.subr.bf16.mxu0 %v463
  %1494 = vmatpush1.bf16.msra.mxu0 %v462
  %1495 = vmatprep.subr.bf16.mxu0 %v467
  %1496 = vmatpush1.bf16.msra.mxu0 %v466
  %1497 = vmatprep.subr.bf16.mxu0 %v471
  %1498 = vmatpush1.bf16.msra.mxu0 %v470
  %1499 = vmatprep.subr.bf16.mxu0 %v475
  %1500 = vmatpush1.bf16.msra.mxu0 %v474
  %1501 = vmatprep.subr.bf16.mxu0 %v479
  %1502 = vmatpush1.bf16.msra.mxu0 %v478
  %1503 = vmatprep.subr.bf16.mxu0 %v483
  %1504 = vmatpush1.bf16.msra.mxu0 %v482
  %1505 = vmatprep.subr.bf16.mxu0 %v487
  %1506 = vmatpush1.bf16.msra.mxu0 %v486
  %1507 = vmatprep.subr.bf16.mxu0 0
  %1508 = vmatpush1.bf16.msra.mxu0 0
  %1509 = vmatprep.subr.bf16.mxu0 0
  %1510 = vmatpush1.bf16.msra.mxu0 0
  %1511 = vmatprep.subr.bf16.mxu0 0
  %1512 = vmatpush1.bf16.msra.mxu0 0
  %1513 = vmatprep.subr.bf16.mxu0 0
  %1514 = vmatpush1.bf16.msra.mxu0 0
  %1515 = vmatprep.subr.bf16.mxu0 0
  %1516 = vmatpush1.bf16.msra.mxu0 0
  %1517 = vmatprep.subr.bf16.mxu0 0
  %1518 = vmatpush1.bf16.msra.mxu0 0
  %1519 = vmatprep.subr.bf16.mxu0 0
  %1520 = vmatpush1.bf16.msra.mxu0 0
  %1521 = vmatprep.subr.bf16.mxu0 0
  %1522 = vmatpush1.bf16.msra.mxu0 0
  %1523 = vmatprep.mubr.bf16.mxu0 0
  %1524 = vmatmul.mubr.bf16.gmra.mrb[0].mxu0 %v1300
  %v1525 = vpop.f32.mrb[0].mxu0
  %v1526 = vadd.f32 0.0, %v1525
  %v1527 = vpop.f32.mrb[0].mxu0
  %v1528 = vadd.f32 0.0, %v1527
  %v1529 = vpop.f32.mrb[0].mxu0
  %v1530 = vpop.f32.mrb[0].mxu0
  %1531 = vdwg.mxu0
  %1532 = vmatprep.subr.bf16.mxu0 %v461
  %1533 = vmatpush1.bf16.msra.mxu0 %v460
  %1534 = vmatprep.subr.bf16.mxu0 %v465
  %1535 = vmatpush1.bf16.msra.mxu0 %v464
  %1536 = vmatprep.subr.bf16.mxu0 %v469
  %1537 = vmatpush1.bf16.msra.mxu0 %v468
  %1538 = vmatprep.subr.bf16.mxu0 %v473
  %1539 = vmatpush1.bf16.msra.mxu0 %v472
  %1540 = vmatprep.subr.bf16.mxu0 %v477
  %1541 = vmatpush1.bf16.msra.mxu0 %v476
  %1542 = vmatprep.subr.bf16.mxu0 %v481
  %1543 = vmatpush1.bf16.msra.mxu0 %v480
  %1544 = vmatprep.subr.bf16.mxu0 %v485
  %1545 = vmatpush1.bf16.msra.mxu0 %v484
  %1546 = vmatprep.subr.bf16.mxu0 %v489
  %1547 = vmatpush1.bf16.msra.mxu0 %v488
  %1548 = vmatprep.subr.bf16.mxu0 0
  %1549 = vmatpush1.bf16.msra.mxu0 0
  %1550 = vmatprep.subr.bf16.mxu0 0
  %1551 = vmatpush1.bf16.msra.mxu0 0
  %1552 = vmatprep.subr.bf16.mxu0 0
  %1553 = vmatpush1.bf16.msra.mxu0 0
  %1554 = vmatprep.subr.bf16.mxu0 0
  %1555 = vmatpush1.bf16.msra.mxu0 0
  %1556 = vmatprep.subr.bf16.mxu0 0
  %1557 = vmatpush1.bf16.msra.mxu0 0
  %1558 = vmatprep.subr.bf16.mxu0 0
  %1559 = vmatpush1.bf16.msra.mxu0 0
  %1560 = vmatprep.subr.bf16.mxu0 0
  %1561 = vmatpush1.bf16.msra.mxu0 0
  %1562 = vmatprep.subr.bf16.mxu0 0
  %1563 = vmatpush1.bf16.msra.mxu0 0
  %1564 = vmatprep.mubr.bf16.mxu0 0
  %1565 = vmatmul.mubr.bf16.gmra.mrb[0].mxu0 %v1300
  %v1566 = vpop.f32.mrb[0].mxu0
  %v1567 = vadd.f32 0.0, %v1566
  %v1568 = vpop.f32.mrb[0].mxu0
  %v1569 = vadd.f32 0.0, %v1568
  %v1570 = vpop.f32.mrb[0].mxu0
  %v1571 = vpop.f32.mrb[0].mxu0
  %1572 = vdwg.mxu0
  %v1573 = vadd.f32 %v1487, %v1526
  %v1574 = vadd.f32 %v1488, %v1528
  %v1575 = vadd.f32 %v1489, %v1567
  %v1576 = vadd.f32 %v1490, %v1569
  %v1577 = vtanh.pop %v1573
  %v1578 = vtanh.pop %v1574
  %v1579 = vtanh.pop %v1575
  %v1580 = vmul.f32 %v1577, 0.5
  %v1581 = vmul.f32 %v1578, 0.5
  %v1582 = vmul.f32 %v1579, 0.5
  %v1583 = vadd.f32 %v1580, 0.5
  %v1584 = vadd.f32 %v1581, 0.5
  %v1585 = vadd.f32 %v1582, 0.5
  %v1586 = vtanh.pop %v1576
  %v1587 = vmul.f32 %v1584, %v1296
  %v1588 = vmul.f32 %v1583, %v1586
  %v1589 = vadd.f32 %v1587, %v1588
  %v1590 = vtanh.pop %v1589
  %v1591 = vmul.f32 %v1585, %v1590
  %v1592 = vpack.c.bf16 %v1483, %v1483
  %v1593 = vpack.c.bf16 %v1591, %v1591
  %1594 = vmatprep.subr.bf16.mxu0 %v785
  %1595 = vmatpush1.bf16.msra.mxu0 %v784
  %1596 = vmatprep.subr.bf16.mxu0 %v789
  %1597 = vmatpush1.bf16.msra.mxu0 %v788
  %1598 = vmatprep.subr.bf16.mxu0 %v793
  %1599 = vmatpush1.bf16.msra.mxu0 %v792
  %1600 = vmatprep.subr.bf16.mxu0 %v797
  %1601 = vmatpush1.bf16.msra.mxu0 %v796
  %1602 = vmatprep.subr.bf16.mxu0 %v801
  %1603 = vmatpush1.bf16.msra.mxu0 %v800
  %1604 = vmatprep.subr.bf16.mxu0 %v805
  %1605 = vmatpush1.bf16.msra.mxu0 %v804
  %1606 = vmatprep.subr.bf16.mxu0 %v809
  %1607 = vmatpush1.bf16.msra.mxu0 %v808
  %1608 = vmatprep.subr.bf16.mxu0 %v813
  %1609 = vmatpush1.bf16.msra.mxu0 %v812
  %1610 = vmatprep.subr.bf16.mxu0 0
  %1611 = vmatpush1.bf16.msra.mxu0 0
  %1612 = vmatprep.subr.bf16.mxu0 0
  %1613 = vmatpush1.bf16.msra.mxu0 0
  %1614 = vmatprep.subr.bf16.mxu0 0
  %1615 = vmatpush1.bf16.msra.mxu0 0
  %1616 = vmatprep.subr.bf16.mxu0 0
  %1617 = vmatpush1.bf16.msra.mxu0 0
  %1618 = vmatprep.subr.bf16.mxu0 0
  %1619 = vmatpush1.bf16.msra.mxu0 0
  %1620 = vmatprep.subr.bf16.mxu0 0
  %1621 = vmatpush1.bf16.msra.mxu0 0
  %1622 = vmatprep.subr.bf16.mxu0 0
  %1623 = vmatpush1.bf16.msra.mxu0 0
  %1624 = vmatprep.subr.bf16.mxu0 0
  %1625 = vmatpush1.bf16.msra.mxu0 0
  %1626 = vmatprep.mubr.bf16.mxu0 0
  %1627 = vmatmul.mubr.bf16.gmra.mrb[0].mxu0 %v1593
  %v1628 = vpop.f32.mrb[0].mxu0
  %v1629 = vadd.f32 0.0, %v1628
  %v1630 = vpop.f32.mrb[0].mxu0
  %v1631 = vadd.f32 0.0, %v1630
  %v1632 = vpop.f32.mrb[0].mxu0
  %v1633 = vpop.f32.mrb[0].mxu0
  %1634 = vdwg.mxu0
  %1635 = vmatprep.subr.bf16.mxu0 %v787
  %1636 = vmatpush1.bf16.msra.mxu0 %v786
  %1637 = vmatprep.subr.bf16.mxu0 %v791
  %1638 = vmatpush1.bf16.msra.mxu0 %v790
  %1639 = vmatprep.subr.bf16.mxu0 %v795
  %1640 = vmatpush1.bf16.msra.mxu0 %v794
  %1641 = vmatprep.subr.bf16.mxu0 %v799
  %1642 = vmatpush1.bf16.msra.mxu0 %v798
  %1643 = vmatprep.subr.bf16.mxu0 %v803
  %1644 = vmatpush1.bf16.msra.mxu0 %v802
  %1645 = vmatprep.subr.bf16.mxu0 %v807
  %1646 = vmatpush1.bf16.msra.mxu0 %v806
  %1647 = vmatprep.subr.bf16.mxu0 %v811
  %1648 = vmatpush1.bf16.msra.mxu0 %v810
  %1649 = vmatprep.subr.bf16.mxu0 %v815
  %1650 = vmatpush1.bf16.msra.mxu0 %v814
  %1651 = vmatprep.subr.bf16.mxu0 0
  %1652 = vmatpush1.bf16.msra.mxu0 0
  %1653 = vmatprep.subr.bf16.mxu0 0
  %1654 = vmatpush1.bf16.msra.mxu0 0
  %1655 = vmatprep.subr.bf16.mxu0 0
  %1656 = vmatpush1.bf16.msra.mxu0 0
  %1657 = vmatprep.subr.bf16.mxu0 0
  %1658 = vmatpush1.bf16.msra.mxu0 0
  %1659 = vmatprep.subr.bf16.mxu0 0
  %1660 = vmatpush1.bf16.msra.mxu0 0
  %1661 = vmatprep.subr.bf16.mxu0 0
  %1662 = vmatpush1.bf16.msra.mxu0 0
  %1663 = vmatprep.subr.bf16.mxu0 0
  %1664 = vmatpush1.bf16.msra.mxu0 0
  %1665 = vmatprep.subr.bf16.mxu0 0
  %1666 = vmatpush1.bf16.msra.mxu0 0
  %1667 = vmatprep.mubr.bf16.mxu0 0
  %1668 = vmatmul.mubr.bf16.gmra.mrb[0].mxu0 %v1593
  %v1669 = vpop.f32.mrb[0].mxu0
  %v1670 = vadd.f32 0.0, %v1669
  %v1671 = vpop.f32.mrb[0].mxu0
  %v1672 = vadd.f32 0.0, %v1671
  %v1673 = vpop.f32.mrb[0].mxu0
  %v1674 = vpop.f32.mrb[0].mxu0
  %1675 = vdwg.mxu0
  %1676 = vmatprep.subr.bf16.mxu0 %v1027
  %1677 = vmatpush1.bf16.msra.mxu0 %v1026
  %1678 = vmatprep.subr.bf16.mxu0 %v1031
  %1679 = vmatpush1.bf16.msra.mxu0 %v1030
  %1680 = vmatprep.subr.bf16.mxu0 %v1035
  %1681 = vmatpush1.bf16.msra.mxu0 %v1034
  %1682 = vmatprep.subr.bf16.mxu0 %v1039
  %1683 = vmatpush1.bf16.msra.mxu0 %v1038
  %1684 = vmatprep.subr.bf16.mxu0 %v1043
  %1685 = vmatpush1.bf16.msra.mxu0 %v1042
  %1686 = vmatprep.subr.bf16.mxu0 %v1047
  %1687 = vmatpush1.bf16.msra.mxu0 %v1046
  %1688 = vmatprep.subr.bf16.mxu0 %v1051
  %1689 = vmatpush1.bf16.msra.mxu0 %v1050
  %1690 = vmatprep.subr.bf16.mxu0 %v1055
  %1691 = vmatpush1.bf16.msra.mxu0 %v1054
  %1692 = vmatprep.subr.bf16.mxu0 0
  %1693 = vmatpush1.bf16.msra.mxu0 0
  %1694 = vmatprep.subr.bf16.mxu0 0
  %1695 = vmatpush1.bf16.msra.mxu0 0
  %1696 = vmatprep.subr.bf16.mxu0 0
  %1697 = vmatpush1.bf16.msra.mxu0 0
  %1698 = vmatprep.subr.bf16.mxu0 0
  %1699 = vmatpush1.bf16.msra.mxu0 0
  %1700 = vmatprep.subr.bf16.mxu0 0
  %1701 = vmatpush1.bf16.msra.mxu0 0
  %1702 = vmatprep.subr.bf16.mxu0 0
  %1703 = vmatpush1.bf16.msra.mxu0 0
  %1704 = vmatprep.subr.bf16.mxu0 0
  %1705 = vmatpush1.bf16.msra.mxu0 0
  %1706 = vmatprep.subr.bf16.mxu0 0
  %1707 = vmatpush1.bf16.msra.mxu0 0
  %1708 = vmatprep.mubr.bf16.mxu0 0
  %1709 = vmatmul.mubr.bf16.gmra.mrb[0].mxu0 %v1592
  %v1710 = vpop.f32.mrb[0].mxu0
  %v1711 = vadd.f32 %v1629, %v1710
  %v1712 = vpop.f32.mrb[0].mxu0
  %v1713 = vadd.f32 %v1631, %v1712
  %v1714 = vpop.f32.mrb[0].mxu0
  %v1715 = vpop.f32.mrb[0].mxu0
  %1716 = vdwg.mxu0
  %1717 = vmatprep.subr.bf16.mxu0 %v1029
  %1718 = vmatpush1.bf16.msra.mxu0 %v1028
  %1719 = vmatprep.subr.bf16.mxu0 %v1033
  %1720 = vmatpush1.bf16.msra.mxu0 %v1032
  %1721 = vmatprep.subr.bf16.mxu0 %v1037
  %1722 = vmatpush1.bf16.msra.mxu0 %v1036
  %1723 = vmatprep.subr.bf16.mxu0 %v1041
  %1724 = vmatpush1.bf16.msra.mxu0 %v1040
  %1725 = vmatprep.subr.bf16.mxu0 %v1045
  %1726 = vmatpush1.bf16.msra.mxu0 %v1044
  %1727 = vmatprep.subr.bf16.mxu0 %v1049
  %1728 = vmatpush1.bf16.msra.mxu0 %v1048
  %1729 = vmatprep.subr.bf16.mxu0 %v1053
  %1730 = vmatpush1.bf16.msra.mxu0 %v1052
  %1731 = vmatprep.subr.bf16.mxu0 %v1057
  %1732 = vmatpush1.bf16.msra.mxu0 %v1056
  %1733 = vmatprep.subr.bf16.mxu0 0
  %1734 = vmatpush1.bf16.msra.mxu0 0
  %1735 = vmatprep.subr.bf16.mxu0 0
  %1736 = vmatpush1.bf16.msra.mxu0 0
  %1737 = vmatprep.subr.bf16.mxu0 0
  %1738 = vmatpush1.bf16.msra.mxu0 0
  %1739 = vmatprep.subr.bf16.mxu0 0
  %1740 = vmatpush1.bf16.msra.mxu0 0
  %1741 = vmatprep.subr.bf16.mxu0 0
  %1742 = vmatpush1.bf16.msra.mxu0 0
  %1743 = vmatprep.subr.bf16.mxu0 0
  %1744 = vmatpush1.bf16.msra.mxu0 0
  %1745 = vmatprep.subr.bf16.mxu0 0
  %1746 = vmatpush1.bf16.msra.mxu0 0
  %1747 = vmatprep.subr.bf16.mxu0 0
  %1748 = vmatpush1.bf16.msra.mxu0 0
  %1749 = vmatprep.mubr.bf16.mxu0 0
  %1750 = vmatmul.mubr.bf16.gmra.mrb[0].mxu0 %v1592
  %v1751 = vpop.f32.mrb[0].mxu0
  %v1752 = vadd.f32 %v1670, %v1751
  %v1753 = vpop.f32.mrb[0].mxu0
  %v1754 = vadd.f32 %v1672, %v1753
  %v1755 = vpop.f32.mrb[0].mxu0
  %v1756 = vpop.f32.mrb[0].mxu0
  %1757 = vdwg.mxu0
  %v1758 = vadd.f32 %v1711, %v306
  %v1759 = vadd.f32 %v1713, %v310
  %v1760 = vadd.f32 %v1752, %v314
  %v1761 = vadd.f32 %v1754, %v318
  %v1762 = vtanh.pop %v1758
  %v1763 = vtanh.pop %v1759
  %v1764 = vtanh.pop %v1760
  %v1765 = vmul.f32 %v1762, 0.5
  %v1766 = vmul.f32 %v1763, 0.5
  %v1767 = vmul.f32 %v1764, 0.5
  %v1768 = vadd.f32 %v1765, 0.5
  %v1769 = vadd.f32 %v1766, 0.5
  %v1770 = vadd.f32 %v1767, 0.5
  %v1771 = vtanh.pop %v1761
  %v1772 = vmul.f32 %v1769, %v1481
  %v1773 = vmul.f32 %v1768, %v1771
  %v1774 = vadd.f32 %v1772, %v1773
  %v1775 = vtanh.pop %v1774
  %v1776 = vmul.f32 %v1770, %v1775
  %s1777 = smul.u32 3, 4
  %s1778 = smul.addr %s1777, 8
  %s1779 = scalar_lea.vmem [#allocation2], %s1778
  %v1780 = vld [vmem:[%s1779] sm:$0xff]
  %v1781 = vld [vmem:[%s1779 + $0x8] sm:$0xff]
  %v1782 = vld [vmem:[%s1779 + $0x10] sm:$0xff]
  %v1783 = vld [vmem:[%s1779 + $0x18] sm:$0xff]
  %1784 = vmatprep.subr.bf16.mxu0 %v459
  %1785 = vmatpush1.bf16.msra.mxu0 %v458
  %1786 = vmatprep.subr.bf16.mxu0 %v463
  %1787 = vmatpush1.bf16.msra.mxu0 %v462
  %1788 = vmatprep.subr.bf16.mxu0 %v467
  %1789 = vmatpush1.bf16.msra.mxu0 %v466
  %1790 = vmatprep.subr.bf16.mxu0 %v471
  %1791 = vmatpush1.bf16.msra.mxu0 %v470
  %1792 = vmatprep.subr.bf16.mxu0 %v475
  %1793 = vmatpush1.bf16.msra.mxu0 %v474
  %1794 = vmatprep.subr.bf16.mxu0 %v479
  %1795 = vmatpush1.bf16.msra.mxu0 %v478
  %1796 = vmatprep.subr.bf16.mxu0 %v483
  %1797 = vmatpush1.bf16.msra.mxu0 %v482
  %1798 = vmatprep.subr.bf16.mxu0 %v487
  %1799 = vmatpush1.bf16.msra.mxu0 %v486
  %1800 = vmatprep.subr.bf16.mxu0 0
  %1801 = vmatpush1.bf16.msra.mxu0 0
  %1802 = vmatprep.subr.bf16.mxu0 0
  %1803 = vmatpush1.bf16.msra.mxu0 0
  %1804 = vmatprep.subr.bf16.mxu0 0
  %1805 = vmatpush1.bf16.msra.mxu0 0
  %1806 = vmatprep.subr.bf16.mxu0 0
  %1807 = vmatpush1.bf16.msra.mxu0 0
  %1808 = vmatprep.subr.bf16.mxu0 0
  %1809 = vmatpush1.bf16.msra.mxu0 0
  %1810 = vmatprep.subr.bf16.mxu0 0
  %1811 = vmatpush1.bf16.msra.mxu0 0
  %1812 = vmatprep.subr.bf16.mxu0 0
  %1813 = vmatpush1.bf16.msra.mxu0 0
  %1814 = vmatprep.subr.bf16.mxu0 0
  %1815 = vmatpush1.bf16.msra.mxu0 0
  %1816 = vmatprep.mubr.bf16.mxu0 0
  %1817 = vmatmul.mubr.bf16.gmra.mrb[0].mxu0 %v1593
  %v1818 = vpop.f32.mrb[0].mxu0
  %v1819 = vadd.f32 0.0, %v1818
  %v1820 = vpop.f32.mrb[0].mxu0
  %v1821 = vadd.f32 0.0, %v1820
  %v1822 = vpop.f32.mrb[0].mxu0
  %v1823 = vpop.f32.mrb[0].mxu0
  %1824 = vdwg.mxu0
  %1825 = vmatprep.subr.bf16.mxu0 %v461
  %1826 = vmatpush1.bf16.msra.mxu0 %v460
  %1827 = vmatprep.subr.bf16.mxu0 %v465
  %1828 = vmatpush1.bf16.msra.mxu0 %v464
  %1829 = vmatprep.subr.bf16.mxu0 %v469
  %1830 = vmatpush1.bf16.msra.mxu0 %v468
  %1831 = vmatprep.subr.bf16.mxu0 %v473
  %1832 = vmatpush1.bf16.msra.mxu0 %v472
  %1833 = vmatprep.subr.bf16.mxu0 %v477
  %1834 = vmatpush1.bf16.msra.mxu0 %v476
  %1835 = vmatprep.subr.bf16.mxu0 %v481
  %1836 = vmatpush1.bf16.msra.mxu0 %v480
  %1837 = vmatprep.subr.bf16.mxu0 %v485
  %1838 = vmatpush1.bf16.msra.mxu0 %v484
  %1839 = vmatprep.subr.bf16.mxu0 %v489
  %1840 = vmatpush1.bf16.msra.mxu0 %v488
  %1841 = vmatprep.subr.bf16.mxu0 0
  %1842 = vmatpush1.bf16.msra.mxu0 0
  %1843 = vmatprep.subr.bf16.mxu0 0
  %1844 = vmatpush1.bf16.msra.mxu0 0
  %1845 = vmatprep.subr.bf16.mxu0 0
  %1846 = vmatpush1.bf16.msra.mxu0 0
  %1847 = vmatprep.subr.bf16.mxu0 0
  %1848 = vmatpush1.bf16.msra.mxu0 0
  %1849 = vmatprep.subr.bf16.mxu0 0
  %1850 = vmatpush1.bf16.msra.mxu0 0
  %1851 = vmatprep.subr.bf16.mxu0 0
  %1852 = vmatpush1.bf16.msra.mxu0 0
  %1853 = vmatprep.subr.bf16.mxu0 0
  %1854 = vmatpush1.bf16.msra.mxu0 0
  %1855 = vmatprep.subr.bf16.mxu0 0
  %1856 = vmatpush1.bf16.msra.mxu0 0
  %1857 = vmatprep.mubr.bf16.mxu0 0
  %1858 = vmatmul.mubr.bf16.gmra.mrb[0].mxu0 %v1593
  %v1859 = vpop.f32.mrb[0].mxu0
  %v1860 = vadd.f32 0.0, %v1859
  %v1861 = vpop.f32.mrb[0].mxu0
  %v1862 = vadd.f32 0.0, %v1861
  %v1863 = vpop.f32.mrb[0].mxu0
  %v1864 = vpop.f32.mrb[0].mxu0
  %1865 = vdwg.mxu0
  %v1866 = vadd.f32 %v1780, %v1819
  %v1867 = vadd.f32 %v1781, %v1821
  %v1868 = vadd.f32 %v1782, %v1860
  %v1869 = vadd.f32 %v1783, %v1862
  %v1870 = vtanh.pop %v1866
  %v1871 = vtanh.pop %v1867
  %v1872 = vtanh.pop %v1868
  %v1873 = vmul.f32 %v1870, 0.5
  %v1874 = vmul.f32 %v1871, 0.5
  %v1875 = vmul.f32 %v1872, 0.5
  %v1876 = vadd.f32 %v1873, 0.5
  %v1877 = vadd.f32 %v1874, 0.5
  %v1878 = vadd.f32 %v1875, 0.5
  %v1879 = vtanh.pop %v1869
  %v1880 = vmul.f32 %v1877, %v1589
  %v1881 = vmul.f32 %v1876, %v1879
  %v1882 = vadd.f32 %v1880, %v1881
  %v1883 = vtanh.pop %v1882
  %v1884 = vmul.f32 %v1878, %v1883
  %v1885 = vpack.c.bf16 %v1776, %v1776
  %v1886 = vpack.c.bf16 %v1884, %v1884
  %1887 = vmatprep.subr.bf16.mxu0 %v785
  %1888 = vmatpush1.bf16.msra.mxu0 %v784
  %1889 = vmatprep.subr.bf16.mxu0 %v789
  %1890 = vmatpush1.bf16.msra.mxu0 %v788
  %1891 = vmatprep.subr.bf16.mxu0 %v793
  %1892 = vmatpush1.bf16.msra.mxu0 %v792
  %1893 = vmatprep.subr.bf16.mxu0 %v797
  %1894 = vmatpush1.bf16.msra.mxu0 %v796
  %1895 = vmatprep.subr.bf16.mxu0 %v801
  %1896 = vmatpush1.bf16.msra.mxu0 %v800
  %1897 = vmatprep.subr.bf16.mxu0 %v805
  %1898 = vmatpush1.bf16.msra.mxu0 %v804
  %1899 = vmatprep.subr.bf16.mxu0 %v809
  %1900 = vmatpush1.bf16.msra.mxu0 %v808
  %1901 = vmatprep.subr.bf16.mxu0 %v813
  %1902 = vmatpush1.bf16.msra.mxu0 %v812
  %1903 = vmatprep.subr.bf16.mxu0 0
  %1904 = vmatpush1.bf16.msra.mxu0 0
  %1905 = vmatprep.subr.bf16.mxu0 0
  %1906 = vmatpush1.bf16.msra.mxu0 0
  %1907 = vmatprep.subr.bf16.mxu0 0
  %1908 = vmatpush1.bf16.msra.mxu0 0
  %1909 = vmatprep.subr.bf16.mxu0 0
  %1910 = vmatpush1.bf16.msra.mxu0 0
  %1911 = vmatprep.subr.bf16.mxu0 0
  %1912 = vmatpush1.bf16.msra.mxu0 0
  %1913 = vmatprep.subr.bf16.mxu0 0
  %1914 = vmatpush1.bf16.msra.mxu0 0
  %1915 = vmatprep.subr.bf16.mxu0 0
  %1916 = vmatpush1.bf16.msra.mxu0 0
  %1917 = vmatprep.subr.bf16.mxu0 0
  %1918 = vmatpush1.bf16.msra.mxu0 0
  %1919 = vmatprep.mubr.bf16.mxu0 0
  %1920 = vmatmul.mubr.bf16.gmra.mrb[0].mxu0 %v1886
  %v1921 = vpop.f32.mrb[0].mxu0
  %v1922 = vadd.f32 0.0, %v1921
  %v1923 = vpop.f32.mrb[0].mxu0
  %v1924 = vadd.f32 0.0, %v1923
  %v1925 = vpop.f32.mrb[0].mxu0
  %v1926 = vpop.f32.mrb[0].mxu0
  %1927 = vdwg.mxu0
  %1928 = vmatprep.subr.bf16.mxu0 %v787
  %1929 = vmatpush1.bf16.msra.mxu0 %v786
  %1930 = vmatprep.subr.bf16.mxu0 %v791
  %1931 = vmatpush1.bf16.msra.mxu0 %v790
  %1932 = vmatprep.subr.bf16.mxu0 %v795
  %1933 = vmatpush1.bf16.msra.mxu0 %v794
  %1934 = vmatprep.subr.bf16.mxu0 %v799
  %1935 = vmatpush1.bf16.msra.mxu0 %v798
  %1936 = vmatprep.subr.bf16.mxu0 %v803
  %1937 = vmatpush1.bf16.msra.mxu0 %v802
  %1938 = vmatprep.subr.bf16.mxu0 %v807
  %1939 = vmatpush1.bf16.msra.mxu0 %v806
  %1940 = vmatprep.subr.bf16.mxu0 %v811
  %1941 = vmatpush1.bf16.msra.mxu0 %v810
  %1942 = vmatprep.subr.bf16.mxu0 %v815
  %1943 = vmatpush1.bf16.msra.mxu0 %v814
  %1944 = vmatprep.subr.bf16.mxu0 0
  %1945 = vmatpush1.bf16.msra.mxu0 0
  %1946 = vmatprep.subr.bf16.mxu0 0
  %1947 = vmatpush1.bf16.msra.mxu0 0
  %1948 = vmatprep.subr.bf16.mxu0 0
  %1949 = vmatpush1.bf16.msra.mxu0 0
  %1950 = vmatprep.subr.bf16.mxu0 0
  %1951 = vmatpush1.bf16.msra.mxu0 0
  %1952 = vmatprep.subr.bf16.mxu0 0
  %1953 = vmatpush1.bf16.msra.mxu0 0
  %1954 = vmatprep.subr.bf16.mxu0 0
  %1955 = vmatpush1.bf16.msra.mxu0 0
  %1956 = vmatprep.subr.bf16.mxu0 0
  %1957 = vmatpush1.bf16.msra.mxu0 0
  %1958 = vmatprep.subr.bf16.mxu0 0
  %1959 = vmatpush1.bf16.msra.mxu0 0
  %1960 = vmatprep.mubr.bf16.mxu0 0
  %1961 = vmatmul.mubr.bf16.gmra.mrb[0].mxu0 %v1886
  %v1962 = vpop.f32.mrb[0].mxu0
  %v1963 = vadd.f32 0.0, %v1962
  %v1964 = vpop.f32.mrb[0].mxu0
  %v1965 = vadd.f32 0.0, %v1964
  %v1966 = vpop.f32.mrb[0].mxu0
  %v1967 = vpop.f32.mrb[0].mxu0
  %1968 = vdwg.mxu0
  %1969 = vmatprep.subr.bf16.mxu0 %v1027
  %1970 = vmatpush1.bf16.msra.mxu0 %v1026
  %1971 = vmatprep.subr.bf16.mxu0 %v1031
  %1972 = vmatpush1.bf16.msra.mxu0 %v1030
  %1973 = vmatprep.subr.bf16.mxu0 %v1035
  %1974 = vmatpush1.bf16.msra.mxu0 %v1034
  %1975 = vmatprep.subr.bf16.mxu0 %v1039
  %1976 = vmatpush1.bf16.msra.mxu0 %v1038
  %1977 = vmatprep.subr.bf16.mxu0 %v1043
  %1978 = vmatpush1.bf16.msra.mxu0 %v1042
  %1979 = vmatprep.subr.bf16.mxu0 %v1047
  %1980 = vmatpush1.bf16.msra.mxu0 %v1046
  %1981 = vmatprep.subr.bf16.mxu0 %v1051
  %1982 = vmatpush1.bf16.msra.mxu0 %v1050
  %1983 = vmatprep.subr.bf16.mxu0 %v1055
  %1984 = vmatpush1.bf16.msra.mxu0 %v1054
  %1985 = vmatprep.subr.bf16.mxu0 0
  %1986 = vmatpush1.bf16.msra.mxu0 0
  %1987 = vmatprep.subr.bf16.mxu0 0
  %1988 = vmatpush1.bf16.msra.mxu0 0
  %1989 = vmatprep.subr.bf16.mxu0 0
  %1990 = vmatpush1.bf16.msra.mxu0 0
  %1991 = vmatprep.subr.bf16.mxu0 0
  %1992 = vmatpush1.bf16.msra.mxu0 0
  %1993 = vmatprep.subr.bf16.mxu0 0
  %1994 = vmatpush1.bf16.msra.mxu0 0
  %1995 = vmatprep.subr.bf16.mxu0 0
  %1996 = vmatpush1.bf16.msra.mxu0 0
  %1997 = vmatprep.subr.bf16.mxu0 0
  %1998 = vmatpush1.bf16.msra.mxu0 0
  %1999 = vmatprep.subr.bf16.mxu0 0
  %2000 = vmatpush1.bf16.msra.mxu0 0
  %2001 = vmatprep.mubr.bf16.mxu0 0
  %2002 = vmatmul.mubr.bf16.gmra.mrb[0].mxu0 %v1885
  %v2003 = vpop.f32.mrb[0].mxu0
  %v2004 = vadd.f32 %v1922, %v2003
  %v2005 = vpop.f32.mrb[0].mxu0
  %v2006 = vadd.f32 %v1924, %v2005
  %v2007 = vpop.f32.mrb[0].mxu0
  %v2008 = vpop.f32.mrb[0].mxu0
  %2009 = vdwg.mxu0
  %2010 = vmatprep.subr.bf16.mxu0 %v1029
  %2011 = vmatpush1.bf16.msra.mxu0 %v1028
  %2012 = vmatprep.subr.bf16.mxu0 %v1033
  %2013 = vmatpush1.bf16.msra.mxu0 %v1032
  %2014 = vmatprep.subr.bf16.mxu0 %v1037
  %2015 = vmatpush1.bf16.msra.mxu0 %v1036
  %2016 = vmatprep.subr.bf16.mxu0 %v1041
  %2017 = vmatpush1.bf16.msra.mxu0 %v1040
  %2018 = vmatprep.subr.bf16.mxu0 %v1045
  %2019 = vmatpush1.bf16.msra.mxu0 %v1044
  %2020 = vmatprep.subr.bf16.mxu0 %v1049
  %2021 = vmatpush1.bf16.msra.mxu0 %v1048
  %2022 = vmatprep.subr.bf16.mxu0 %v1053
  %2023 = vmatpush1.bf16.msra.mxu0 %v1052
  %2024 = vmatprep.subr.bf16.mxu0 %v1057
  %2025 = vmatpush1.bf16.msra.mxu0 %v1056
  %2026 = vmatprep.subr.bf16.mxu0 0
  %2027 = vmatpush1.bf16.msra.mxu0 0
  %2028 = vmatprep.subr.bf16.mxu0 0
  %2029 = vmatpush1.bf16.msra.mxu0 0
  %2030 = vmatprep.subr.bf16.mxu0 0
  %2031 = vmatpush1.bf16.msra.mxu0 0
  %2032 = vmatprep.subr.bf16.mxu0 0
  %2033 = vmatpush1.bf16.msra.mxu0 0
  %2034 = vmatprep.subr.bf16.mxu0 0
  %2035 = vmatpush1.bf16.msra.mxu0 0
  %2036 = vmatprep.subr.bf16.mxu0 0
  %2037 = vmatpush1.bf16.msra.mxu0 0
  %2038 = vmatprep.subr.bf16.mxu0 0
  %2039 = vmatpush1.bf16.msra.mxu0 0
  %2040 = vmatprep.subr.bf16.mxu0 0
  %2041 = vmatpush1.bf16.msra.mxu0 0
  %2042 = vmatprep.mubr.bf16.mxu0 0
  %2043 = vmatmul.mubr.bf16.gmra.mrb[0].mxu0 %v1885
  %v2044 = vpop.f32.mrb[0].mxu0
  %v2045 = vadd.f32 %v1963, %v2044
  %v2046 = vpop.f32.mrb[0].mxu0
  %v2047 = vadd.f32 %v1965, %v2046
  %v2048 = vpop.f32.mrb[0].mxu0
  %v2049 = vpop.f32.mrb[0].mxu0
  %2050 = vdwg.mxu0
  %v2051 = vadd.f32 %v2004, %v306
  %v2052 = vadd.f32 %v2006, %v310
  %v2053 = vadd.f32 %v2045, %v314
  %v2054 = vadd.f32 %v2047, %v318
  %v2055 = vtanh.pop %v2051
  %v2056 = vtanh.pop %v2052
  %v2057 = vtanh.pop %v2053
  %v2058 = vmul.f32 %v2055, 0.5
  %v2059 = vmul.f32 %v2056, 0.5
  %v2060 = vmul.f32 %v2057, 0.5
  %v2061 = vadd.f32 %v2058, 0.5
  %v2062 = vadd.f32 %v2059, 0.5
  %v2063 = vadd.f32 %v2060, 0.5
  %v2064 = vtanh.pop %v2054
  %v2065 = vmul.f32 %v2062, %v1774
  %v2066 = vmul.f32 %v2061, %v2064
  %v2067 = vadd.f32 %v2065, %v2066
  %v2068 = vtanh.pop %v2067
  %v2069 = vmul.f32 %v2063, %v2068
  %s2070 = smul.u32 4, 4
  %s2071 = smul.addr %s2070, 8
  %s2072 = scalar_lea.vmem [#allocation2], %s2071
  %v2073 = vld [vmem:[%s2072] sm:$0xff]
  %v2074 = vld [vmem:[%s2072 + $0x8] sm:$0xff]
  %v2075 = vld [vmem:[%s2072 + $0x10] sm:$0xff]
  %v2076 = vld [vmem:[%s2072 + $0x18] sm:$0xff]
  %2077 = vmatprep.subr.bf16.mxu0 %v459
  %2078 = vmatpush1.bf16.msra.mxu0 %v458
  %2079 = vmatprep.subr.bf16.mxu0 %v463
  %2080 = vmatpush1.bf16.msra.mxu0 %v462
  %2081 = vmatprep.subr.bf16.mxu0 %v467
  %2082 = vmatpush1.bf16.msra.mxu0 %v466
  %2083 = vmatprep.subr.bf16.mxu0 %v471
  %2084 = vmatpush1.bf16.msra.mxu0 %v470
  %2085 = vmatprep.subr.bf16.mxu0 %v475
  %2086 = vmatpush1.bf16.msra.mxu0 %v474
  %2087 = vmatprep.subr.bf16.mxu0 %v479
  %2088 = vmatpush1.bf16.msra.mxu0 %v478
  %2089 = vmatprep.subr.bf16.mxu0 %v483
  %2090 = vmatpush1.bf16.msra.mxu0 %v482
  %2091 = vmatprep.subr.bf16.mxu0 %v487
  %2092 = vmatpush1.bf16.msra.mxu0 %v486
  %2093 = vmatprep.subr.bf16.mxu0 0
  %2094 = vmatpush1.bf16.msra.mxu0 0
  %2095 = vmatprep.subr.bf16.mxu0 0
  %2096 = vmatpush1.bf16.msra.mxu0 0
  %2097 = vmatprep.subr.bf16.mxu0 0
  %2098 = vmatpush1.bf16.msra.mxu0 0
  %2099 = vmatprep.subr.bf16.mxu0 0
  %2100 = vmatpush1.bf16.msra.mxu0 0
  %2101 = vmatprep.subr.bf16.mxu0 0
  %2102 = vmatpush1.bf16.msra.mxu0 0
  %2103 = vmatprep.subr.bf16.mxu0 0
  %2104 = vmatpush1.bf16.msra.mxu0 0
  %2105 = vmatprep.subr.bf16.mxu0 0
  %2106 = vmatpush1.bf16.msra.mxu0 0
  %2107 = vmatprep.subr.bf16.mxu0 0
  %2108 = vmatpush1.bf16.msra.mxu0 0
  %2109 = vmatprep.mubr.bf16.mxu0 0
  %2110 = vmatmul.mubr.bf16.gmra.mrb[0].mxu0 %v1886
  %v2111 = vpop.f32.mrb[0].mxu0
  %v2112 = vadd.f32 0.0, %v2111
  %v2113 = vpop.f32.mrb[0].mxu0
  %v2114 = vadd.f32 0.0, %v2113
  %v2115 = vpop.f32.mrb[0].mxu0
  %v2116 = vpop.f32.mrb[0].mxu0
  %2117 = vdwg.mxu0
  %2118 = vmatprep.subr.bf16.mxu0 %v461
  %2119 = vmatpush1.bf16.msra.mxu0 %v460
  %2120 = vmatprep.subr.bf16.mxu0 %v465
  %2121 = vmatpush1.bf16.msra.mxu0 %v464
  %2122 = vmatprep.subr.bf16.mxu0 %v469
  %2123 = vmatpush1.bf16.msra.mxu0 %v468
  %2124 = vmatprep.subr.bf16.mxu0 %v473
  %2125 = vmatpush1.bf16.msra.mxu0 %v472
  %2126 = vmatprep.subr.bf16.mxu0 %v477
  %2127 = vmatpush1.bf16.msra.mxu0 %v476
  %2128 = vmatprep.subr.bf16.mxu0 %v481
  %2129 = vmatpush1.bf16.msra.mxu0 %v480
  %2130 = vmatprep.subr.bf16.mxu0 %v485
  %2131 = vmatpush1.bf16.msra.mxu0 %v484
  %2132 = vmatprep.subr.bf16.mxu0 %v489
  %2133 = vmatpush1.bf16.msra.mxu0 %v488
  %2134 = vmatprep.subr.bf16.mxu0 0
  %2135 = vmatpush1.bf16.msra.mxu0 0
  %2136 = vmatprep.subr.bf16.mxu0 0
  %2137 = vmatpush1.bf16.msra.mxu0 0
  %2138 = vmatprep.subr.bf16.mxu0 0
  %2139 = vmatpush1.bf16.msra.mxu0 0
  %2140 = vmatprep.subr.bf16.mxu0 0
  %2141 = vmatpush1.bf16.msra.mxu0 0
  %2142 = vmatprep.subr.bf16.mxu0 0
  %2143 = vmatpush1.bf16.msra.mxu0 0
  %2144 = vmatprep.subr.bf16.mxu0 0
  %2145 = vmatpush1.bf16.msra.mxu0 0
  %2146 = vmatprep.subr.bf16.mxu0 0
  %2147 = vmatpush1.bf16.msra.mxu0 0
  %2148 = vmatprep.subr.bf16.mxu0 0
  %2149 = vmatpush1.bf16.msra.mxu0 0
  %2150 = vmatprep.mubr.bf16.mxu0 0
  %2151 = vmatmul.mubr.bf16.gmra.mrb[0].mxu0 %v1886
  %v2152 = vpop.f32.mrb[0].mxu0
  %v2153 = vadd.f32 0.0, %v2152
  %v2154 = vpop.f32.mrb[0].mxu0
  %v2155 = vadd.f32 0.0, %v2154
  %v2156 = vpop.f32.mrb[0].mxu0
  %v2157 = vpop.f32.mrb[0].mxu0
  %2158 = vdwg.mxu0
  %v2159 = vadd.f32 %v2073, %v2112
  %v2160 = vadd.f32 %v2074, %v2114
  %v2161 = vadd.f32 %v2075, %v2153
  %v2162 = vadd.f32 %v2076, %v2155
  %v2163 = vtanh.pop %v2159
  %v2164 = vtanh.pop %v2160
  %v2165 = vtanh.pop %v2161
  %v2166 = vmul.f32 %v2163, 0.5
  %v2167 = vmul.f32 %v2164, 0.5
  %v2168 = vmul.f32 %v2165, 0.5
  %v2169 = vadd.f32 %v2166, 0.5
  %v2170 = vadd.f32 %v2167, 0.5
  %v2171 = vadd.f32 %v2168, 0.5
  %v2172 = vtanh.pop %v2162
  %v2173 = vmul.f32 %v2170, %v1882
  %v2174 = vmul.f32 %v2169, %v2172
  %v2175 = vadd.f32 %v2173, %v2174
  %v2176 = vtanh.pop %v2175
  %v2177 = vmul.f32 %v2171, %v2176
  %v2178 = vpack.c.bf16 %v2069, %v2069
  %v2179 = vpack.c.bf16 %v2177, %v2177
  %2180 = vmatprep.subr.bf16.mxu0 %v785
  %2181 = vmatpush1.bf16.msra.mxu0 %v784
  %2182 = vmatprep.subr.bf16.mxu0 %v789
  %2183 = vmatpush1.bf16.msra.mxu0 %v788
  %2184 = vmatprep.subr.bf16.mxu0 %v793
  %2185 = vmatpush1.bf16.msra.mxu0 %v792
  %2186 = vmatprep.subr.bf16.mxu0 %v797
  %2187 = vmatpush1.bf16.msra.mxu0 %v796
  %2188 = vmatprep.subr.bf16.mxu0 %v801
  %2189 = vmatpush1.bf16.msra.mxu0 %v800
  %2190 = vmatprep.subr.bf16.mxu0 %v805
  %2191 = vmatpush1.bf16.msra.mxu0 %v804
  %2192 = vmatprep.subr.bf16.mxu0 %v809
  %2193 = vmatpush1.bf16.msra.mxu0 %v808
  %2194 = vmatprep.subr.bf16.mxu0 %v813
  %2195 = vmatpush1.bf16.msra.mxu0 %v812
  %2196 = vmatprep.subr.bf16.mxu0 0
  %2197 = vmatpush1.bf16.msra.mxu0 0
  %2198 = vmatprep.subr.bf16.mxu0 0
  %2199 = vmatpush1.bf16.msra.mxu0 0
  %2200 = vmatprep.subr.bf16.mxu0 0
  %2201 = vmatpush1.bf16.msra.mxu0 0
  %2202 = vmatprep.subr.bf16.mxu0 0
  %2203 = vmatpush1.bf16.msra.mxu0 0
  %2204 = vmatprep.subr.bf16.mxu0 0
  %2205 = vmatpush1.bf16.msra.mxu0 0
  %2206 = vmatprep.subr.bf16.mxu0 0
  %2207 = vmatpush1.bf16.msra.mxu0 0
  %2208 = vmatprep.subr.bf16.mxu0 0
  %2209 = vmatpush1.bf16.msra.mxu0 0
  %2210 = vmatprep.subr.bf16.mxu0 0
  %2211 = vmatpush1.bf16.msra.mxu0 0
  %2212 = vmatprep.mubr.bf16.mxu0 0
  %2213 = vmatmul.mubr.bf16.gmra.mrb[0].mxu0 %v2179
  %v2214 = vpop.f32.mrb[0].mxu0
  %v2215 = vadd.f32 0.0, %v2214
  %v2216 = vpop.f32.mrb[0].mxu0
  %v2217 = vadd.f32 0.0, %v2216
  %v2218 = vpop.f32.mrb[0].mxu0
  %v2219 = vpop.f32.mrb[0].mxu0
  %2220 = vdwg.mxu0
  %2221 = vmatprep.subr.bf16.mxu0 %v787
  %2222 = vmatpush1.bf16.msra.mxu0 %v786
  %2223 = vmatprep.subr.bf16.mxu0 %v791
  %2224 = vmatpush1.bf16.msra.mxu0 %v790
  %2225 = vmatprep.subr.bf16.mxu0 %v795
  %2226 = vmatpush1.bf16.msra.mxu0 %v794
  %2227 = vmatprep.subr.bf16.mxu0 %v799
  %2228 = vmatpush1.bf16.msra.mxu0 %v798
  %2229 = vmatprep.subr.bf16.mxu0 %v803
  %2230 = vmatpush1.bf16.msra.mxu0 %v802
  %2231 = vmatprep.subr.bf16.mxu0 %v807
  %2232 = vmatpush1.bf16.msra.mxu0 %v806
  %2233 = vmatprep.subr.bf16.mxu0 %v811
  %2234 = vmatpush1.bf16.msra.mxu0 %v810
  %2235 = vmatprep.subr.bf16.mxu0 %v815
  %2236 = vmatpush1.bf16.msra.mxu0 %v814
  %2237 = vmatprep.subr.bf16.mxu0 0
  %2238 = vmatpush1.bf16.msra.mxu0 0
  %2239 = vmatprep.subr.bf16.mxu0 0
  %2240 = vmatpush1.bf16.msra.mxu0 0
  %2241 = vmatprep.subr.bf16.mxu0 0
  %2242 = vmatpush1.bf16.msra.mxu0 0
  %2243 = vmatprep.subr.bf16.mxu0 0
  %2244 = vmatpush1.bf16.msra.mxu0 0
  %2245 = vmatprep.subr.bf16.mxu0 0
  %2246 = vmatpush1.bf16.msra.mxu0 0
  %2247 = vmatprep.subr.bf16.mxu0 0
  %2248 = vmatpush1.bf16.msra.mxu0 0
  %2249 = vmatprep.subr.bf16.mxu0 0
  %2250 = vmatpush1.bf16.msra.mxu0 0
  %2251 = vmatprep.subr.bf16.mxu0 0
  %2252 = vmatpush1.bf16.msra.mxu0 0
  %2253 = vmatprep.mubr.bf16.mxu0 0
  %2254 = vmatmul.mubr.bf16.gmra.mrb[0].mxu0 %v2179
  %v2255 = vpop.f32.mrb[0].mxu0
  %v2256 = vadd.f32 0.0, %v2255
  %v2257 = vpop.f32.mrb[0].mxu0
  %v2258 = vadd.f32 0.0, %v2257
  %v2259 = vpop.f32.mrb[0].mxu0
  %v2260 = vpop.f32.mrb[0].mxu0
  %2261 = vdwg.mxu0
  %2262 = vmatprep.subr.bf16.mxu0 %v1027
  %2263 = vmatpush1.bf16.msra.mxu0 %v1026
  %2264 = vmatprep.subr.bf16.mxu0 %v1031
  %2265 = vmatpush1.bf16.msra.mxu0 %v1030
  %2266 = vmatprep.subr.bf16.mxu0 %v1035
  %2267 = vmatpush1.bf16.msra.mxu0 %v1034
  %2268 = vmatprep.subr.bf16.mxu0 %v1039
  %2269 = vmatpush1.bf16.msra.mxu0 %v1038
  %2270 = vmatprep.subr.bf16.mxu0 %v1043
  %2271 = vmatpush1.bf16.msra.mxu0 %v1042
  %2272 = vmatprep.subr.bf16.mxu0 %v1047
  %2273 = vmatpush1.bf16.msra.mxu0 %v1046
  %2274 = vmatprep.subr.bf16.mxu0 %v1051
  %2275 = vmatpush1.bf16.msra.mxu0 %v1050
  %2276 = vmatprep.subr.bf16.mxu0 %v1055
  %2277 = vmatpush1.bf16.msra.mxu0 %v1054
  %2278 = vmatprep.subr.bf16.mxu0 0
  %2279 = vmatpush1.bf16.msra.mxu0 0
  %2280 = vmatprep.subr.bf16.mxu0 0
  %2281 = vmatpush1.bf16.msra.mxu0 0
  %2282 = vmatprep.subr.bf16.mxu0 0
  %2283 = vmatpush1.bf16.msra.mxu0 0
  %2284 = vmatprep.subr.bf16.mxu0 0
  %2285 = vmatpush1.bf16.msra.mxu0 0
  %2286 = vmatprep.subr.bf16.mxu0 0
  %2287 = vmatpush1.bf16.msra.mxu0 0
  %2288 = vmatprep.subr.bf16.mxu0 0
  %2289 = vmatpush1.bf16.msra.mxu0 0
  %2290 = vmatprep.subr.bf16.mxu0 0
  %2291 = vmatpush1.bf16.msra.mxu0 0
  %2292 = vmatprep.subr.bf16.mxu0 0
  %2293 = vmatpush1.bf16.msra.mxu0 0
  %2294 = vmatprep.mubr.bf16.mxu0 0
  %2295 = vmatmul.mubr.bf16.gmra.mrb[0].mxu0 %v2178
  %v2296 = vpop.f32.mrb[0].mxu0
  %v2297 = vadd.f32 %v2215, %v2296
  %v2298 = vpop.f32.mrb[0].mxu0
  %v2299 = vadd.f32 %v2217, %v2298
  %v2300 = vpop.f32.mrb[0].mxu0
  %v2301 = vpop.f32.mrb[0].mxu0
  %2302 = vdwg.mxu0
  %2303 = vmatprep.subr.bf16.mxu0 %v1029
  %2304 = vmatpush1.bf16.msra.mxu0 %v1028
  %2305 = vmatprep.subr.bf16.mxu0 %v1033
  %2306 = vmatpush1.bf16.msra.mxu0 %v1032
  %2307 = vmatprep.subr.bf16.mxu0 %v1037
  %2308 = vmatpush1.bf16.msra.mxu0 %v1036
  %2309 = vmatprep.subr.bf16.mxu0 %v1041
  %2310 = vmatpush1.bf16.msra.mxu0 %v1040
  %2311 = vmatprep.subr.bf16.mxu0 %v1045
  %2312 = vmatpush1.bf16.msra.mxu0 %v1044
  %2313 = vmatprep.subr.bf16.mxu0 %v1049
  %2314 = vmatpush1.bf16.msra.mxu0 %v1048
  %2315 = vmatprep.subr.bf16.mxu0 %v1053
  %2316 = vmatpush1.bf16.msra.mxu0 %v1052
  %2317 = vmatprep.subr.bf16.mxu0 %v1057
  %2318 = vmatpush1.bf16.msra.mxu0 %v1056
  %2319 = vmatprep.subr.bf16.mxu0 0
  %2320 = vmatpush1.bf16.msra.mxu0 0
  %2321 = vmatprep.subr.bf16.mxu0 0
  %2322 = vmatpush1.bf16.msra.mxu0 0
  %2323 = vmatprep.subr.bf16.mxu0 0
  %2324 = vmatpush1.bf16.msra.mxu0 0
  %2325 = vmatprep.subr.bf16.mxu0 0
  %2326 = vmatpush1.bf16.msra.mxu0 0
  %2327 = vmatprep.subr.bf16.mxu0 0
  %2328 = vmatpush1.bf16.msra.mxu0 0
  %2329 = vmatprep.subr.bf16.mxu0 0
  %2330 = vmatpush1.bf16.msra.mxu0 0
  %2331 = vmatprep.subr.bf16.mxu0 0
  %2332 = vmatpush1.bf16.msra.mxu0 0
  %2333 = vmatprep.subr.bf16.mxu0 0
  %2334 = vmatpush1.bf16.msra.mxu0 0
  %2335 = vmatprep.mubr.bf16.mxu0 0
  %2336 = vmatmul.mubr.bf16.gmra.mrb[0].mxu0 %v2178
  %v2337 = vpop.f32.mrb[0].mxu0
  %v2338 = vadd.f32 %v2256, %v2337
  %v2339 = vpop.f32.mrb[0].mxu0
  %v2340 = vadd.f32 %v2258, %v2339
  %v2341 = vpop.f32.mrb[0].mxu0
  %v2342 = vpop.f32.mrb[0].mxu0
  %2343 = vdwg.mxu0
  %v2344 = vadd.f32 %v2297, %v306
  %v2345 = vadd.f32 %v2299, %v310
  %v2346 = vadd.f32 %v2338, %v314
  %v2347 = vadd.f32 %v2340, %v318
  %v2348 = vtanh.pop %v2344
  %v2349 = vtanh.pop %v2345
  %v2350 = vtanh.pop %v2346
  %v2351 = vmul.f32 %v2348, 0.5
  %v2352 = vmul.f32 %v2349, 0.5
  %v2353 = vmul.f32 %v2350, 0.5
  %v2354 = vadd.f32 %v2351, 0.5
  %v2355 = vadd.f32 %v2352, 0.5
  %v2356 = vadd.f32 %v2353, 0.5
  %v2357 = vtanh.pop %v2347
  %v2358 = vmul.f32 %v2355, %v2067
  %v2359 = vmul.f32 %v2354, %v2357
  %v2360 = vadd.f32 %v2358, %v2359
  %v2361 = vtanh.pop %v2360
  %v2362 = vmul.f32 %v2356, %v2361
  %s2363 = smul.u32 5, 4
  %s2364 = smul.addr %s2363, 8
  %s2365 = scalar_lea.vmem [#allocation2], %s2364
  %v2366 = vld [vmem:[%s2365] sm:$0xff]
  %v2367 = vld [vmem:[%s2365 + $0x8] sm:$0xff]
  %v2368 = vld [vmem:[%s2365 + $0x10] sm:$0xff]
  %v2369 = vld [vmem:[%s2365 + $0x18] sm:$0xff]
  %2370 = vmatprep.subr.bf16.mxu0 %v459
  %2371 = vmatpush1.bf16.msra.mxu0 %v458
  %2372 = vmatprep.subr.bf16.mxu0 %v463
  %2373 = vmatpush1.bf16.msra.mxu0 %v462
  %2374 = vmatprep.subr.bf16.mxu0 %v467
  %2375 = vmatpush1.bf16.msra.mxu0 %v466
  %2376 = vmatprep.subr.bf16.mxu0 %v471
  %2377 = vmatpush1.bf16.msra.mxu0 %v470
  %2378 = vmatprep.subr.bf16.mxu0 %v475
  %2379 = vmatpush1.bf16.msra.mxu0 %v474
  %2380 = vmatprep.subr.bf16.mxu0 %v479
  %2381 = vmatpush1.bf16.msra.mxu0 %v478
  %2382 = vmatprep.subr.bf16.mxu0 %v483
  %2383 = vmatpush1.bf16.msra.mxu0 %v482
  %2384 = vmatprep.subr.bf16.mxu0 %v487
  %2385 = vmatpush1.bf16.msra.mxu0 %v486
  %2386 = vmatprep.subr.bf16.mxu0 0
  %2387 = vmatpush1.bf16.msra.mxu0 0
  %2388 = vmatprep.subr.bf16.mxu0 0
  %2389 = vmatpush1.bf16.msra.mxu0 0
  %2390 = vmatprep.subr.bf16.mxu0 0
  %2391 = vmatpush1.bf16.msra.mxu0 0
  %2392 = vmatprep.subr.bf16.mxu0 0
  %2393 = vmatpush1.bf16.msra.mxu0 0
  %2394 = vmatprep.subr.bf16.mxu0 0
  %2395 = vmatpush1.bf16.msra.mxu0 0
  %2396 = vmatprep.subr.bf16.mxu0 0
  %2397 = vmatpush1.bf16.msra.mxu0 0
  %2398 = vmatprep.subr.bf16.mxu0 0
  %2399 = vmatpush1.bf16.msra.mxu0 0
  %2400 = vmatprep.subr.bf16.mxu0 0
  %2401 = vmatpush1.bf16.msra.mxu0 0
  %2402 = vmatprep.mubr.bf16.mxu0 0
  %2403 = vmatmul.mubr.bf16.gmra.mrb[0].mxu0 %v2179
  %v2404 = vpop.f32.mrb[0].mxu0
  %v2405 = vadd.f32 0.0, %v2404
  %v2406 = vpop.f32.mrb[0].mxu0
  %v2407 = vadd.f32 0.0, %v2406
  %v2408 = vpop.f32.mrb[0].mxu0
  %v2409 = vpop.f32.mrb[0].mxu0
  %2410 = vdwg.mxu0
  %2411 = vmatprep.subr.bf16.mxu0 %v461
  %2412 = vmatpush1.bf16.msra.mxu0 %v460
  %2413 = vmatprep.subr.bf16.mxu0 %v465
  %2414 = vmatpush1.bf16.msra.mxu0 %v464
  %2415 = vmatprep.subr.bf16.mxu0 %v469
  %2416 = vmatpush1.bf16.msra.mxu0 %v468
  %2417 = vmatprep.subr.bf16.mxu0 %v473
  %2418 = vmatpush1.bf16.msra.mxu0 %v472
  %2419 = vmatprep.subr.bf16.mxu0 %v477
  %2420 = vmatpush1.bf16.msra.mxu0 %v476
  %2421 = vmatprep.subr.bf16.mxu0 %v481
  %2422 = vmatpush1.bf16.msra.mxu0 %v480
  %2423 = vmatprep.subr.bf16.mxu0 %v485
  %2424 = vmatpush1.bf16.msra.mxu0 %v484
  %2425 = vmatprep.subr.bf16.mxu0 %v489
  %2426 = vmatpush1.bf16.msra.mxu0 %v488
  %2427 = vmatprep.subr.bf16.mxu0 0
  %2428 = vmatpush1.bf16.msra.mxu0 0
  %2429 = vmatprep.subr.bf16.mxu0 0
  %2430 = vmatpush1.bf16.msra.mxu0 0
  %2431 = vmatprep.subr.bf16.mxu0 0
  %2432 = vmatpush1.bf16.msra.mxu0 0
  %2433 = vmatprep.subr.bf16.mxu0 0
  %2434 = vmatpush1.bf16.msra.mxu0 0
  %2435 = vmatprep.subr.bf16.mxu0 0
  %2436 = vmatpush1.bf16.msra.mxu0 0
  %2437 = vmatprep.subr.bf16.mxu0 0
  %2438 = vmatpush1.bf16.msra.mxu0 0
  %2439 = vmatprep.subr.bf16.mxu0 0
  %2440 = vmatpush1.bf16.msra.mxu0 0
  %2441 = vmatprep.subr.bf16.mxu0 0
  %2442 = vmatpush1.bf16.msra.mxu0 0
  %2443 = vmatprep.mubr.bf16.mxu0 0
  %2444 = vmatmul.mubr.bf16.gmra.mrb[0].mxu0 %v2179
  %v2445 = vpop.f32.mrb[0].mxu0
  %v2446 = vadd.f32 0.0, %v2445
  %v2447 = vpop.f32.mrb[0].mxu0
  %v2448 = vadd.f32 0.0, %v2447
  %v2449 = vpop.f32.mrb[0].mxu0
  %v2450 = vpop.f32.mrb[0].mxu0
  %2451 = vdwg.mxu0
  %v2452 = vadd.f32 %v2366, %v2405
  %v2453 = vadd.f32 %v2367, %v2407
  %v2454 = vadd.f32 %v2368, %v2446
  %v2455 = vadd.f32 %v2369, %v2448
  %v2456 = vtanh.pop %v2452
  %v2457 = vtanh.pop %v2453
  %v2458 = vtanh.pop %v2454
  %v2459 = vmul.f32 %v2456, 0.5
  %v2460 = vmul.f32 %v2457, 0.5
  %v2461 = vmul.f32 %v2458, 0.5
  %v2462 = vadd.f32 %v2459, 0.5
  %v2463 = vadd.f32 %v2460, 0.5
  %v2464 = vadd.f32 %v2461, 0.5
  %v2465 = vtanh.pop %v2455
  %v2466 = vmul.f32 %v2463, %v2175
  %v2467 = vmul.f32 %v2462, %v2465
  %v2468 = vadd.f32 %v2466, %v2467
  %v2469 = vtanh.pop %v2468
  %v2470 = vmul.f32 %v2464, %v2469
  %v2471 = vpack.c.bf16 %v2362, %v2362
  %v2472 = vpack.c.bf16 %v2470, %v2470
  %2473 = vmatprep.subr.bf16.mxu0 %v785
  %2474 = vmatpush1.bf16.msra.mxu0 %v784
  %2475 = vmatprep.subr.bf16.mxu0 %v789
  %2476 = vmatpush1.bf16.msra.mxu0 %v788
  %2477 = vmatprep.subr.bf16.mxu0 %v793
  %2478 = vmatpush1.bf16.msra.mxu0 %v792
  %2479 = vmatprep.subr.bf16.mxu0 %v797
  %2480 = vmatpush1.bf16.msra.mxu0 %v796
  %2481 = vmatprep.subr.bf16.mxu0 %v801
  %2482 = vmatpush1.bf16.msra.mxu0 %v800
  %2483 = vmatprep.subr.bf16.mxu0 %v805
  %2484 = vmatpush1.bf16.msra.mxu0 %v804
  %2485 = vmatprep.subr.bf16.mxu0 %v809
  %2486 = vmatpush1.bf16.msra.mxu0 %v808
  %2487 = vmatprep.subr.bf16.mxu0 %v813
  %2488 = vmatpush1.bf16.msra.mxu0 %v812
  %2489 = vmatprep.subr.bf16.mxu0 0
  %2490 = vmatpush1.bf16.msra.mxu0 0
  %2491 = vmatprep.subr.bf16.mxu0 0
  %2492 = vmatpush1.bf16.msra.mxu0 0
  %2493 = vmatprep.subr.bf16.mxu0 0
  %2494 = vmatpush1.bf16.msra.mxu0 0
  %2495 = vmatprep.subr.bf16.mxu0 0
  %2496 = vmatpush1.bf16.msra.mxu0 0
  %2497 = vmatprep.subr.bf16.mxu0 0
  %2498 = vmatpush1.bf16.msra.mxu0 0
  %2499 = vmatprep.subr.bf16.mxu0 0
  %2500 = vmatpush1.bf16.msra.mxu0 0
  %2501 = vmatprep.subr.bf16.mxu0 0
  %2502 = vmatpush1.bf16.msra.mxu0 0
  %2503 = vmatprep.subr.bf16.mxu0 0
  %2504 = vmatpush1.bf16.msra.mxu0 0
  %2505 = vmatprep.mubr.bf16.mxu0 0
  %2506 = vmatmul.mubr.bf16.gmra.mrb[0].mxu0 %v2472
  %v2507 = vpop.f32.mrb[0].mxu0
  %v2508 = vadd.f32 0.0, %v2507
  %v2509 = vpop.f32.mrb[0].mxu0
  %v2510 = vadd.f32 0.0, %v2509
  %v2511 = vpop.f32.mrb[0].mxu0
  %v2512 = vpop.f32.mrb[0].mxu0
  %2513 = vdwg.mxu0
  %2514 = vmatprep.subr.bf16.mxu0 %v787
  %2515 = vmatpush1.bf16.msra.mxu0 %v786
  %2516 = vmatprep.subr.bf16.mxu0 %v791
  %2517 = vmatpush1.bf16.msra.mxu0 %v790
  %2518 = vmatprep.subr.bf16.mxu0 %v795
  %2519 = vmatpush1.bf16.msra.mxu0 %v794
  %2520 = vmatprep.subr.bf16.mxu0 %v799
  %2521 = vmatpush1.bf16.msra.mxu0 %v798
  %2522 = vmatprep.subr.bf16.mxu0 %v803
  %2523 = vmatpush1.bf16.msra.mxu0 %v802
  %2524 = vmatprep.subr.bf16.mxu0 %v807
  %2525 = vmatpush1.bf16.msra.mxu0 %v806
  %2526 = vmatprep.subr.bf16.mxu0 %v811
  %2527 = vmatpush1.bf16.msra.mxu0 %v810
  %2528 = vmatprep.subr.bf16.mxu0 %v815
  %2529 = vmatpush1.bf16.msra.mxu0 %v814
  %2530 = vmatprep.subr.bf16.mxu0 0
  %2531 = vmatpush1.bf16.msra.mxu0 0
  %2532 = vmatprep.subr.bf16.mxu0 0
  %2533 = vmatpush1.bf16.msra.mxu0 0
  %2534 = vmatprep.subr.bf16.mxu0 0
  %2535 = vmatpush1.bf16.msra.mxu0 0
  %2536 = vmatprep.subr.bf16.mxu0 0
  %2537 = vmatpush1.bf16.msra.mxu0 0
  %2538 = vmatprep.subr.bf16.mxu0 0
  %2539 = vmatpush1.bf16.msra.mxu0 0
  %2540 = vmatprep.subr.bf16.mxu0 0
  %2541 = vmatpush1.bf16.msra.mxu0 0
  %2542 = vmatprep.subr.bf16.mxu0 0
  %2543 = vmatpush1.bf16.msra.mxu0 0
  %2544 = vmatprep.subr.bf16.mxu0 0
  %2545 = vmatpush1.bf16.msra.mxu0 0
  %2546 = vmatprep.mubr.bf16.mxu0 0
  %2547 = vmatmul.mubr.bf16.gmra.mrb[0].mxu0 %v2472
  %v2548 = vpop.f32.mrb[0].mxu0
  %v2549 = vadd.f32 0.0, %v2548
  %v2550 = vpop.f32.mrb[0].mxu0
  %v2551 = vadd.f32 0.0, %v2550
  %v2552 = vpop.f32.mrb[0].mxu0
  %v2553 = vpop.f32.mrb[0].mxu0
  %2554 = vdwg.mxu0
  %2555 = vmatprep.subr.bf16.mxu0 %v1027
  %2556 = vmatpush1.bf16.msra.mxu0 %v1026
  %2557 = vmatprep.subr.bf16.mxu0 %v1031
  %2558 = vmatpush1.bf16.msra.mxu0 %v1030
  %2559 = vmatprep.subr.bf16.mxu0 %v1035
  %2560 = vmatpush1.bf16.msra.mxu0 %v1034
  %2561 = vmatprep.subr.bf16.mxu0 %v1039
  %2562 = vmatpush1.bf16.msra.mxu0 %v1038
  %2563 = vmatprep.subr.bf16.mxu0 %v1043
  %2564 = vmatpush1.bf16.msra.mxu0 %v1042
  %2565 = vmatprep.subr.bf16.mxu0 %v1047
  %2566 = vmatpush1.bf16.msra.mxu0 %v1046
  %2567 = vmatprep.subr.bf16.mxu0 %v1051
  %2568 = vmatpush1.bf16.msra.mxu0 %v1050
  %2569 = vmatprep.subr.bf16.mxu0 %v1055
  %2570 = vmatpush1.bf16.msra.mxu0 %v1054
  %2571 = vmatprep.subr.bf16.mxu0 0
  %2572 = vmatpush1.bf16.msra.mxu0 0
  %2573 = vmatprep.subr.bf16.mxu0 0
  %2574 = vmatpush1.bf16.msra.mxu0 0
  %2575 = vmatprep.subr.bf16.mxu0 0
  %2576 = vmatpush1.bf16.msra.mxu0 0
  %2577 = vmatprep.subr.bf16.mxu0 0
  %2578 = vmatpush1.bf16.msra.mxu0 0
  %2579 = vmatprep.subr.bf16.mxu0 0
  %2580 = vmatpush1.bf16.msra.mxu0 0
  %2581 = vmatprep.subr.bf16.mxu0 0
  %2582 = vmatpush1.bf16.msra.mxu0 0
  %2583 = vmatprep.subr.bf16.mxu0 0
  %2584 = vmatpush1.bf16.msra.mxu0 0
  %2585 = vmatprep.subr.bf16.mxu0 0
  %2586 = vmatpush1.bf16.msra.mxu0 0
  %2587 = vmatprep.mubr.bf16.mxu0 0
  %2588 = vmatmul.mubr.bf16.gmra.mrb[0].mxu0 %v2471
  %v2589 = vpop.f32.mrb[0].mxu0
  %v2590 = vadd.f32 %v2508, %v2589
  %v2591 = vpop.f32.mrb[0].mxu0
  %v2592 = vadd.f32 %v2510, %v2591
  %v2593 = vpop.f32.mrb[0].mxu0
  %v2594 = vpop.f32.mrb[0].mxu0
  %2595 = vdwg.mxu0
  %2596 = vmatprep.subr.bf16.mxu0 %v1029
  %2597 = vmatpush1.bf16.msra.mxu0 %v1028
  %2598 = vmatprep.subr.bf16.mxu0 %v1033
  %2599 = vmatpush1.bf16.msra.mxu0 %v1032
  %2600 = vmatprep.subr.bf16.mxu0 %v1037
  %2601 = vmatpush1.bf16.msra.mxu0 %v1036
  %2602 = vmatprep.subr.bf16.mxu0 %v1041
  %2603 = vmatpush1.bf16.msra.mxu0 %v1040
  %2604 = vmatprep.subr.bf16.mxu0 %v1045
  %2605 = vmatpush1.bf16.msra.mxu0 %v1044
  %2606 = vmatprep.subr.bf16.mxu0 %v1049
  %2607 = vmatpush1.bf16.msra.mxu0 %v1048
  %2608 = vmatprep.subr.bf16.mxu0 %v1053
  %2609 = vmatpush1.bf16.msra.mxu0 %v1052
  %2610 = vmatprep.subr.bf16.mxu0 %v1057
  %2611 = vmatpush1.bf16.msra.mxu0 %v1056
  %2612 = vmatprep.subr.bf16.mxu0 0
  %2613 = vmatpush1.bf16.msra.mxu0 0
  %2614 = vmatprep.subr.bf16.mxu0 0
  %2615 = vmatpush1.bf16.msra.mxu0 0
  %2616 = vmatprep.subr.bf16.mxu0 0
  %2617 = vmatpush1.bf16.msra.mxu0 0
  %2618 = vmatprep.subr.bf16.mxu0 0
  %2619 = vmatpush1.bf16.msra.mxu0 0
  %2620 = vmatprep.subr.bf16.mxu0 0
  %2621 = vmatpush1.bf16.msra.mxu0 0
  %2622 = vmatprep.subr.bf16.mxu0 0
  %2623 = vmatpush1.bf16.msra.mxu0 0
  %2624 = vmatprep.subr.bf16.mxu0 0
  %2625 = vmatpush1.bf16.msra.mxu0 0
  %2626 = vmatprep.subr.bf16.mxu0 0
  %2627 = vmatpush1.bf16.msra.mxu0 0
  %2628 = vmatprep.mubr.bf16.mxu0 0
  %2629 = vmatmul.mubr.bf16.gmra.mrb[0].mxu0 %v2471
  %v2630 = vpop.f32.mrb[0].mxu0
  %v2631 = vadd.f32 %v2549, %v2630
  %v2632 = vpop.f32.mrb[0].mxu0
  %v2633 = vadd.f32 %v2551, %v2632
  %v2634 = vpop.f32.mrb[0].mxu0
  %v2635 = vpop.f32.mrb[0].mxu0
  %2636 = vdwg.mxu0
  %v2637 = vadd.f32 %v2590, %v306
  %v2638 = vadd.f32 %v2592, %v310
  %v2639 = vadd.f32 %v2631, %v314
  %v2640 = vadd.f32 %v2633, %v318
  %v2641 = vtanh.pop %v2637
  %v2642 = vtanh.pop %v2638
  %v2643 = vtanh.pop %v2639
  %v2644 = vmul.f32 %v2641, 0.5
  %v2645 = vmul.f32 %v2642, 0.5
  %v2646 = vmul.f32 %v2643, 0.5
  %v2647 = vadd.f32 %v2644, 0.5
  %v2648 = vadd.f32 %v2645, 0.5
  %v2649 = vadd.f32 %v2646, 0.5
  %v2650 = vtanh.pop %v2640
  %v2651 = vmul.f32 %v2648, %v2360
  %v2652 = vmul.f32 %v2647, %v2650
  %v2653 = vadd.f32 %v2651, %v2652
  %v2654 = vtanh.pop %v2653
  %v2655 = vmul.f32 %v2649, %v2654
  %s2656 = smul.u32 6, 4
  %s2657 = smul.addr %s2656, 8
  %s2658 = scalar_lea.vmem [#allocation2], %s2657
  %v2659 = vld [vmem:[%s2658] sm:$0xff]
  %v2660 = vld [vmem:[%s2658 + $0x8] sm:$0xff]
  %v2661 = vld [vmem:[%s2658 + $0x10] sm:$0xff]
  %v2662 = vld [vmem:[%s2658 + $0x18] sm:$0xff]
  %2663 = vmatprep.subr.bf16.mxu0 %v459
  %2664 = vmatpush1.bf16.msra.mxu0 %v458
  %2665 = vmatprep.subr.bf16.mxu0 %v463
  %2666 = vmatpush1.bf16.msra.mxu0 %v462
  %2667 = vmatprep.subr.bf16.mxu0 %v467
  %2668 = vmatpush1.bf16.msra.mxu0 %v466
  %2669 = vmatprep.subr.bf16.mxu0 %v471
  %2670 = vmatpush1.bf16.msra.mxu0 %v470
  %2671 = vmatprep.subr.bf16.mxu0 %v475
  %2672 = vmatpush1.bf16.msra.mxu0 %v474
  %2673 = vmatprep.subr.bf16.mxu0 %v479
  %2674 = vmatpush1.bf16.msra.mxu0 %v478
  %2675 = vmatprep.subr.bf16.mxu0 %v483
  %2676 = vmatpush1.bf16.msra.mxu0 %v482
  %2677 = vmatprep.subr.bf16.mxu0 %v487
  %2678 = vmatpush1.bf16.msra.mxu0 %v486
  %2679 = vmatprep.subr.bf16.mxu0 0
  %2680 = vmatpush1.bf16.msra.mxu0 0
  %2681 = vmatprep.subr.bf16.mxu0 0
  %2682 = vmatpush1.bf16.msra.mxu0 0
  %2683 = vmatprep.subr.bf16.mxu0 0
  %2684 = vmatpush1.bf16.msra.mxu0 0
  %2685 = vmatprep.subr.bf16.mxu0 0
  %2686 = vmatpush1.bf16.msra.mxu0 0
  %2687 = vmatprep.subr.bf16.mxu0 0
  %2688 = vmatpush1.bf16.msra.mxu0 0
  %2689 = vmatprep.subr.bf16.mxu0 0
  %2690 = vmatpush1.bf16.msra.mxu0 0
  %2691 = vmatprep.subr.bf16.mxu0 0
  %2692 = vmatpush1.bf16.msra.mxu0 0
  %2693 = vmatprep.subr.bf16.mxu0 0
  %2694 = vmatpush1.bf16.msra.mxu0 0
  %2695 = vmatprep.mubr.bf16.mxu0 0
  %2696 = vmatmul.mubr.bf16.gmra.mrb[0].mxu0 %v2472
  %v2697 = vpop.f32.mrb[0].mxu0
  %v2698 = vadd.f32 0.0, %v2697
  %v2699 = vpop.f32.mrb[0].mxu0
  %v2700 = vadd.f32 0.0, %v2699
  %v2701 = vpop.f32.mrb[0].mxu0
  %v2702 = vpop.f32.mrb[0].mxu0
  %2703 = vdwg.mxu0
  %2704 = vmatprep.subr.bf16.mxu0 %v461
  %2705 = vmatpush1.bf16.msra.mxu0 %v460
  %2706 = vmatprep.subr.bf16.mxu0 %v465
  %2707 = vmatpush1.bf16.msra.mxu0 %v464
  %2708 = vmatprep.subr.bf16.mxu0 %v469
  %2709 = vmatpush1.bf16.msra.mxu0 %v468
  %2710 = vmatprep.subr.bf16.mxu0 %v473
  %2711 = vmatpush1.bf16.msra.mxu0 %v472
  %2712 = vmatprep.subr.bf16.mxu0 %v477
  %2713 = vmatpush1.bf16.msra.mxu0 %v476
  %2714 = vmatprep.subr.bf16.mxu0 %v481
  %2715 = vmatpush1.bf16.msra.mxu0 %v480
  %2716 = vmatprep.subr.bf16.mxu0 %v485
  %2717 = vmatpush1.bf16.msra.mxu0 %v484
  %2718 = vmatprep.subr.bf16.mxu0 %v489
  %2719 = vmatpush1.bf16.msra.mxu0 %v488
  %2720 = vmatprep.subr.bf16.mxu0 0
  %2721 = vmatpush1.bf16.msra.mxu0 0
  %2722 = vmatprep.subr.bf16.mxu0 0
  %2723 = vmatpush1.bf16.msra.mxu0 0
  %2724 = vmatprep.subr.bf16.mxu0 0
  %2725 = vmatpush1.bf16.msra.mxu0 0
  %2726 = vmatprep.subr.bf16.mxu0 0
  %2727 = vmatpush1.bf16.msra.mxu0 0
  %2728 = vmatprep.subr.bf16.mxu0 0
  %2729 = vmatpush1.bf16.msra.mxu0 0
  %2730 = vmatprep.subr.bf16.mxu0 0
  %2731 = vmatpush1.bf16.msra.mxu0 0
  %2732 = vmatprep.subr.bf16.mxu0 0
  %2733 = vmatpush1.bf16.msra.mxu0 0
  %2734 = vmatprep.subr.bf16.mxu0 0
  %2735 = vmatpush1.bf16.msra.mxu0 0
  %2736 = vmatprep.mubr.bf16.mxu0 0
  %2737 = vmatmul.mubr.bf16.gmra.mrb[0].mxu0 %v2472
  %v2738 = vpop.f32.mrb[0].mxu0
  %v2739 = vadd.f32 0.0, %v2738
  %v2740 = vpop.f32.mrb[0].mxu0
  %v2741 = vadd.f32 0.0, %v2740
  %v2742 = vpop.f32.mrb[0].mxu0
  %v2743 = vpop.f32.mrb[0].mxu0
  %2744 = vdwg.mxu0
  %v2745 = vadd.f32 %v2659, %v2698
  %v2746 = vadd.f32 %v2660, %v2700
  %v2747 = vadd.f32 %v2661, %v2739
  %v2748 = vadd.f32 %v2662, %v2741
  %v2749 = vtanh.pop %v2745
  %v2750 = vtanh.pop %v2746
  %v2751 = vtanh.pop %v2747
  %v2752 = vmul.f32 %v2749, 0.5
  %v2753 = vmul.f32 %v2750, 0.5
  %v2754 = vmul.f32 %v2751, 0.5
  %v2755 = vadd.f32 %v2752, 0.5
  %v2756 = vadd.f32 %v2753, 0.5
  %v2757 = vadd.f32 %v2754, 0.5
  %v2758 = vtanh.pop %v2748
  %v2759 = vmul.f32 %v2756, %v2468
  %v2760 = vmul.f32 %v2755, %v2758
  %v2761 = vadd.f32 %v2759, %v2760
  %v2762 = vtanh.pop %v2761
  %v2763 = vmul.f32 %v2757, %v2762
  %v2764 = vpack.c.bf16 %v2655, %v2655
  %v2765 = vpack.c.bf16 %v2763, %v2763
  %2766 = vmatprep.subr.bf16.mxu0 %v785
  %2767 = vmatpush1.bf16.msra.mxu0 %v784
  %2768 = vmatprep.subr.bf16.mxu0 %v789
  %2769 = vmatpush1.bf16.msra.mxu0 %v788
  %2770 = vmatprep.subr.bf16.mxu0 %v793
  %2771 = vmatpush1.bf16.msra.mxu0 %v792
  %2772 = vmatprep.subr.bf16.mxu0 %v797
  %2773 = vmatpush1.bf16.msra.mxu0 %v796
  %2774 = vmatprep.subr.bf16.mxu0 %v801
  %2775 = vmatpush1.bf16.msra.mxu0 %v800
  %2776 = vmatprep.subr.bf16.mxu0 %v805
  %2777 = vmatpush1.bf16.msra.mxu0 %v804
  %2778 = vmatprep.subr.bf16.mxu0 %v809
  %2779 = vmatpush1.bf16.msra.mxu0 %v808
  %2780 = vmatprep.subr.bf16.mxu0 %v813
  %2781 = vmatpush1.bf16.msra.mxu0 %v812
  %2782 = vmatprep.subr.bf16.mxu0 0
  %2783 = vmatpush1.bf16.msra.mxu0 0
  %2784 = vmatprep.subr.bf16.mxu0 0
  %2785 = vmatpush1.bf16.msra.mxu0 0
  %2786 = vmatprep.subr.bf16.mxu0 0
  %2787 = vmatpush1.bf16.msra.mxu0 0
  %2788 = vmatprep.subr.bf16.mxu0 0
  %2789 = vmatpush1.bf16.msra.mxu0 0
  %2790 = vmatprep.subr.bf16.mxu0 0
  %2791 = vmatpush1.bf16.msra.mxu0 0
  %2792 = vmatprep.subr.bf16.mxu0 0
  %2793 = vmatpush1.bf16.msra.mxu0 0
  %2794 = vmatprep.subr.bf16.mxu0 0
  %2795 = vmatpush1.bf16.msra.mxu0 0
  %2796 = vmatprep.subr.bf16.mxu0 0
  %2797 = vmatpush1.bf16.msra.mxu0 0
  %2798 = vmatprep.mubr.bf16.mxu0 0
  %2799 = vmatmul.mubr.bf16.gmra.mrb[0].mxu0 %v2765
  %v2800 = vpop.f32.mrb[0].mxu0
  %v2801 = vadd.f32 0.0, %v2800
  %v2802 = vpop.f32.mrb[0].mxu0
  %v2803 = vadd.f32 0.0, %v2802
  %v2804 = vpop.f32.mrb[0].mxu0
  %v2805 = vpop.f32.mrb[0].mxu0
  %2806 = vdwg.mxu0
  %2807 = vmatprep.subr.bf16.mxu0 %v787
  %2808 = vmatpush1.bf16.msra.mxu0 %v786
  %2809 = vmatprep.subr.bf16.mxu0 %v791
  %2810 = vmatpush1.bf16.msra.mxu0 %v790
  %2811 = vmatprep.subr.bf16.mxu0 %v795
  %2812 = vmatpush1.bf16.msra.mxu0 %v794
  %2813 = vmatprep.subr.bf16.mxu0 %v799
  %2814 = vmatpush1.bf16.msra.mxu0 %v798
  %2815 = vmatprep.subr.bf16.mxu0 %v803
  %2816 = vmatpush1.bf16.msra.mxu0 %v802
  %2817 = vmatprep.subr.bf16.mxu0 %v807
  %2818 = vmatpush1.bf16.msra.mxu0 %v806
  %2819 = vmatprep.subr.bf16.mxu0 %v811
  %2820 = vmatpush1.bf16.msra.mxu0 %v810
  %2821 = vmatprep.subr.bf16.mxu0 %v815
  %2822 = vmatpush1.bf16.msra.mxu0 %v814
  %2823 = vmatprep.subr.bf16.mxu0 0
  %2824 = vmatpush1.bf16.msra.mxu0 0
  %2825 = vmatprep.subr.bf16.mxu0 0
  %2826 = vmatpush1.bf16.msra.mxu0 0
  %2827 = vmatprep.subr.bf16.mxu0 0
  %2828 = vmatpush1.bf16.msra.mxu0 0
  %2829 = vmatprep.subr.bf16.mxu0 0
  %2830 = vmatpush1.bf16.msra.mxu0 0
  %2831 = vmatprep.subr.bf16.mxu0 0
  %2832 = vmatpush1.bf16.msra.mxu0 0
  %2833 = vmatprep.subr.bf16.mxu0 0
  %2834 = vmatpush1.bf16.msra.mxu0 0
  %2835 = vmatprep.subr.bf16.mxu0 0
  %2836 = vmatpush1.bf16.msra.mxu0 0
  %2837 = vmatprep.subr.bf16.mxu0 0
  %2838 = vmatpush1.bf16.msra.mxu0 0
  %2839 = vmatprep.mubr.bf16.mxu0 0
  %2840 = vmatmul.mubr.bf16.gmra.mrb[0].mxu0 %v2765
  %v2841 = vpop.f32.mrb[0].mxu0
  %v2842 = vadd.f32 0.0, %v2841
  %v2843 = vpop.f32.mrb[0].mxu0
  %v2844 = vadd.f32 0.0, %v2843
  %v2845 = vpop.f32.mrb[0].mxu0
  %v2846 = vpop.f32.mrb[0].mxu0
  %2847 = vdwg.mxu0
  %2848 = vmatprep.subr.bf16.mxu0 %v1027
  %2849 = vmatpush1.bf16.msra.mxu0 %v1026
  %2850 = vmatprep.subr.bf16.mxu0 %v1031
  %2851 = vmatpush1.bf16.msra.mxu0 %v1030
  %2852 = vmatprep.subr.bf16.mxu0 %v1035
  %2853 = vmatpush1.bf16.msra.mxu0 %v1034
  %2854 = vmatprep.subr.bf16.mxu0 %v1039
  %2855 = vmatpush1.bf16.msra.mxu0 %v1038
  %2856 = vmatprep.subr.bf16.mxu0 %v1043
  %2857 = vmatpush1.bf16.msra.mxu0 %v1042
  %2858 = vmatprep.subr.bf16.mxu0 %v1047
  %2859 = vmatpush1.bf16.msra.mxu0 %v1046
  %2860 = vmatprep.subr.bf16.mxu0 %v1051
  %2861 = vmatpush1.bf16.msra.mxu0 %v1050
  %2862 = vmatprep.subr.bf16.mxu0 %v1055
  %2863 = vmatpush1.bf16.msra.mxu0 %v1054
  %2864 = vmatprep.subr.bf16.mxu0 0
  %2865 = vmatpush1.bf16.msra.mxu0 0
  %2866 = vmatprep.subr.bf16.mxu0 0
  %2867 = vmatpush1.bf16.msra.mxu0 0
  %2868 = vmatprep.subr.bf16.mxu0 0
  %2869 = vmatpush1.bf16.msra.mxu0 0
  %2870 = vmatprep.subr.bf16.mxu0 0
  %2871 = vmatpush1.bf16.msra.mxu0 0
  %2872 = vmatprep.subr.bf16.mxu0 0
  %2873 = vmatpush1.bf16.msra.mxu0 0
  %2874 = vmatprep.subr.bf16.mxu0 0
  %2875 = vmatpush1.bf16.msra.mxu0 0
  %2876 = vmatprep.subr.bf16.mxu0 0
  %2877 = vmatpush1.bf16.msra.mxu0 0
  %2878 = vmatprep.subr.bf16.mxu0 0
  %2879 = vmatpush1.bf16.msra.mxu0 0
  %2880 = vmatprep.mubr.bf16.mxu0 0
  %2881 = vmatmul.mubr.bf16.gmra.mrb[0].mxu0 %v2764
  %v2882 = vpop.f32.mrb[0].mxu0
  %v2883 = vadd.f32 %v2801, %v2882
  %v2884 = vpop.f32.mrb[0].mxu0
  %v2885 = vadd.f32 %v2803, %v2884
  %v2886 = vpop.f32.mrb[0].mxu0
  %v2887 = vpop.f32.mrb[0].mxu0
  %2888 = vdwg.mxu0
  %2889 = vmatprep.subr.bf16.mxu0 %v1029
  %2890 = vmatpush1.bf16.msra.mxu0 %v1028
  %2891 = vmatprep.subr.bf16.mxu0 %v1033
  %2892 = vmatpush1.bf16.msra.mxu0 %v1032
  %2893 = vmatprep.subr.bf16.mxu0 %v1037
  %2894 = vmatpush1.bf16.msra.mxu0 %v1036
  %2895 = vmatprep.subr.bf16.mxu0 %v1041
  %2896 = vmatpush1.bf16.msra.mxu0 %v1040
  %2897 = vmatprep.subr.bf16.mxu0 %v1045
  %2898 = vmatpush1.bf16.msra.mxu0 %v1044
  %2899 = vmatprep.subr.bf16.mxu0 %v1049
  %2900 = vmatpush1.bf16.msra.mxu0 %v1048
  %2901 = vmatprep.subr.bf16.mxu0 %v1053
  %2902 = vmatpush1.bf16.msra.mxu0 %v1052
  %2903 = vmatprep.subr.bf16.mxu0 %v1057
  %2904 = vmatpush1.bf16.msra.mxu0 %v1056
  %2905 = vmatprep.subr.bf16.mxu0 0
  %2906 = vmatpush1.bf16.msra.mxu0 0
  %2907 = vmatprep.subr.bf16.mxu0 0
  %2908 = vmatpush1.bf16.msra.mxu0 0
  %2909 = vmatprep.subr.bf16.mxu0 0
  %2910 = vmatpush1.bf16.msra.mxu0 0
  %2911 = vmatprep.subr.bf16.mxu0 0
  %2912 = vmatpush1.bf16.msra.mxu0 0
  %2913 = vmatprep.subr.bf16.mxu0 0
  %2914 = vmatpush1.bf16.msra.mxu0 0
  %2915 = vmatprep.subr.bf16.mxu0 0
  %2916 = vmatpush1.bf16.msra.mxu0 0
  %2917 = vmatprep.subr.bf16.mxu0 0
  %2918 = vmatpush1.bf16.msra.mxu0 0
  %2919 = vmatprep.subr.bf16.mxu0 0
  %2920 = vmatpush1.bf16.msra.mxu0 0
  %2921 = vmatprep.mubr.bf16.mxu0 0
  %2922 = vmatmul.mubr.bf16.gmra.mrb[0].mxu0 %v2764
  %v2923 = vpop.f32.mrb[0].mxu0
  %v2924 = vadd.f32 %v2842, %v2923
  %v2925 = vpop.f32.mrb[0].mxu0
  %v2926 = vadd.f32 %v2844, %v2925
  %v2927 = vpop.f32.mrb[0].mxu0
  %v2928 = vpop.f32.mrb[0].mxu0
  %2929 = vdwg.mxu0
  %v2930 = vadd.f32 %v2883, %v306
  %v2931 = vadd.f32 %v2885, %v310
  %v2932 = vadd.f32 %v2924, %v314
  %v2933 = vadd.f32 %v2926, %v318
  %v2934 = vtanh.pop %v2930
  %v2935 = vtanh.pop %v2931
  %v2936 = vtanh.pop %v2932
  %v2937 = vmul.f32 %v2934, 0.5
  %v2938 = vmul.f32 %v2935, 0.5
  %v2939 = vmul.f32 %v2936, 0.5
  %v2940 = vadd.f32 %v2937, 0.5
  %v2941 = vadd.f32 %v2938, 0.5
  %v2942 = vadd.f32 %v2939, 0.5
  %v2943 = vtanh.pop %v2933
  %v2944 = vmul.f32 %v2941, %v2653
  %v2945 = vmul.f32 %v2940, %v2943
  %v2946 = vadd.f32 %v2944, %v2945
  %v2947 = vtanh.pop %v2946
  %v2948 = vmul.f32 %v2942, %v2947
  %s2949 = smul.u32 7, 4
  %s2950 = smul.addr %s2949, 8
  %s2951 = scalar_lea.vmem [#allocation2], %s2950
  %v2952 = vld [vmem:[%s2951] sm:$0xff]
  %v2953 = vld [vmem:[%s2951 + $0x8] sm:$0xff]
  %v2954 = vld [vmem:[%s2951 + $0x10] sm:$0xff]
  %v2955 = vld [vmem:[%s2951 + $0x18] sm:$0xff]
  %2956 = vmatprep.subr.bf16.mxu0 %v459
  %2957 = vmatpush1.bf16.msra.mxu0 %v458
  %2958 = vmatprep.subr.bf16.mxu0 %v463
  %2959 = vmatpush1.bf16.msra.mxu0 %v462
  %2960 = vmatprep.subr.bf16.mxu0 %v467
  %2961 = vmatpush1.bf16.msra.mxu0 %v466
  %2962 = vmatprep.subr.bf16.mxu0 %v471
  %2963 = vmatpush1.bf16.msra.mxu0 %v470
  %2964 = vmatprep.subr.bf16.mxu0 %v475
  %2965 = vmatpush1.bf16.msra.mxu0 %v474
  %2966 = vmatprep.subr.bf16.mxu0 %v479
  %2967 = vmatpush1.bf16.msra.mxu0 %v478
  %2968 = vmatprep.subr.bf16.mxu0 %v483
  %2969 = vmatpush1.bf16.msra.mxu0 %v482
  %2970 = vmatprep.subr.bf16.mxu0 %v487
  %2971 = vmatpush1.bf16.msra.mxu0 %v486
  %2972 = vmatprep.subr.bf16.mxu0 0
  %2973 = vmatpush1.bf16.msra.mxu0 0
  %2974 = vmatprep.subr.bf16.mxu0 0
  %2975 = vmatpush1.bf16.msra.mxu0 0
  %2976 = vmatprep.subr.bf16.mxu0 0
  %2977 = vmatpush1.bf16.msra.mxu0 0
  %2978 = vmatprep.subr.bf16.mxu0 0
  %2979 = vmatpush1.bf16.msra.mxu0 0
  %2980 = vmatprep.subr.bf16.mxu0 0
  %2981 = vmatpush1.bf16.msra.mxu0 0
  %2982 = vmatprep.subr.bf16.mxu0 0
  %2983 = vmatpush1.bf16.msra.mxu0 0
  %2984 = vmatprep.subr.bf16.mxu0 0
  %2985 = vmatpush1.bf16.msra.mxu0 0
  %2986 = vmatprep.subr.bf16.mxu0 0
  %2987 = vmatpush1.bf16.msra.mxu0 0
  %2988 = vmatprep.mubr.bf16.mxu0 0
  %2989 = vmatmul.mubr.bf16.gmra.mrb[0].mxu0 %v2765
  %v2990 = vpop.f32.mrb[0].mxu0
  %v2991 = vadd.f32 0.0, %v2990
  %v2992 = vpop.f32.mrb[0].mxu0
  %v2993 = vadd.f32 0.0, %v2992
  %v2994 = vpop.f32.mrb[0].mxu0
  %v2995 = vpop.f32.mrb[0].mxu0
  %2996 = vdwg.mxu0
  %2997 = vmatprep.subr.bf16.mxu0 %v461
  %2998 = vmatpush1.bf16.msra.mxu0 %v460
  %2999 = vmatprep.subr.bf16.mxu0 %v465
  %3000 = vmatpush1.bf16.msra.mxu0 %v464
  %3001 = vmatprep.subr.bf16.mxu0 %v469
  %3002 = vmatpush1.bf16.msra.mxu0 %v468
  %3003 = vmatprep.subr.bf16.mxu0 %v473
  %3004 = vmatpush1.bf16.msra.mxu0 %v472
  %3005 = vmatprep.subr.bf16.mxu0 %v477
  %3006 = vmatpush1.bf16.msra.mxu0 %v476
  %3007 = vmatprep.subr.bf16.mxu0 %v481
  %3008 = vmatpush1.bf16.msra.mxu0 %v480
  %3009 = vmatprep.subr.bf16.mxu0 %v485
  %3010 = vmatpush1.bf16.msra.mxu0 %v484
  %3011 = vmatprep.subr.bf16.mxu0 %v489
  %3012 = vmatpush1.bf16.msra.mxu0 %v488
  %3013 = vmatprep.subr.bf16.mxu0 0
  %3014 = vmatpush1.bf16.msra.mxu0 0
  %3015 = vmatprep.subr.bf16.mxu0 0
  %3016 = vmatpush1.bf16.msra.mxu0 0
  %3017 = vmatprep.subr.bf16.mxu0 0
  %3018 = vmatpush1.bf16.msra.mxu0 0
  %3019 = vmatprep.subr.bf16.mxu0 0
  %3020 = vmatpush1.bf16.msra.mxu0 0
  %3021 = vmatprep.subr.bf16.mxu0 0
  %3022 = vmatpush1.bf16.msra.mxu0 0
  %3023 = vmatprep.subr.bf16.mxu0 0
  %3024 = vmatpush1.bf16.msra.mxu0 0
  %3025 = vmatprep.subr.bf16.mxu0 0
  %3026 = vmatpush1.bf16.msra.mxu0 0
  %3027 = vmatprep.subr.bf16.mxu0 0
  %3028 = vmatpush1.bf16.msra.mxu0 0
  %3029 = vmatprep.mubr.bf16.mxu0 0
  %3030 = vmatmul.mubr.bf16.gmra.mrb[0].mxu0 %v2765
  %v3031 = vpop.f32.mrb[0].mxu0
  %v3032 = vadd.f32 0.0, %v3031
  %v3033 = vpop.f32.mrb[0].mxu0
  %v3034 = vadd.f32 0.0, %v3033
  %v3035 = vpop.f32.mrb[0].mxu0
  %v3036 = vpop.f32.mrb[0].mxu0
  %3037 = vdwg.mxu0
  %v3038 = vadd.f32 %v2952, %v2991
  %v3039 = vadd.f32 %v2953, %v2993
  %v3040 = vadd.f32 %v2954, %v3032
  %v3041 = vadd.f32 %v2955, %v3034
  %v3042 = vtanh.pop %v3038
  %v3043 = vtanh.pop %v3039
  %v3044 = vtanh.pop %v3040
  %v3045 = vmul.f32 %v3042, 0.5
  %v3046 = vmul.f32 %v3043, 0.5
  %v3047 = vmul.f32 %v3044, 0.5
  %v3048 = vadd.f32 %v3045, 0.5
  %v3049 = vadd.f32 %v3046, 0.5
  %v3050 = vadd.f32 %v3047, 0.5
  %v3051 = vtanh.pop %v3041
  %v3052 = vmul.f32 %v3049, %v2761
  %v3053 = vmul.f32 %v3048, %v3051
  %v3054 = vadd.f32 %v3052, %v3053
  %v3055 = vtanh.pop %v3054
  %v3056 = vmul.f32 %v3050, %v3055
  %v3057 = vpack.c.bf16 %v2948, %v2948
  %v3058 = vpack.c.bf16 %v3056, %v3056
  %3059 = vmatprep.subr.bf16.mxu0 %v785
  %3060 = vmatpush1.bf16.msra.mxu0 %v784
  %3061 = vmatprep.subr.bf16.mxu0 %v789
  %3062 = vmatpush1.bf16.msra.mxu0 %v788
  %3063 = vmatprep.subr.bf16.mxu0 %v793
  %3064 = vmatpush1.bf16.msra.mxu0 %v792
  %3065 = vmatprep.subr.bf16.mxu0 %v797
  %3066 = vmatpush1.bf16.msra.mxu0 %v796
  %3067 = vmatprep.subr.bf16.mxu0 %v801
  %3068 = vmatpush1.bf16.msra.mxu0 %v800
  %3069 = vmatprep.subr.bf16.mxu0 %v805
  %3070 = vmatpush1.bf16.msra.mxu0 %v804
  %3071 = vmatprep.subr.bf16.mxu0 %v809
  %3072 = vmatpush1.bf16.msra.mxu0 %v808
  %3073 = vmatprep.subr.bf16.mxu0 %v813
  %3074 = vmatpush1.bf16.msra.mxu0 %v812
  %3075 = vmatprep.subr.bf16.mxu0 0
  %3076 = vmatpush1.bf16.msra.mxu0 0
  %3077 = vmatprep.subr.bf16.mxu0 0
  %3078 = vmatpush1.bf16.msra.mxu0 0
  %3079 = vmatprep.subr.bf16.mxu0 0
  %3080 = vmatpush1.bf16.msra.mxu0 0
  %3081 = vmatprep.subr.bf16.mxu0 0
  %3082 = vmatpush1.bf16.msra.mxu0 0
  %3083 = vmatprep.subr.bf16.mxu0 0
  %3084 = vmatpush1.bf16.msra.mxu0 0
  %3085 = vmatprep.subr.bf16.mxu0 0
  %3086 = vmatpush1.bf16.msra.mxu0 0
  %3087 = vmatprep.subr.bf16.mxu0 0
  %3088 = vmatpush1.bf16.msra.mxu0 0
  %3089 = vmatprep.subr.bf16.mxu0 0
  %3090 = vmatpush1.bf16.msra.mxu0 0
  %3091 = vmatprep.mubr.bf16.mxu0 0
  %3092 = vmatmul.mubr.bf16.gmra.mrb[0].mxu0 %v3058
  %v3093 = vpop.f32.mrb[0].mxu0
  %v3094 = vadd.f32 0.0, %v3093
  %v3095 = vpop.f32.mrb[0].mxu0
  %v3096 = vadd.f32 0.0, %v3095
  %v3097 = vpop.f32.mrb[0].mxu0
  %v3098 = vpop.f32.mrb[0].mxu0
  %3099 = vdwg.mxu0
  %3100 = vmatprep.subr.bf16.mxu0 %v787
  %3101 = vmatpush1.bf16.msra.mxu0 %v786
  %3102 = vmatprep.subr.bf16.mxu0 %v791
  %3103 = vmatpush1.bf16.msra.mxu0 %v790
  %3104 = vmatprep.subr.bf16.mxu0 %v795
  %3105 = vmatpush1.bf16.msra.mxu0 %v794
  %3106 = vmatprep.subr.bf16.mxu0 %v799
  %3107 = vmatpush1.bf16.msra.mxu0 %v798
  %3108 = vmatprep.subr.bf16.mxu0 %v803
  %3109 = vmatpush1.bf16.msra.mxu0 %v802
  %3110 = vmatprep.subr.bf16.mxu0 %v807
  %3111 = vmatpush1.bf16.msra.mxu0 %v806
  %3112 = vmatprep.subr.bf16.mxu0 %v811
  %3113 = vmatpush1.bf16.msra.mxu0 %v810
  %3114 = vmatprep.subr.bf16.mxu0 %v815
  %3115 = vmatpush1.bf16.msra.mxu0 %v814
  %3116 = vmatprep.subr.bf16.mxu0 0
  %3117 = vmatpush1.bf16.msra.mxu0 0
  %3118 = vmatprep.subr.bf16.mxu0 0
  %3119 = vmatpush1.bf16.msra.mxu0 0
  %3120 = vmatprep.subr.bf16.mxu0 0
  %3121 = vmatpush1.bf16.msra.mxu0 0
  %3122 = vmatprep.subr.bf16.mxu0 0
  %3123 = vmatpush1.bf16.msra.mxu0 0
  %3124 = vmatprep.subr.bf16.mxu0 0
  %3125 = vmatpush1.bf16.msra.mxu0 0
  %3126 = vmatprep.subr.bf16.mxu0 0
  %3127 = vmatpush1.bf16.msra.mxu0 0
  %3128 = vmatprep.subr.bf16.mxu0 0
  %3129 = vmatpush1.bf16.msra.mxu0 0
  %3130 = vmatprep.subr.bf16.mxu0 0
  %3131 = vmatpush1.bf16.msra.mxu0 0
  %3132 = vmatprep.mubr.bf16.mxu0 0
  %3133 = vmatmul.mubr.bf16.gmra.mrb[0].mxu0 %v3058
  %v3134 = vpop.f32.mrb[0].mxu0
  %v3135 = vadd.f32 0.0, %v3134
  %v3136 = vpop.f32.mrb[0].mxu0
  %v3137 = vadd.f32 0.0, %v3136
  %v3138 = vpop.f32.mrb[0].mxu0
  %v3139 = vpop.f32.mrb[0].mxu0
  %3140 = vdwg.mxu0
  %3141 = vmatprep.subr.bf16.mxu0 %v1027
  %3142 = vmatpush1.bf16.msra.mxu0 %v1026
  %3143 = vmatprep.subr.bf16.mxu0 %v1031
  %3144 = vmatpush1.bf16.msra.mxu0 %v1030
  %3145 = vmatprep.subr.bf16.mxu0 %v1035
  %3146 = vmatpush1.bf16.msra.mxu0 %v1034
  %3147 = vmatprep.subr.bf16.mxu0 %v1039
  %3148 = vmatpush1.bf16.msra.mxu0 %v1038
  %3149 = vmatprep.subr.bf16.mxu0 %v1043
  %3150 = vmatpush1.bf16.msra.mxu0 %v1042
  %3151 = vmatprep.subr.bf16.mxu0 %v1047
  %3152 = vmatpush1.bf16.msra.mxu0 %v1046
  %3153 = vmatprep.subr.bf16.mxu0 %v1051
  %3154 = vmatpush1.bf16.msra.mxu0 %v1050
  %3155 = vmatprep.subr.bf16.mxu0 %v1055
  %3156 = vmatpush1.bf16.msra.mxu0 %v1054
  %3157 = vmatprep.subr.bf16.mxu0 0
  %3158 = vmatpush1.bf16.msra.mxu0 0
  %3159 = vmatprep.subr.bf16.mxu0 0
  %3160 = vmatpush1.bf16.msra.mxu0 0
  %3161 = vmatprep.subr.bf16.mxu0 0
  %3162 = vmatpush1.bf16.msra.mxu0 0
  %3163 = vmatprep.subr.bf16.mxu0 0
  %3164 = vmatpush1.bf16.msra.mxu0 0
  %3165 = vmatprep.subr.bf16.mxu0 0
  %3166 = vmatpush1.bf16.msra.mxu0 0
  %3167 = vmatprep.subr.bf16.mxu0 0
  %3168 = vmatpush1.bf16.msra.mxu0 0
  %3169 = vmatprep.subr.bf16.mxu0 0
  %3170 = vmatpush1.bf16.msra.mxu0 0
  %3171 = vmatprep.subr.bf16.mxu0 0
  %3172 = vmatpush1.bf16.msra.mxu0 0
  %3173 = vmatprep.mubr.bf16.mxu0 0
  %3174 = vmatmul.mubr.bf16.gmra.mrb[0].mxu0 %v3057
  %v3175 = vpop.f32.mrb[0].mxu0
  %v3176 = vadd.f32 %v3094, %v3175
  %v3177 = vpop.f32.mrb[0].mxu0
  %v3178 = vadd.f32 %v3096, %v3177
  %v3179 = vpop.f32.mrb[0].mxu0
  %v3180 = vpop.f32.mrb[0].mxu0
  %3181 = vdwg.mxu0
  %3182 = vmatprep.subr.bf16.mxu0 %v1029
  %3183 = vmatpush1.bf16.msra.mxu0 %v1028
  %3184 = vmatprep.subr.bf16.mxu0 %v1033
  %3185 = vmatpush1.bf16.msra.mxu0 %v1032
  %3186 = vmatprep.subr.bf16.mxu0 %v1037
  %3187 = vmatpush1.bf16.msra.mxu0 %v1036
  %3188 = vmatprep.subr.bf16.mxu0 %v1041
  %3189 = vmatpush1.bf16.msra.mxu0 %v1040
  %3190 = vmatprep.subr.bf16.mxu0 %v1045
  %3191 = vmatpush1.bf16.msra.mxu0 %v1044
  %3192 = vmatprep.subr.bf16.mxu0 %v1049
  %3193 = vmatpush1.bf16.msra.mxu0 %v1048
  %3194 = vmatprep.subr.bf16.mxu0 %v1053
  %3195 = vmatpush1.bf16.msra.mxu0 %v1052
  %3196 = vmatprep.subr.bf16.mxu0 %v1057
  %3197 = vmatpush1.bf16.msra.mxu0 %v1056
  %3198 = vmatprep.subr.bf16.mxu0 0
  %3199 = vmatpush1.bf16.msra.mxu0 0
  %3200 = vmatprep.subr.bf16.mxu0 0
  %3201 = vmatpush1.bf16.msra.mxu0 0
  %3202 = vmatprep.subr.bf16.mxu0 0
  %3203 = vmatpush1.bf16.msra.mxu0 0
  %3204 = vmatprep.subr.bf16.mxu0 0
  %3205 = vmatpush1.bf16.msra.mxu0 0
  %3206 = vmatprep.subr.bf16.mxu0 0
  %3207 = vmatpush1.bf16.msra.mxu0 0
  %3208 = vmatprep.subr.bf16.mxu0 0
  %3209 = vmatpush1.bf16.msra.mxu0 0
  %3210 = vmatprep.subr.bf16.mxu0 0
  %3211 = vmatpush1.bf16.msra.mxu0 0
  %3212 = vmatprep.subr.bf16.mxu0 0
  %3213 = vmatpush1.bf16.msra.mxu0 0
  %3214 = vmatprep.mubr.bf16.mxu0 0
  %3215 = vmatmul.mubr.bf16.gmra.mrb[0].mxu0 %v3057
  %v3216 = vpop.f32.mrb[0].mxu0
  %v3217 = vadd.f32 %v3135, %v3216
  %v3218 = vpop.f32.mrb[0].mxu0
  %v3219 = vadd.f32 %v3137, %v3218
  %v3220 = vpop.f32.mrb[0].mxu0
  %v3221 = vpop.f32.mrb[0].mxu0
  %3222 = vdwg.mxu0
  %v3223 = vadd.f32 %v3176, %v306
  %v3224 = vadd.f32 %v3178, %v310
  %v3225 = vadd.f32 %v3217, %v314
  %v3226 = vadd.f32 %v3219, %v318
  %v3227 = vtanh.pop %v3223
  %v3228 = vtanh.pop %v3224
  %v3229 = vtanh.pop %v3225
  %v3230 = vmul.f32 %v3227, 0.5
  %v3231 = vmul.f32 %v3228, 0.5
  %v3232 = vmul.f32 %v3229, 0.5
  %v3233 = vadd.f32 %v3230, 0.5
  %v3234 = vadd.f32 %v3231, 0.5
  %v3235 = vadd.f32 %v3232, 0.5
  %v3236 = vtanh.pop %v3226
  %v3237 = vmul.f32 %v3234, %v2946
  %v3238 = vmul.f32 %v3233, %v3236
  %v3239 = vadd.f32 %v3237, %v3238
  %v3240 = vtanh.pop %v3239
  %v3241 = vmul.f32 %v3235, %v3240
  %v3242 = vld [vmem:[%s7] sm:$0xff]
  %v3243 = vld [vmem:[%s7 + $0x8] sm:$0xff]
  %v3244 = vld [vmem:[%s7 + $0x10] sm:$0xff]
  %v3245 = vld [vmem:[%s7 + $0x18] sm:$0xff]
  %v3246 = vld [vmem:[%s7 + $0x20] sm:$0xff]
  %v3247 = vld [vmem:[%s7 + $0x28] sm:$0xff]
  %v3248 = vld [vmem:[%s7 + $0x30] sm:$0xff]
  %v3249 = vld [vmem:[%s7 + $0x38] sm:$0xff]
  %v3250 = vld [vmem:[%s7 + $0x40] sm:$0xff]
  %v3251 = vld [vmem:[%s7 + $0x48] sm:$0xff]
  %v3252 = vld [vmem:[%s7 + $0x50] sm:$0xff]
  %v3253 = vld [vmem:[%s7 + $0x58] sm:$0xff]
  %v3254 = vld [vmem:[%s7 + $0x60] sm:$0xff]
  %v3255 = vld [vmem:[%s7 + $0x68] sm:$0xff]
  %v3256 = vld [vmem:[%s7 + $0x70] sm:$0xff]
  %v3257 = vld [vmem:[%s7 + $0x78] sm:$0xff]
  %v3258 = vld [vmem:[#allocation3] sm:$0x1]
  %v3260 = vlaneseq
  %v3261 = vshrl.u32 %v3260, 7
  %v3262 = vsub.s32 0, %v3261
  %v3263 = vrot.slane %v3258, %v3262
  %3265 = vmatprep.subr.mxu0 0.0
  %3266 = vmatpush1.msra.mxu0 %v3242
  %3267 = vmatprep.subr.mxu0 0.0
  %3268 = vmatpush1.msra.mxu0 %v3243
  %3269 = vmatprep.subr.mxu0 0.0
  %3270 = vmatpush1.msra.mxu0 %v3244
  %3271 = vmatprep.subr.mxu0 0.0
  %3272 = vmatpush1.msra.mxu0 %v3245
  %3273 = vmatprep.subr.mxu0 0.0
  %3274 = vmatpush1.msra.mxu0 %v3246
  %3275 = vmatprep.subr.mxu0 0.0
  %3276 = vmatpush1.msra.mxu0 %v3247
  %3277 = vmatprep.subr.mxu0 0.0
  %3278 = vmatpush1.msra.mxu0 %v3248
  %3279 = vmatprep.subr.mxu0 0.0
  %3280 = vmatpush1.msra.mxu0 %v3249
  %3281 = vmatprep.subr.mxu0 0.0
  %3282 = vmatpush1.msra.mxu0 %v3250
  %3283 = vmatprep.subr.mxu0 0.0
  %3284 = vmatpush1.msra.mxu0 %v3251
  %3285 = vmatprep.subr.mxu0 0.0
  %3286 = vmatpush1.msra.mxu0 %v3252
  %3287 = vmatprep.subr.mxu0 0.0
  %3288 = vmatpush1.msra.mxu0 %v3253
  %3289 = vmatprep.subr.mxu0 0.0
  %3290 = vmatpush1.msra.mxu0 %v3254
  %3291 = vmatprep.subr.mxu0 0.0
  %3292 = vmatpush1.msra.mxu0 %v3255
  %3293 = vmatprep.subr.mxu0 0.0
  %3294 = vmatpush1.msra.mxu0 %v3256
  %3295 = vmatprep.subr.mxu0 0.0
  %3296 = vmatpush1.msra.mxu0 %v3257
  %3297 = vmatprep.subr.mxu0 0.0
  %3298 = vmatpush1.msra.mxu0 0.0
  %3299 = vmatprep.subr.mxu0 0.0
  %3300 = vmatpush1.msra.mxu0 0.0
  %3301 = vmatprep.subr.mxu0 0.0
  %3302 = vmatpush1.msra.mxu0 0.0
  %3303 = vmatprep.subr.mxu0 0.0
  %3304 = vmatpush1.msra.mxu0 0.0
  %3305 = vmatprep.subr.mxu0 0.0
  %3306 = vmatpush1.msra.mxu0 0.0
  %3307 = vmatprep.subr.mxu0 0.0
  %3308 = vmatpush1.msra.mxu0 0.0
  %3309 = vmatprep.subr.mxu0 0.0
  %3310 = vmatpush1.msra.mxu0 0.0
  %3311 = vmatprep.subr.mxu0 0.0
  %3312 = vmatpush1.msra.mxu0 0.0
  %3313 = vmatprep.subr.mxu0 0.0
  %3314 = vmatpush1.msra.mxu0 0.0
  %3315 = vmatprep.subr.mxu0 0.0
  %3316 = vmatpush1.msra.mxu0 0.0
  %3317 = vmatprep.subr.mxu0 0.0
  %3318 = vmatpush1.msra.mxu0 0.0
  %3319 = vmatprep.subr.mxu0 0.0
  %3320 = vmatpush1.msra.mxu0 0.0
  %3321 = vmatprep.subr.mxu0 0.0
  %3322 = vmatpush1.msra.mxu0 0.0
  %3323 = vmatprep.subr.mxu0 0.0
  %3324 = vmatpush1.msra.mxu0 0.0
  %3325 = vmatprep.subr.mxu0 0.0
  %3326 = vmatpush1.msra.mxu0 0.0
  %3327 = vmatprep.subr.mxu0 0.0
  %3328 = vmatpush1.msra.mxu0 0.0
  %3329 = vmatprep.mubr.f32.mxu0 0.0
  %3330 = vmatmul.mubr.f32.gmra.mrb[0].mxu0 %v3241
  %v3331 = vpop.f32.mrb[0].mxu0
  %v3332 = vadd.f32 %v3263, %v3331
  %v3333 = vpop.f32.mrb[0].mxu0
  %3334 = vdwg.mxu0
  %vm3335 = vcmask 7168
  %3336 = vst.msk [vmem:[%s9] sm:$0xff] %vm3335, %v3332
  // Predicated region
  $region38: #{multivariable_lstm_forward.1} parent=0 // pred_check
    _
  $region39: #{multivariable_lstm_forward.1} parent=0 // pred_check_branch
    %3338 = sbr.rel (0) target = $region41
  $region40: #{multivariable_lstm_forward.1} parent=0 // pred_region
    _
  $region41: #{multivariable_lstm_forward.1} parent=0 // pred_fallthru
    _
  // Predicated region
  $region42: #{multivariable_lstm_forward.1} parent=0 // pred_check
    _
  $region43: #{multivariable_lstm_forward.1} parent=0 // pred_check_branch
    %3340 = sbr.rel (0) target = $region45
  $region44: #{multivariable_lstm_forward.1} parent=0 // pred_region
    _
  $region45: #{multivariable_lstm_forward.1} parent=0 // pred_fallthru
    _

</llo_original>
